<compile_context>
chip_gen: v7x
topology: tpu7x:2x2x1
jax: 0.10.0
libtpu: 0.0.40
codegen_flags: <defaults>
</compile_context>

<pallas_src>
import functools

import jax
import jax.numpy as jnp
from jax import lax
from jax.experimental import pallas as pl
from jax.experimental.pallas import tpu as pltpu


_FULL_UNROLL_T = 16            # fully unroll the time loop at trace time up to this length
_LOOP_UNROLL = 8               # fori_loop unroll factor for longer sequences
_WHH_HOIST_BYTES = 64 * 1024   # hoist recurrent weights into values if they fit in ~16 vregs


def _round_up(x, m):
    return ((x + m - 1) // m) * m


_VMEM_LIMIT_CACHE = []


def _vmem_limit_bytes():
    """Generation-aware scoped-VMEM limit (leave headroom: v7x only has 64 MiB/TC)."""
    if not _VMEM_LIMIT_CACHE:
        cap = 128 * 1024 * 1024
        try:
            info = pltpu.get_tpu_info()
            cap = int(getattr(info, "vmem_capacity_bytes", cap)) or cap
        except Exception:
            pass
        _VMEM_LIMIT_CACHE.append(min(96 * 1024 * 1024, (cap * 3) // 4))
    return _VMEM_LIMIT_CACHE[0]


# ----------------------------------------------------------------------------
# Pallas kernels
# ----------------------------------------------------------------------------
def _lstm_cell(gx_t, h, c, whh, width, gate_w):
    """One (possibly direction-fused) LSTM cell step.

    Gate blocks along the last axis are ordered [i, f, o, g]; each block is `gate_w`
    lanes wide (128-aligned) with live values in lanes [0:width].  bf16 operands feed
    the MXU; everything after the matmul stays f32.
    """
    rec = jnp.dot(h.astype(whh.dtype), whh, preferred_element_type=jnp.float32)
    gates = gx_t.astype(jnp.float32) + rec
    i = jax.nn.sigmoid(gates[:, 0 * gate_w:0 * gate_w + width])
    f = jax.nn.sigmoid(gates[:, 1 * gate_w:1 * gate_w + width])
    o = jax.nn.sigmoid(gates[:, 2 * gate_w:2 * gate_w + width])
    g = jnp.tanh(gates[:, 3 * gate_w:3 * gate_w + width])
    c_new = f * c + i * g
    h_new = o * jnp.tanh(c_new)
    return h_new, c_new


def _bilstm_seq_kernel(*refs, hidden, n_seg, gate_w):
    """One bidirectional LSTM layer producing the full (fwd, bwd) hidden sequences.

    refs = [seg_0..seg_{n-1},        # (T, B, F_k) bf16 input segments
            wih_f_0..wih_f_{n-1},    # (F_k, 4*GW) bf16, fwd gate cols at lane offset 0
            wih_b_0..wih_b_{n-1},    # (F_k, 4*GW) bf16, bwd gate cols at lane offset H
            whh,                     # (2H, 4*GW) bf16 block-diagonal fwd/bwd recurrent
            b_f, b_b,                # (1, 4*GW) f32 biases (fwd / bwd lane slots)
            o_f, o_b,                # (T, B, H) bf16 outputs (lane-dense, offset 0)
            gxf_scr, gxb_scr]        # (T, B, 4*GW) bf16 scratch (per-direction projection)
    """
    H, GW = hidden, gate_w
    segs = refs[:n_seg]
    wih_f = refs[n_seg:2 * n_seg]
    wih_b = refs[2 * n_seg:3 * n_seg]
    whh_ref = refs[3 * n_seg]
    b_f_ref, b_b_ref = refs[3 * n_seg + 1], refs[3 * n_seg + 2]
    o_f_ref, o_b_ref = refs[3 * n_seg + 3], refs[3 * n_seg + 4]
    gxf_scr, gxb_scr = refs[3 * n_seg + 5], refs[3 * n_seg + 6]

    T, B = segs[0].shape[0], segs[0].shape[1]

    # Hoisted input projection for all timesteps, both directions: big bf16 MXU matmuls.
    gxf = b_f_ref[...]
    gxb = b_b_ref[...]
    for s_ref, wf_ref, wb_ref in zip(segs, wih_f, wih_b):
        x2d = s_ref[...].reshape(T * B, s_ref.shape[2])
        gxf = gxf + jnp.dot(x2d, wf_ref[...], preferred_element_type=jnp.float32)
        gxb = gxb + jnp.dot(x2d, wb_ref[...], preferred_element_type=jnp.float32)
    gxf_scr[...] = gxf.reshape(T, B, 4 * GW).astype(gxf_scr.dtype)
    gxb_scr[...] = gxb.reshape(T, B, 4 * GW).astype(gxb_scr.dtype)

    # Recurrent weights: load once (small H) so the loop doesn't re-read VMEM every step.
    hoist = whh_ref.shape[0] * whh_ref.shape[1] * 2 <= _WHH_HOIST_BYTES
    whh_val = whh_ref[...] if hoist else None

    zeros = jnp.zeros((B, 2 * H), jnp.float32)

    def step(i, h, c):
        tb = T - 1 - i
        whh = whh_val if hoist else whh_ref[...]
        # fwd consumes gx at t=i, bwd at t=T-1-i; their lane supports are disjoint so a
        # single add composes the fused gate input for the block-diagonal recurrence.
        gx_t = gxf_scr[i].astype(jnp.float32) + gxb_scr[tb].astype(jnp.float32)
        h, c = _lstm_cell(gx_t, h, c, whh, 2 * H, GW)
        o_f_ref[i] = h[:, 0:H].astype(o_f_ref.dtype)
        o_b_ref[tb] = h[:, H:2 * H].astype(o_b_ref.dtype)
        return h, c

    if T <= _FULL_UNROLL_T:
        h, c = zeros, zeros
        for i in range(T):
            h, c = step(i, h, c)
    else:
        lax.fori_loop(0, T, lambda i, hc: step(i, *hc), (zeros, zeros),
                      unroll=_LOOP_UNROLL)


def _bilstm_last_fc_kernel(*refs, hidden, n_seg, gate_w):
    """Last bidirectional layer fused with the Linear head (only output[:, -1, :] is needed).

    h_bwd(T-1) is one backward step from the zero state, so the (T, B, 2H) sequence is never
    materialized; the fc head runs in the epilogue with a 128-lane-padded (unmasked) store.

    refs = [seg_0..seg_{n-1},            # (T, B, F_k) bf16
            wih_f_0.., wih_b_0..,        # (F_k, 4*GW) bf16 per direction
            whh_f, whh_b,                # (H, 4*GW) bf16
            b_f, b_b,                    # (1, 4*GW) f32
            wfc_f, wfc_b, bfc,           # (H, Opad) f32, (H, Opad) f32, (1, Opad) f32
            o,                           # (B, Opad) f32 output
            gx_scr]                      # (T, B, 4*GW) bf16 scratch (fwd projection)
    """
    H, GW = hidden, gate_w
    segs = refs[:n_seg]
    wih_f = refs[n_seg:2 * n_seg]
    wih_b = refs[2 * n_seg:3 * n_seg]
    base = 3 * n_seg
    whh_f_ref, whh_b_ref = refs[base], refs[base + 1]
    b_f_ref, b_b_ref = refs[base + 2], refs[base + 3]
    wfc_f_ref, wfc_b_ref, bfc_ref = refs[base + 4], refs[base + 5], refs[base + 6]
    o_ref = refs[base + 7]
    gx_scr = refs[base + 8]

    T, B = segs[0].shape[0], segs[0].shape[1]

    # Forward-direction input projection for all timesteps (bf16 MXU, f32 accumulation).
    gxf = b_f_ref[...]
    for s_ref, wf_ref in zip(segs, wih_f):
        x2d = s_ref[...].reshape(T * B, s_ref.shape[2])
        gxf = gxf + jnp.dot(x2d, wf_ref[...], preferred_element_type=jnp.float32)
    gx_scr[...] = gxf.reshape(T, B, 4 * GW).astype(gx_scr.dtype)

    hoist = whh_f_ref.shape[0] * whh_f_ref.shape[1] * 2 <= _WHH_HOIST_BYTES
    whh_f_val = whh_f_ref[...] if hoist else None

    zeros = jnp.zeros((B, H), jnp.float32)

    def step(i, h, c):
        whh = whh_f_val if hoist else whh_f_ref[...]
        return _lstm_cell(gx_scr[i], h, c, whh, H, GW)

    if T <= _FULL_UNROLL_T:
        h_f, c_f = zeros, zeros
        for i in range(T):
            h_f, c_f = step(i, h_f, c_f)
    else:
        h_f, c_f = lax.fori_loop(0, T, lambda i, hc: step(i, *hc), (zeros, zeros),
                                 unroll=_LOOP_UNROLL)

    # Backward direction at the last timestep: one step from the zero state.
    gxb = b_b_ref[...]
    for s_ref, wb_ref in zip(segs, wih_b):
        gxb = gxb + jnp.dot(s_ref[T - 1], wb_ref[...],
                            preferred_element_type=jnp.float32)
    h_b, _ = _lstm_cell(gxb, zeros, zeros, whh_b_ref[...], H, GW)

    # dropout before fc: identity in eval mode.  fc stays f32 (tiny) for accuracy.
    out = (jnp.dot(h_f, wfc_f_ref[...], preferred_element_type=jnp.float32)
           + jnp.dot(h_b, wfc_b_ref[...], preferred_element_type=jnp.float32)
           + bfc_ref[...])
    o_ref[...] = out.astype(o_ref.dtype)


# ----------------------------------------------------------------------------
# pallas_call wrappers
# ----------------------------------------------------------------------------
def _vmem_spec():
    return pl.BlockSpec(memory_space=pltpu.MemorySpace.VMEM)


def _bilstm_layer_seq(segs, lp, hidden):
    """Middle layer: one pallas_call, both directions, lane-dense (T,B,H) fwd/bwd outputs."""
    T, B = segs[0].shape[0], segs[0].shape[1]
    H = hidden
    GW = _round_up(2 * H, 128)
    n_seg = len(segs)
    F_tot = sum(int(s.shape[2]) for s in segs)

    cost = pl.CostEstimate(
        flops=int(4 * T * B * F_tot * 4 * GW + 2 * T * B * 2 * H * 4 * GW
                  + 12 * T * B * 2 * H),
        transcendentals=int(5 * T * B * 2 * H),
        bytes_accessed=int(2 * (T * B * F_tot + 2 * F_tot * 4 * GW
                                + 2 * H * 4 * GW + 2 * T * B * H) + 8 * 4 * GW),
    )
    n_in = 3 * n_seg + 3
    out_f, out_b = pl.pallas_call(
        functools.partial(_bilstm_seq_kernel, hidden=H, n_seg=n_seg, gate_w=GW),
        out_shape=(jax.ShapeDtypeStruct((T, B, H), jnp.bfloat16),
                   jax.ShapeDtypeStruct((T, B, H), jnp.bfloat16)),
        in_specs=[_vmem_spec()] * n_in,
        out_specs=(_vmem_spec(), _vmem_spec()),
        scratch_shapes=[pltpu.VMEM((T, B, 4 * GW), jnp.bfloat16)] * 2,
        compiler_params=pltpu.CompilerParams(vmem_limit_bytes=_vmem_limit_bytes()),
        cost_estimate=cost,
    )(*segs, *lp["wih_f"], *lp["wih_b"], lp["whh"], lp["b_f"], lp["b_b"])
    return out_f, out_b


def _bilstm_layer_last_fc(segs, lp, fc_p, hidden):
    """Last layer + fc head fused: returns (B, Opad) directly (slice O in the caller)."""
    T, B = segs[0].shape[0], segs[0].shape[1]
    H = hidden
    GW = _round_up(H, 128)
    n_seg = len(segs)
    F_tot = sum(int(s.shape[2]) for s in segs)
    wfc_f, wfc_b, bfc = fc_p
    Opad = int(wfc_f.shape[1])

    cost = pl.CostEstimate(
        flops=int(2 * T * B * F_tot * 4 * GW + 2 * B * F_tot * 4 * GW
                  + 2 * (T + 1) * B * H * 4 * GW + 4 * B * H * Opad
                  + 12 * (T + 1) * B * H),
        transcendentals=int(5 * (T + 1) * B * H),
        bytes_accessed=int(2 * (T * B * F_tot + 2 * F_tot * 4 * GW + 2 * H * 4 * GW)
                           + 4 * (2 * H * Opad + Opad + B * Opad)),
    )
    n_in = 3 * n_seg + 7
    out = pl.pallas_call(
        functools.partial(_bilstm_last_fc_kernel, hidden=H, n_seg=n_seg, gate_w=GW),
        out_shape=jax.ShapeDtypeStruct((B, Opad), jnp.float32),
        in_specs=[_vmem_spec()] * n_in,
        out_specs=_vmem_spec(),
        scratch_shapes=[pltpu.VMEM((T, B, 4 * GW), jnp.bfloat16)],
        compiler_params=pltpu.CompilerParams(vmem_limit_bytes=_vmem_limit_bytes()),
        cost_estimate=cost,
    )(*segs, *lp["wih_f"], *lp["wih_b"], lp["whh_f"], lp["whh_b"],
      lp["b_f"], lp["b_b"], wfc_f, wfc_b, bfc)
    return out


# ----------------------------------------------------------------------------
# One-time weight packing (outside the per-call path)
# ----------------------------------------------------------------------------
def _gate_blocks_t(w):
    """PyTorch (4H, in) gate rows [i, f, g, o] -> list [i, f, o, g] of (in, H) blocks."""
    i, f, g, o = jnp.split(w, 4, axis=0)
    return [i.T, f.T, o.T, g.T]


def _pack_cols(blocks, gate_w, offset, dtype):
    """Place 4 (rows, H) gate blocks at lane offset `offset` of 128-aligned gate slots."""
    rows, H = blocks[0].shape
    out = jnp.zeros((rows, 4 * gate_w), jnp.float32)
    for k, blk in enumerate(blocks):
        out = out.at[:, k * gate_w + offset:k * gate_w + offset + H].set(
            blk.astype(jnp.float32))
    return out.astype(dtype)


def _pack_bias(b, gate_w, offset):
    i, f, g, o = jnp.split(b, 4)
    H = i.shape[0]
    out = jnp.zeros((1, 4 * gate_w), jnp.float32)
    for k, blk in enumerate([i, f, o, g]):
        out = out.at[0, k * gate_w + offset:k * gate_w + offset + H].set(
            blk.astype(jnp.float32))
    return out


def _split_rows(w, seg_sizes):
    out, r = [], 0
    for s in seg_sizes:
        out.append(w[r:r + s])
        r += s
    return out


def prepare_params(params, input_size, hidden, num_layers):
    """Gate reorder, transpose, 128-lane gate padding and bf16 cast — done once."""
    H = hidden
    layers = []
    for layer in range(num_layers):
        w_ih_f, w_hh_f, b_ih_f, b_hh_f = params[f"l{layer}_d0"]
        w_ih_b, w_hh_b, b_ih_b, b_hh_b = params[f"l{layer}_d1"]
        seg_sizes = [input_size] if layer == 0 else [H, H]
        last = layer == num_layers - 1
        if not last:
            GW = _round_up(2 * H, 128)
            wih_f_full = _pack_cols(_gate_blocks_t(w_ih_f), GW, 0, jnp.bfloat16)
            wih_b_full = _pack_cols(_gate_blocks_t(w_ih_b), GW, H, jnp.bfloat16)
            whh = jnp.zeros((2 * H, 4 * GW), jnp.float32)
            fb = _gate_blocks_t(w_hh_f)
            bb = _gate_blocks_t(w_hh_b)
            for k in range(4):
                whh = whh.at[0:H, k * GW:k * GW + H].set(fb[k])
                whh = whh.at[H:2 * H, k * GW + H:k * GW + 2 * H].set(bb[k])
            layers.append(dict(
                wih_f=_split_rows(wih_f_full, seg_sizes),
                wih_b=_split_rows(wih_b_full, seg_sizes),
                whh=whh.astype(jnp.bfloat16),
                b_f=_pack_bias(b_ih_f + b_hh_f, GW, 0),
                b_b=_pack_bias(b_ih_b + b_hh_b, GW, H),
            ))
        else:
            GW = _round_up(H, 128)
            wih_f_full = _pack_cols(_gate_blocks_t(w_ih_f), GW, 0, jnp.bfloat16)
            wih_b_full = _pack_cols(_gate_blocks_t(w_ih_b), GW, 0, jnp.bfloat16)
            layers.append(dict(
                wih_f=_split_rows(wih_f_full, seg_sizes),
                wih_b=_split_rows(wih_b_full, seg_sizes),
                whh_f=_pack_cols(_gate_blocks_t(w_hh_f), GW, 0, jnp.bfloat16),
                whh_b=_pack_cols(_gate_blocks_t(w_hh_b), GW, 0, jnp.bfloat16),
                b_f=_pack_bias(b_ih_f + b_hh_f, GW, 0),
                b_b=_pack_bias(b_ih_b + b_hh_b, GW, 0),
            ))
    w_fc, b_fc = params["fc"]
    O = w_fc.shape[0]
    Opad = _round_up(O, 128)
    wfc_t = w_fc.T.astype(jnp.float32)                         # (2H, O)
    wfc_f = jnp.zeros((H, Opad), jnp.float32).at[:, :O].set(wfc_t[0:H])
    wfc_b = jnp.zeros((H, Opad), jnp.float32).at[:, :O].set(wfc_t[H:2 * H])
    bfc = jnp.zeros((1, Opad), jnp.float32).at[0, :O].set(b_fc.astype(jnp.float32))
    return dict(layers=layers, fc=(wfc_f, wfc_b, bfc))


# ----------------------------------------------------------------------------
# Forward pass (eval-mode BiLSTMModel)
# ----------------------------------------------------------------------------
def bilstm_forward(x, prepped, *, hidden, num_layers, output_size):
    """x: (batch, seq, input_size) — PyTorch batch_first layout."""
    B, T, _ = x.shape
    B_pad = _round_up(B, 8)                                   # full f32 sublanes
    x_tm = jnp.transpose(x, (1, 0, 2)).astype(jnp.bfloat16)   # (T, B, F) time-major, bf16
    if B_pad != B:
        x_tm = jnp.pad(x_tm, ((0, 0), (0, B_pad - B), (0, 0)))

    # TODO(synk): for long sequences, chunk the time axis (grid with h/c carried in scratch)
    # so the resident (T, B, 4*GW) slabs stay within v7x's 64 MiB VMEM.
    # TODO(synk): on v7x (2 TensorCores) the fwd/bwd directions could be split across cores
    # via a size-2 "parallel" grid axis; single-core chips gain nothing, so it is omitted.
    segs = [x_tm]
    for layer in range(num_layers - 1):
        out_f, out_b = _bilstm_layer_seq(segs, prepped["layers"][layer], hidden)
        segs = [out_f, out_b]
        # inter-layer dropout: identity in eval mode

    out = _bilstm_layer_last_fc(segs, prepped["layers"][num_layers - 1],
                                prepped["fc"], hidden)
    return out[:B, :output_size]


# ----------------------------------------------------------------------------
# Deterministic parameter init (PyTorch-style U(-1/sqrt(H), 1/sqrt(H)) shapes)
# ----------------------------------------------------------------------------
def init_params(key, input_size, hidden, num_layers, output_size):
    params = {}
    k = 1.0 / float(hidden) ** 0.5
    keys = iter(jax.random.split(key, num_layers * 2 * 4 + 2))
    for layer in range(num_layers):
        in_feat = input_size if layer == 0 else 2 * hidden
        for d in range(2):
            w_ih = jax.random.uniform(next(keys), (4 * hidden, in_feat),
                                      minval=-k, maxval=k, dtype=jnp.float32)
            w_hh = jax.random.uniform(next(keys), (4 * hidden, hidden),
                                      minval=-k, maxval=k, dtype=jnp.float32)
            b_ih = jax.random.uniform(next(keys), (4 * hidden,),
                                      minval=-k, maxval=k, dtype=jnp.float32)
            b_hh = jax.random.uniform(next(keys), (4 * hidden,),
                                      minval=-k, maxval=k, dtype=jnp.float32)
            params[f"l{layer}_d{d}"] = (w_ih, w_hh, b_ih, b_hh)
    kf = 1.0 / float(2 * hidden) ** 0.5
    w_fc = jax.random.uniform(next(keys), (output_size, 2 * hidden),
                              minval=-kf, maxval=kf, dtype=jnp.float32)
    b_fc = jax.random.uniform(next(keys), (output_size,),
                              minval=-kf, maxval=kf, dtype=jnp.float32)
    params["fc"] = (w_fc, b_fc)
    return params


# ----------------------------------------------------------------------------
# Pure-JAX f32 reference (same math, lax.scan) for a correctness check
# ----------------------------------------------------------------------------
def _ref_direction(x_tm, w_ih, w_hh, bias, hidden):
    B = x_tm.shape[1]

    def step(carry, x_t):
        h, c = carry
        gates = x_t @ w_ih.T + h @ w_hh.T + bias
        i, f, g, o = jnp.split(gates, 4, axis=-1)
        i, f, o = jax.nn.sigmoid(i), jax.nn.sigmoid(f), jax.nn.sigmoid(o)
        g = jnp.tanh(g)
        c = f * c + i * g
        h = o * jnp.tanh(c)
        return (h, c), h

    init = (jnp.zeros((B, hidden), jnp.float32), jnp.zeros((B, hidden), jnp.float32))
    _, hs = lax.scan(step, init, x_tm)
    return hs


def ref_forward(x, params, num_layers, hidden):
    h = jnp.transpose(x, (1, 0, 2)).astype(jnp.float32)
    for layer in range(num_layers):
        outs = []
        for d in range(2):
            w_ih, w_hh, b_ih, b_hh = params[f"l{layer}_d{d}"]
            inp = h if d == 0 else h[::-1]
            out = _ref_direction(inp, w_ih, w_hh, b_ih + b_hh, hidden)
            if d == 1:
                out = out[::-1]
            outs.append(out)
        h = jnp.concatenate(outs, axis=-1)
    w_fc, b_fc = params["fc"]
    return h[-1] @ w_fc.T + b_fc


# ----------------------------------------------------------------------------
if __name__ == "__main__":
    batch, seq, input_size = 2, 8, 16
    hidden, num_layers, output_size = 32, 2, 5

    key = jax.random.PRNGKey(0)
    kx, kp = jax.random.split(key)
    x = jax.random.normal(kx, (batch, seq, input_size), dtype=jnp.float32)
    params = init_params(kp, input_size, hidden, num_layers, output_size)

    prepped = prepare_params(params, input_size, hidden, num_layers)
    fwd = jax.jit(functools.partial(bilstm_forward, hidden=hidden,
                                    num_layers=num_layers, output_size=output_size))
    y = jax.block_until_ready(fwd(x, prepped))

    y_ref = jax.block_until_ready(ref_forward(x, params, num_layers, hidden))
    assert y.shape == (batch, output_size)
    max_err = float(jnp.max(jnp.abs(y - y_ref)))
    # bf16 matmul operands (f32 accumulation) vs the pure-f32 reference -> relaxed tolerance.
    assert jnp.allclose(y, y_ref, rtol=2e-2, atol=2e-2), \
        f"mismatch vs. JAX reference (max abs err {max_err:.3e})"

    print("KERNEL_OK")
</pallas_src>

<mosaic_0001>
module attributes {stable_mosaic.version = 11 : i64} {
  func.func @_bilstm_seq_kernel(%arg0: memref<8x8x16xbf16, #tpu.memory_space<vmem>>, %arg1: memref<16x512xbf16, #tpu.memory_space<vmem>>, %arg2: memref<16x512xbf16, #tpu.memory_space<vmem>>, %arg3: memref<64x512xbf16, #tpu.memory_space<vmem>>, %arg4: memref<1x512xf32, #tpu.memory_space<vmem>>, %arg5: memref<1x512xf32, #tpu.memory_space<vmem>>, %arg6: memref<8x8x32xbf16, #tpu.memory_space<vmem>>, %arg7: memref<8x8x32xbf16, #tpu.memory_space<vmem>>, %arg8: memref<8x8x512xbf16, #tpu.memory_space<vmem>>, %arg9: memref<8x8x512xbf16, #tpu.memory_space<vmem>>) attributes {dimension_semantics = [], scalar_prefetch = 0 : i64, scratch_operands = 2 : i64, tpu.core_type = #tpu.core_type<tc>} {
    %c0 = arith.constant 0 : index
    %c0_0 = arith.constant 0 : index
    %0 = vector.load %arg4[%c0, %c0_0] : memref<1x512xf32, #tpu.memory_space<vmem>>, vector<1x512xf32>
    %c0_1 = arith.constant 0 : index
    %c0_2 = arith.constant 0 : index
    %1 = vector.load %arg5[%c0_1, %c0_2] : memref<1x512xf32, #tpu.memory_space<vmem>>, vector<1x512xf32>
    %c0_3 = arith.constant 0 : index
    %c0_4 = arith.constant 0 : index
    %c0_5 = arith.constant 0 : index
    %2 = vector.load %arg0[%c0_3, %c0_4, %c0_5] : memref<8x8x16xbf16, #tpu.memory_space<vmem>>, vector<8x8x16xbf16>
    %3 = vector.shape_cast %2 : vector<8x8x16xbf16> to vector<64x16xbf16>
    %c0_6 = arith.constant 0 : index
    %c0_7 = arith.constant 0 : index
    %4 = vector.load %arg1[%c0_6, %c0_7] : memref<16x512xbf16, #tpu.memory_space<vmem>>, vector<16x512xbf16>
    %cst = arith.constant dense<0.000000e+00> : vector<64x512xf32>
    %5 = tpu.matmul %3, %4, %cst {dimension_numbers = #tpu.dot_dimension_numbers<[1], [0], [0], [1], [0, 0, 1, 1], [], []>} : vector<64x16xbf16>, vector<16x512xbf16>, vector<64x512xf32> -> vector<64x512xf32>
    %6 = vector.broadcast %0 : vector<1x512xf32> to vector<64x512xf32>
    %7 = arith.addf %6, %5 : vector<64x512xf32>
    %c0_8 = arith.constant 0 : index
    %c0_9 = arith.constant 0 : index
    %8 = vector.load %arg2[%c0_8, %c0_9] : memref<16x512xbf16, #tpu.memory_space<vmem>>, vector<16x512xbf16>
    %cst_10 = arith.constant dense<0.000000e+00> : vector<64x512xf32>
    %9 = tpu.matmul %3, %8, %cst_10 {dimension_numbers = #tpu.dot_dimension_numbers<[1], [0], [0], [1], [0, 0, 1, 1], [], []>} : vector<64x16xbf16>, vector<16x512xbf16>, vector<64x512xf32> -> vector<64x512xf32>
    %10 = vector.broadcast %1 : vector<1x512xf32> to vector<64x512xf32>
    %11 = arith.addf %10, %9 : vector<64x512xf32>
    %12 = vector.shape_cast %7 : vector<64x512xf32> to vector<8x8x512xf32>
    %13 = arith.truncf %12 : vector<8x8x512xf32> to vector<8x8x512xbf16>
    %c0_11 = arith.constant 0 : index
    %c0_12 = arith.constant 0 : index
    %c0_13 = arith.constant 0 : index
    %14 = vector.load %arg8[%c0_11, %c0_12, %c0_13] : memref<8x8x512xbf16, #tpu.memory_space<vmem>>, vector<8x8x512xbf16>
    tpu.vector_store %arg8[%c0_11, %c0_12, %c0_13], %13 {strides = array<i32>} : memref<8x8x512xbf16, #tpu.memory_space<vmem>>, vector<8x8x512xbf16>,
    %15 = vector.shape_cast %11 : vector<64x512xf32> to vector<8x8x512xf32>
    %16 = arith.truncf %15 : vector<8x8x512xf32> to vector<8x8x512xbf16>
    %c0_14 = arith.constant 0 : index
    %c0_15 = arith.constant 0 : index
    %c0_16 = arith.constant 0 : index
    %17 = vector.load %arg9[%c0_14, %c0_15, %c0_16] : memref<8x8x512xbf16, #tpu.memory_space<vmem>>, vector<8x8x512xbf16>
    tpu.vector_store %arg9[%c0_14, %c0_15, %c0_16], %16 {strides = array<i32>} : memref<8x8x512xbf16, #tpu.memory_space<vmem>>, vector<8x8x512xbf16>,
    %c0_17 = arith.constant 0 : index
    %c0_18 = arith.constant 0 : index
    %18 = vector.load %arg3[%c0_17, %c0_18] : memref<64x512xbf16, #tpu.memory_space<vmem>>, vector<64x512xbf16>
    %cst_19 = arith.constant 0.000000e+00 : f32
    %19 = vector.broadcast %cst_19 : f32 to vector<8x64xf32>
    %c0_20 = arith.constant 0 : index
    %c0_21 = arith.constant 0 : index
    %c0_22 = arith.constant 0 : index
    %20 = vector.load %arg8[%c0_20, %c0_21, %c0_22] : memref<8x8x512xbf16, #tpu.memory_space<vmem>>, vector<1x8x512xbf16>
    %21 = vector.shape_cast %20 : vector<1x8x512xbf16> to vector<8x512xbf16>
    %22 = arith.extf %21 : vector<8x512xbf16> to vector<8x512xf32>
    %c7 = arith.constant 7 : index
    %c0_23 = arith.constant 0 : index
    %c0_24 = arith.constant 0 : index
    %23 = vector.load %arg9[%c7, %c0_23, %c0_24] : memref<8x8x512xbf16, #tpu.memory_space<vmem>>, vector<1x8x512xbf16>
    %24 = vector.shape_cast %23 : vector<1x8x512xbf16> to vector<8x512xbf16>
    %25 = arith.extf %24 : vector<8x512xbf16> to vector<8x512xf32>
    %26 = arith.addf %22, %25 : vector<8x512xf32>
    %27 = arith.truncf %19 : vector<8x64xf32> to vector<8x64xbf16>
    %cst_25 = arith.constant dense<0.000000e+00> : vector<8x512xf32>
    %28 = tpu.matmul %27, %18, %cst_25 {dimension_numbers = #tpu.dot_dimension_numbers<[1], [0], [0], [1], [0, 0, 1, 1], [], []>} : vector<8x64xbf16>, vector<64x512xbf16>, vector<8x512xf32> -> vector<8x512xf32>
    %29 = arith.addf %26, %28 : vector<8x512xf32>
    %30 = vector.extract_strided_slice %29 {offsets = [0, 0], sizes = [8, 64], strides = [1, 1]} : vector<8x512xf32> to vector<8x64xf32>
    %31 = arith.negf %30 : vector<8x64xf32>
    %32 = math.exp %31 : vector<8x64xf32>
    %cst_26 = arith.constant 1.000000e+00 : f32
    %33 = vector.broadcast %cst_26 : f32 to vector<8x64xf32>
    %34 = arith.addf %33, %32 : vector<8x64xf32>
    %35 = arith.divf %33, %34 : vector<8x64xf32>
    %36 = vector.extract_strided_slice %29 {offsets = [0, 128], sizes = [8, 64], strides = [1, 1]} : vector<8x512xf32> to vector<8x64xf32>
    %37 = arith.negf %36 : vector<8x64xf32>
    %38 = math.exp %37 : vector<8x64xf32>
    %cst_27 = arith.constant 1.000000e+00 : f32
    %39 = vector.broadcast %cst_27 : f32 to vector<8x64xf32>
    %40 = arith.addf %39, %38 : vector<8x64xf32>
    %41 = arith.divf %39, %40 : vector<8x64xf32>
    %42 = vector.extract_strided_slice %29 {offsets = [0, 256], sizes = [8, 64], strides = [1, 1]} : vector<8x512xf32> to vector<8x64xf32>
    %43 = arith.negf %42 : vector<8x64xf32>
    %44 = math.exp %43 : vector<8x64xf32>
    %cst_28 = arith.constant 1.000000e+00 : f32
    %45 = vector.broadcast %cst_28 : f32 to vector<8x64xf32>
    %46 = arith.addf %45, %44 : vector<8x64xf32>
    %47 = arith.divf %45, %46 : vector<8x64xf32>
    %48 = vector.extract_strided_slice %29 {offsets = [0, 384], sizes = [8, 64], strides = [1, 1]} : vector<8x512xf32> to vector<8x64xf32>
    %49 = math.tanh %48 : vector<8x64xf32>
    %50 = arith.mulf %41, %19 : vector<8x64xf32>
    %51 = arith.mulf %35, %49 : vector<8x64xf32>
    %52 = arith.addf %50, %51 : vector<8x64xf32>
    %53 = math.tanh %52 : vector<8x64xf32>
    %54 = arith.mulf %47, %53 : vector<8x64xf32>
    %55 = vector.extract_strided_slice %54 {offsets = [0, 0], sizes = [8, 32], strides = [1, 1]} : vector<8x64xf32> to vector<8x32xf32>
    %56 = arith.truncf %55 : vector<8x32xf32> to vector<8x32xbf16>
    %c0_29 = arith.constant 0 : index
    %c0_30 = arith.constant 0 : index
    %c0_31 = arith.constant 0 : index
    %57 = vector.load %arg6[%c0_29, %c0_30, %c0_31] : memref<8x8x32xbf16, #tpu.memory_space<vmem>>, vector<1x8x32xbf16>
    %58 = vector.shape_cast %57 : vector<1x8x32xbf16> to vector<8x32xbf16>
    %59 = vector.shape_cast %56 : vector<8x32xbf16> to vector<1x8x32xbf16>
    tpu.vector_store %arg6[%c0_29, %c0_30, %c0_31], %59 {strides = array<i32>} : memref<8x8x32xbf16, #tpu.memory_space<vmem>>, vector<1x8x32xbf16>,
    %60 = vector.extract_strided_slice %54 {offsets = [0, 32], sizes = [8, 32], strides = [1, 1]} : vector<8x64xf32> to vector<8x32xf32>
    %61 = arith.truncf %60 : vector<8x32xf32> to vector<8x32xbf16>
    %c7_32 = arith.constant 7 : index
    %c0_33 = arith.constant 0 : index
    %c0_34 = arith.constant 0 : index
    %62 = vector.load %arg7[%c7_32, %c0_33, %c0_34] : memref<8x8x32xbf16, #tpu.memory_space<vmem>>, vector<1x8x32xbf16>
    %63 = vector.shape_cast %62 : vector<1x8x32xbf16> to vector<8x32xbf16>
    %64 = vector.shape_cast %61 : vector<8x32xbf16> to vector<1x8x32xbf16>
    tpu.vector_store %arg7[%c7_32, %c0_33, %c0_34], %64 {strides = array<i32>} : memref<8x8x32xbf16, #tpu.memory_space<vmem>>, vector<1x8x32xbf16>,
    %c1 = arith.constant 1 : index
    %c0_35 = arith.constant 0 : index
    %c0_36 = arith.constant 0 : index
    %65 = vector.load %arg8[%c1, %c0_35, %c0_36] : memref<8x8x512xbf16, #tpu.memory_space<vmem>>, vector<1x8x512xbf16>
    %66 = vector.shape_cast %65 : vector<1x8x512xbf16> to vector<8x512xbf16>
    %67 = arith.extf %66 : vector<8x512xbf16> to vector<8x512xf32>
    %c6 = arith.constant 6 : index
    %c0_37 = arith.constant 0 : index
    %c0_38 = arith.constant 0 : index
    %68 = vector.load %arg9[%c6, %c0_37, %c0_38] : memref<8x8x512xbf16, #tpu.memory_space<vmem>>, vector<1x8x512xbf16>
    %69 = vector.shape_cast %68 : vector<1x8x512xbf16> to vector<8x512xbf16>
    %70 = arith.extf %69 : vector<8x512xbf16> to vector<8x512xf32>
    %71 = arith.addf %67, %70 : vector<8x512xf32>
    %72 = arith.truncf %54 : vector<8x64xf32> to vector<8x64xbf16>
    %cst_39 = arith.constant dense<0.000000e+00> : vector<8x512xf32>
    %73 = tpu.matmul %72, %18, %cst_39 {dimension_numbers = #tpu.dot_dimension_numbers<[1], [0], [0], [1], [0, 0, 1, 1], [], []>} : vector<8x64xbf16>, vector<64x512xbf16>, vector<8x512xf32> -> vector<8x512xf32>
    %74 = arith.addf %71, %73 : vector<8x512xf32>
    %75 = vector.extract_strided_slice %74 {offsets = [0, 0], sizes = [8, 64], strides = [1, 1]} : vector<8x512xf32> to vector<8x64xf32>
    %76 = arith.negf %75 : vector<8x64xf32>
    %77 = math.exp %76 : vector<8x64xf32>
    %cst_40 = arith.constant 1.000000e+00 : f32
    %78 = vector.broadcast %cst_40 : f32 to vector<8x64xf32>
    %79 = arith.addf %78, %77 : vector<8x64xf32>
    %80 = arith.divf %78, %79 : vector<8x64xf32>
    %81 = vector.extract_strided_slice %74 {offsets = [0, 128], sizes = [8, 64], strides = [1, 1]} : vector<8x512xf32> to vector<8x64xf32>
    %82 = arith.negf %81 : vector<8x64xf32>
    %83 = math.exp %82 : vector<8x64xf32>
    %cst_41 = arith.constant 1.000000e+00 : f32
    %84 = vector.broadcast %cst_41 : f32 to vector<8x64xf32>
    %85 = arith.addf %84, %83 : vector<8x64xf32>
    %86 = arith.divf %84, %85 : vector<8x64xf32>
    %87 = vector.extract_strided_slice %74 {offsets = [0, 256], sizes = [8, 64], strides = [1, 1]} : vector<8x512xf32> to vector<8x64xf32>
    %88 = arith.negf %87 : vector<8x64xf32>
    %89 = math.exp %88 : vector<8x64xf32>
    %cst_42 = arith.constant 1.000000e+00 : f32
    %90 = vector.broadcast %cst_42 : f32 to vector<8x64xf32>
    %91 = arith.addf %90, %89 : vector<8x64xf32>
    %92 = arith.divf %90, %91 : vector<8x64xf32>
    %93 = vector.extract_strided_slice %74 {offsets = [0, 384], sizes = [8, 64], strides = [1, 1]} : vector<8x512xf32> to vector<8x64xf32>
    %94 = math.tanh %93 : vector<8x64xf32>
    %95 = arith.mulf %86, %52 : vector<8x64xf32>
    %96 = arith.mulf %80, %94 : vector<8x64xf32>
    %97 = arith.addf %95, %96 : vector<8x64xf32>
    %98 = math.tanh %97 : vector<8x64xf32>
    %99 = arith.mulf %92, %98 : vector<8x64xf32>
    %100 = vector.extract_strided_slice %99 {offsets = [0, 0], sizes = [8, 32], strides = [1, 1]} : vector<8x64xf32> to vector<8x32xf32>
    %101 = arith.truncf %100 : vector<8x32xf32> to vector<8x32xbf16>
    %c1_43 = arith.constant 1 : index
    %c0_44 = arith.constant 0 : index
    %c0_45 = arith.constant 0 : index
    %102 = vector.load %arg6[%c1_43, %c0_44, %c0_45] : memref<8x8x32xbf16, #tpu.memory_space<vmem>>, vector<1x8x32xbf16>
    %103 = vector.shape_cast %102 : vector<1x8x32xbf16> to vector<8x32xbf16>
    %104 = vector.shape_cast %101 : vector<8x32xbf16> to vector<1x8x32xbf16>
    tpu.vector_store %arg6[%c1_43, %c0_44, %c0_45], %104 {strides = array<i32>} : memref<8x8x32xbf16, #tpu.memory_space<vmem>>, vector<1x8x32xbf16>,
    %105 = vector.extract_strided_slice %99 {offsets = [0, 32], sizes = [8, 32], strides = [1, 1]} : vector<8x64xf32> to vector<8x32xf32>
    %106 = arith.truncf %105 : vector<8x32xf32> to vector<8x32xbf16>
    %c6_46 = arith.constant 6 : index
    %c0_47 = arith.constant 0 : index
    %c0_48 = arith.constant 0 : index
    %107 = vector.load %arg7[%c6_46, %c0_47, %c0_48] : memref<8x8x32xbf16, #tpu.memory_space<vmem>>, vector<1x8x32xbf16>
    %108 = vector.shape_cast %107 : vector<1x8x32xbf16> to vector<8x32xbf16>
    %109 = vector.shape_cast %106 : vector<8x32xbf16> to vector<1x8x32xbf16>
    tpu.vector_store %arg7[%c6_46, %c0_47, %c0_48], %109 {strides = array<i32>} : memref<8x8x32xbf16, #tpu.memory_space<vmem>>, vector<1x8x32xbf16>,
    %c2 = arith.constant 2 : index
    %c0_49 = arith.constant 0 : index
    %c0_50 = arith.constant 0 : index
    %110 = vector.load %arg8[%c2, %c0_49, %c0_50] : memref<8x8x512xbf16, #tpu.memory_space<vmem>>, vector<1x8x512xbf16>
    %111 = vector.shape_cast %110 : vector<1x8x512xbf16> to vector<8x512xbf16>
    %112 = arith.extf %111 : vector<8x512xbf16> to vector<8x512xf32>
    %c5 = arith.constant 5 : index
    %c0_51 = arith.constant 0 : index
    %c0_52 = arith.constant 0 : index
    %113 = vector.load %arg9[%c5, %c0_51, %c0_52] : memref<8x8x512xbf16, #tpu.memory_space<vmem>>, vector<1x8x512xbf16>
    %114 = vector.shape_cast %113 : vector<1x8x512xbf16> to vector<8x512xbf16>
    %115 = arith.extf %114 : vector<8x512xbf16> to vector<8x512xf32>
    %116 = arith.addf %112, %115 : vector<8x512xf32>
    %117 = arith.truncf %99 : vector<8x64xf32> to vector<8x64xbf16>
    %cst_53 = arith.constant dense<0.000000e+00> : vector<8x512xf32>
    %118 = tpu.matmul %117, %18, %cst_53 {dimension_numbers = #tpu.dot_dimension_numbers<[1], [0], [0], [1], [0, 0, 1, 1], [], []>} : vector<8x64xbf16>, vector<64x512xbf16>, vector<8x512xf32> -> vector<8x512xf32>
    %119 = arith.addf %116, %118 : vector<8x512xf32>
    %120 = vector.extract_strided_slice %119 {offsets = [0, 0], sizes = [8, 64], strides = [1, 1]} : vector<8x512xf32> to vector<8x64xf32>
    %121 = arith.negf %120 : vector<8x64xf32>
    %122 = math.exp %121 : vector<8x64xf32>
    %cst_54 = arith.constant 1.000000e+00 : f32
    %123 = vector.broadcast %cst_54 : f32 to vector<8x64xf32>
    %124 = arith.addf %123, %122 : vector<8x64xf32>
    %125 = arith.divf %123, %124 : vector<8x64xf32>
    %126 = vector.extract_strided_slice %119 {offsets = [0, 128], sizes = [8, 64], strides = [1, 1]} : vector<8x512xf32> to vector<8x64xf32>
    %127 = arith.negf %126 : vector<8x64xf32>
    %128 = math.exp %127 : vector<8x64xf32>
    %cst_55 = arith.constant 1.000000e+00 : f32
    %129 = vector.broadcast %cst_55 : f32 to vector<8x64xf32>
    %130 = arith.addf %129, %128 : vector<8x64xf32>
    %131 = arith.divf %129, %130 : vector<8x64xf32>
    %132 = vector.extract_strided_slice %119 {offsets = [0, 256], sizes = [8, 64], strides = [1, 1]} : vector<8x512xf32> to vector<8x64xf32>
    %133 = arith.negf %132 : vector<8x64xf32>
    %134 = math.exp %133 : vector<8x64xf32>
    %cst_56 = arith.constant 1.000000e+00 : f32
    %135 = vector.broadcast %cst_56 : f32 to vector<8x64xf32>
    %136 = arith.addf %135, %134 : vector<8x64xf32>
    %137 = arith.divf %135, %136 : vector<8x64xf32>
    %138 = vector.extract_strided_slice %119 {offsets = [0, 384], sizes = [8, 64], strides = [1, 1]} : vector<8x512xf32> to vector<8x64xf32>
    %139 = math.tanh %138 : vector<8x64xf32>
    %140 = arith.mulf %131, %97 : vector<8x64xf32>
    %141 = arith.mulf %125, %139 : vector<8x64xf32>
    %142 = arith.addf %140, %141 : vector<8x64xf32>
    %143 = math.tanh %142 : vector<8x64xf32>
    %144 = arith.mulf %137, %143 : vector<8x64xf32>
    %145 = vector.extract_strided_slice %144 {offsets = [0, 0], sizes = [8, 32], strides = [1, 1]} : vector<8x64xf32> to vector<8x32xf32>
    %146 = arith.truncf %145 : vector<8x32xf32> to vector<8x32xbf16>
    %c2_57 = arith.constant 2 : index
    %c0_58 = arith.constant 0 : index
    %c0_59 = arith.constant 0 : index
    %147 = vector.load %arg6[%c2_57, %c0_58, %c0_59] : memref<8x8x32xbf16, #tpu.memory_space<vmem>>, vector<1x8x32xbf16>
    %148 = vector.shape_cast %147 : vector<1x8x32xbf16> to vector<8x32xbf16>
    %149 = vector.shape_cast %146 : vector<8x32xbf16> to vector<1x8x32xbf16>
    tpu.vector_store %arg6[%c2_57, %c0_58, %c0_59], %149 {strides = array<i32>} : memref<8x8x32xbf16, #tpu.memory_space<vmem>>, vector<1x8x32xbf16>,
    %150 = vector.extract_strided_slice %144 {offsets = [0, 32], sizes = [8, 32], strides = [1, 1]} : vector<8x64xf32> to vector<8x32xf32>
    %151 = arith.truncf %150 : vector<8x32xf32> to vector<8x32xbf16>
    %c5_60 = arith.constant 5 : index
    %c0_61 = arith.constant 0 : index
    %c0_62 = arith.constant 0 : index
    %152 = vector.load %arg7[%c5_60, %c0_61, %c0_62] : memref<8x8x32xbf16, #tpu.memory_space<vmem>>, vector<1x8x32xbf16>
    %153 = vector.shape_cast %152 : vector<1x8x32xbf16> to vector<8x32xbf16>
    %154 = vector.shape_cast %151 : vector<8x32xbf16> to vector<1x8x32xbf16>
    tpu.vector_store %arg7[%c5_60, %c0_61, %c0_62], %154 {strides = array<i32>} : memref<8x8x32xbf16, #tpu.memory_space<vmem>>, vector<1x8x32xbf16>,
    %c3 = arith.constant 3 : index
    %c0_63 = arith.constant 0 : index
    %c0_64 = arith.constant 0 : index
    %155 = vector.load %arg8[%c3, %c0_63, %c0_64] : memref<8x8x512xbf16, #tpu.memory_space<vmem>>, vector<1x8x512xbf16>
    %156 = vector.shape_cast %155 : vector<1x8x512xbf16> to vector<8x512xbf16>
    %157 = arith.extf %156 : vector<8x512xbf16> to vector<8x512xf32>
    %c4 = arith.constant 4 : index
    %c0_65 = arith.constant 0 : index
    %c0_66 = arith.constant 0 : index
    %158 = vector.load %arg9[%c4, %c0_65, %c0_66] : memref<8x8x512xbf16, #tpu.memory_space<vmem>>, vector<1x8x512xbf16>
    %159 = vector.shape_cast %158 : vector<1x8x512xbf16> to vector<8x512xbf16>
    %160 = arith.extf %159 : vector<8x512xbf16> to vector<8x512xf32>
    %161 = arith.addf %157, %160 : vector<8x512xf32>
    %162 = arith.truncf %144 : vector<8x64xf32> to vector<8x64xbf16>
    %cst_67 = arith.constant dense<0.000000e+00> : vector<8x512xf32>
    %163 = tpu.matmul %162, %18, %cst_67 {dimension_numbers = #tpu.dot_dimension_numbers<[1], [0], [0], [1], [0, 0, 1, 1], [], []>} : vector<8x64xbf16>, vector<64x512xbf16>, vector<8x512xf32> -> vector<8x512xf32>
    %164 = arith.addf %161, %163 : vector<8x512xf32>
    %165 = vector.extract_strided_slice %164 {offsets = [0, 0], sizes = [8, 64], strides = [1, 1]} : vector<8x512xf32> to vector<8x64xf32>
    %166 = arith.negf %165 : vector<8x64xf32>
    %167 = math.exp %166 : vector<8x64xf32>
    %cst_68 = arith.constant 1.000000e+00 : f32
    %168 = vector.broadcast %cst_68 : f32 to vector<8x64xf32>
    %169 = arith.addf %168, %167 : vector<8x64xf32>
    %170 = arith.divf %168, %169 : vector<8x64xf32>
    %171 = vector.extract_strided_slice %164 {offsets = [0, 128], sizes = [8, 64], strides = [1, 1]} : vector<8x512xf32> to vector<8x64xf32>
    %172 = arith.negf %171 : vector<8x64xf32>
    %173 = math.exp %172 : vector<8x64xf32>
    %cst_69 = arith.constant 1.000000e+00 : f32
    %174 = vector.broadcast %cst_69 : f32 to vector<8x64xf32>
    %175 = arith.addf %174, %173 : vector<8x64xf32>
    %176 = arith.divf %174, %175 : vector<8x64xf32>
    %177 = vector.extract_strided_slice %164 {offsets = [0, 256], sizes = [8, 64], strides = [1, 1]} : vector<8x512xf32> to vector<8x64xf32>
    %178 = arith.negf %177 : vector<8x64xf32>
    %179 = math.exp %178 : vector<8x64xf32>
    %cst_70 = arith.constant 1.000000e+00 : f32
    %180 = vector.broadcast %cst_70 : f32 to vector<8x64xf32>
    %181 = arith.addf %180, %179 : vector<8x64xf32>
    %182 = arith.divf %180, %181 : vector<8x64xf32>
    %183 = vector.extract_strided_slice %164 {offsets = [0, 384], sizes = [8, 64], strides = [1, 1]} : vector<8x512xf32> to vector<8x64xf32>
    %184 = math.tanh %183 : vector<8x64xf32>
    %185 = arith.mulf %176, %142 : vector<8x64xf32>
    %186 = arith.mulf %170, %184 : vector<8x64xf32>
    %187 = arith.addf %185, %186 : vector<8x64xf32>
    %188 = math.tanh %187 : vector<8x64xf32>
    %189 = arith.mulf %182, %188 : vector<8x64xf32>
    %190 = vector.extract_strided_slice %189 {offsets = [0, 0], sizes = [8, 32], strides = [1, 1]} : vector<8x64xf32> to vector<8x32xf32>
    %191 = arith.truncf %190 : vector<8x32xf32> to vector<8x32xbf16>
    %c3_71 = arith.constant 3 : index
    %c0_72 = arith.constant 0 : index
    %c0_73 = arith.constant 0 : index
    %192 = vector.load %arg6[%c3_71, %c0_72, %c0_73] : memref<8x8x32xbf16, #tpu.memory_space<vmem>>, vector<1x8x32xbf16>
    %193 = vector.shape_cast %192 : vector<1x8x32xbf16> to vector<8x32xbf16>
    %194 = vector.shape_cast %191 : vector<8x32xbf16> to vector<1x8x32xbf16>
    tpu.vector_store %arg6[%c3_71, %c0_72, %c0_73], %194 {strides = array<i32>} : memref<8x8x32xbf16, #tpu.memory_space<vmem>>, vector<1x8x32xbf16>,
    %195 = vector.extract_strided_slice %189 {offsets = [0, 32], sizes = [8, 32], strides = [1, 1]} : vector<8x64xf32> to vector<8x32xf32>
    %196 = arith.truncf %195 : vector<8x32xf32> to vector<8x32xbf16>
    %c4_74 = arith.constant 4 : index
    %c0_75 = arith.constant 0 : index
    %c0_76 = arith.constant 0 : index
    %197 = vector.load %arg7[%c4_74, %c0_75, %c0_76] : memref<8x8x32xbf16, #tpu.memory_space<vmem>>, vector<1x8x32xbf16>
    %198 = vector.shape_cast %197 : vector<1x8x32xbf16> to vector<8x32xbf16>
    %199 = vector.shape_cast %196 : vector<8x32xbf16> to vector<1x8x32xbf16>
    tpu.vector_store %arg7[%c4_74, %c0_75, %c0_76], %199 {strides = array<i32>} : memref<8x8x32xbf16, #tpu.memory_space<vmem>>, vector<1x8x32xbf16>,
    %c4_77 = arith.constant 4 : index
    %c0_78 = arith.constant 0 : index
    %c0_79 = arith.constant 0 : index
    %200 = vector.load %arg8[%c4_77, %c0_78, %c0_79] : memref<8x8x512xbf16, #tpu.memory_space<vmem>>, vector<1x8x512xbf16>
    %201 = vector.shape_cast %200 : vector<1x8x512xbf16> to vector<8x512xbf16>
    %202 = arith.extf %201 : vector<8x512xbf16> to vector<8x512xf32>
    %c3_80 = arith.constant 3 : index
    %c0_81 = arith.constant 0 : index
    %c0_82 = arith.constant 0 : index
    %203 = vector.load %arg9[%c3_80, %c0_81, %c0_82] : memref<8x8x512xbf16, #tpu.memory_space<vmem>>, vector<1x8x512xbf16>
    %204 = vector.shape_cast %203 : vector<1x8x512xbf16> to vector<8x512xbf16>
    %205 = arith.extf %204 : vector<8x512xbf16> to vector<8x512xf32>
    %206 = arith.addf %202, %205 : vector<8x512xf32>
    %207 = arith.truncf %189 : vector<8x64xf32> to vector<8x64xbf16>
    %cst_83 = arith.constant dense<0.000000e+00> : vector<8x512xf32>
    %208 = tpu.matmul %207, %18, %cst_83 {dimension_numbers = #tpu.dot_dimension_numbers<[1], [0], [0], [1], [0, 0, 1, 1], [], []>} : vector<8x64xbf16>, vector<64x512xbf16>, vector<8x512xf32> -> vector<8x512xf32>
    %209 = arith.addf %206, %208 : vector<8x512xf32>
    %210 = vector.extract_strided_slice %209 {offsets = [0, 0], sizes = [8, 64], strides = [1, 1]} : vector<8x512xf32> to vector<8x64xf32>
    %211 = arith.negf %210 : vector<8x64xf32>
    %212 = math.exp %211 : vector<8x64xf32>
    %cst_84 = arith.constant 1.000000e+00 : f32
    %213 = vector.broadcast %cst_84 : f32 to vector<8x64xf32>
    %214 = arith.addf %213, %212 : vector<8x64xf32>
    %215 = arith.divf %213, %214 : vector<8x64xf32>
    %216 = vector.extract_strided_slice %209 {offsets = [0, 128], sizes = [8, 64], strides = [1, 1]} : vector<8x512xf32> to vector<8x64xf32>
    %217 = arith.negf %216 : vector<8x64xf32>
    %218 = math.exp %217 : vector<8x64xf32>
    %cst_85 = arith.constant 1.000000e+00 : f32
    %219 = vector.broadcast %cst_85 : f32 to vector<8x64xf32>
    %220 = arith.addf %219, %218 : vector<8x64xf32>
    %221 = arith.divf %219, %220 : vector<8x64xf32>
    %222 = vector.extract_strided_slice %209 {offsets = [0, 256], sizes = [8, 64], strides = [1, 1]} : vector<8x512xf32> to vector<8x64xf32>
    %223 = arith.negf %222 : vector<8x64xf32>
    %224 = math.exp %223 : vector<8x64xf32>
    %cst_86 = arith.constant 1.000000e+00 : f32
    %225 = vector.broadcast %cst_86 : f32 to vector<8x64xf32>
    %226 = arith.addf %225, %224 : vector<8x64xf32>
    %227 = arith.divf %225, %226 : vector<8x64xf32>
    %228 = vector.extract_strided_slice %209 {offsets = [0, 384], sizes = [8, 64], strides = [1, 1]} : vector<8x512xf32> to vector<8x64xf32>
    %229 = math.tanh %228 : vector<8x64xf32>
    %230 = arith.mulf %221, %187 : vector<8x64xf32>
    %231 = arith.mulf %215, %229 : vector<8x64xf32>
    %232 = arith.addf %230, %231 : vector<8x64xf32>
    %233 = math.tanh %232 : vector<8x64xf32>
    %234 = arith.mulf %227, %233 : vector<8x64xf32>
    %235 = vector.extract_strided_slice %234 {offsets = [0, 0], sizes = [8, 32], strides = [1, 1]} : vector<8x64xf32> to vector<8x32xf32>
    %236 = arith.truncf %235 : vector<8x32xf32> to vector<8x32xbf16>
    %c4_87 = arith.constant 4 : index
    %c0_88 = arith.constant 0 : index
    %c0_89 = arith.constant 0 : index
    %237 = vector.load %arg6[%c4_87, %c0_88, %c0_89] : memref<8x8x32xbf16, #tpu.memory_space<vmem>>, vector<1x8x32xbf16>
    %238 = vector.shape_cast %237 : vector<1x8x32xbf16> to vector<8x32xbf16>
    %239 = vector.shape_cast %236 : vector<8x32xbf16> to vector<1x8x32xbf16>
    tpu.vector_store %arg6[%c4_87, %c0_88, %c0_89], %239 {strides = array<i32>} : memref<8x8x32xbf16, #tpu.memory_space<vmem>>, vector<1x8x32xbf16>,
    %240 = vector.extract_strided_slice %234 {offsets = [0, 32], sizes = [8, 32], strides = [1, 1]} : vector<8x64xf32> to vector<8x32xf32>
    %241 = arith.truncf %240 : vector<8x32xf32> to vector<8x32xbf16>
    %c3_90 = arith.constant 3 : index
    %c0_91 = arith.constant 0 : index
    %c0_92 = arith.constant 0 : index
    %242 = vector.load %arg7[%c3_90, %c0_91, %c0_92] : memref<8x8x32xbf16, #tpu.memory_space<vmem>>, vector<1x8x32xbf16>
    %243 = vector.shape_cast %242 : vector<1x8x32xbf16> to vector<8x32xbf16>
    %244 = vector.shape_cast %241 : vector<8x32xbf16> to vector<1x8x32xbf16>
    tpu.vector_store %arg7[%c3_90, %c0_91, %c0_92], %244 {strides = array<i32>} : memref<8x8x32xbf16, #tpu.memory_space<vmem>>, vector<1x8x32xbf16>,
    %c5_93 = arith.constant 5 : index
    %c0_94 = arith.constant 0 : index
    %c0_95 = arith.constant 0 : index
    %245 = vector.load %arg8[%c5_93, %c0_94, %c0_95] : memref<8x8x512xbf16, #tpu.memory_space<vmem>>, vector<1x8x512xbf16>
    %246 = vector.shape_cast %245 : vector<1x8x512xbf16> to vector<8x512xbf16>
    %247 = arith.extf %246 : vector<8x512xbf16> to vector<8x512xf32>
    %c2_96 = arith.constant 2 : index
    %c0_97 = arith.constant 0 : index
    %c0_98 = arith.constant 0 : index
    %248 = vector.load %arg9[%c2_96, %c0_97, %c0_98] : memref<8x8x512xbf16, #tpu.memory_space<vmem>>, vector<1x8x512xbf16>
    %249 = vector.shape_cast %248 : vector<1x8x512xbf16> to vector<8x512xbf16>
    %250 = arith.extf %249 : vector<8x512xbf16> to vector<8x512xf32>
    %251 = arith.addf %247, %250 : vector<8x512xf32>
    %252 = arith.truncf %234 : vector<8x64xf32> to vector<8x64xbf16>
    %cst_99 = arith.constant dense<0.000000e+00> : vector<8x512xf32>
    %253 = tpu.matmul %252, %18, %cst_99 {dimension_numbers = #tpu.dot_dimension_numbers<[1], [0], [0], [1], [0, 0, 1, 1], [], []>} : vector<8x64xbf16>, vector<64x512xbf16>, vector<8x512xf32> -> vector<8x512xf32>
    %254 = arith.addf %251, %253 : vector<8x512xf32>
    %255 = vector.extract_strided_slice %254 {offsets = [0, 0], sizes = [8, 64], strides = [1, 1]} : vector<8x512xf32> to vector<8x64xf32>
    %256 = arith.negf %255 : vector<8x64xf32>
    %257 = math.exp %256 : vector<8x64xf32>
    %cst_100 = arith.constant 1.000000e+00 : f32
    %258 = vector.broadcast %cst_100 : f32 to vector<8x64xf32>
    %259 = arith.addf %258, %257 : vector<8x64xf32>
    %260 = arith.divf %258, %259 : vector<8x64xf32>
    %261 = vector.extract_strided_slice %254 {offsets = [0, 128], sizes = [8, 64], strides = [1, 1]} : vector<8x512xf32> to vector<8x64xf32>
    %262 = arith.negf %261 : vector<8x64xf32>
    %263 = math.exp %262 : vector<8x64xf32>
    %cst_101 = arith.constant 1.000000e+00 : f32
    %264 = vector.broadcast %cst_101 : f32 to vector<8x64xf32>
    %265 = arith.addf %264, %263 : vector<8x64xf32>
    %266 = arith.divf %264, %265 : vector<8x64xf32>
    %267 = vector.extract_strided_slice %254 {offsets = [0, 256], sizes = [8, 64], strides = [1, 1]} : vector<8x512xf32> to vector<8x64xf32>
    %268 = arith.negf %267 : vector<8x64xf32>
    %269 = math.exp %268 : vector<8x64xf32>
    %cst_102 = arith.constant 1.000000e+00 : f32
    %270 = vector.broadcast %cst_102 : f32 to vector<8x64xf32>
    %271 = arith.addf %270, %269 : vector<8x64xf32>
    %272 = arith.divf %270, %271 : vector<8x64xf32>
    %273 = vector.extract_strided_slice %254 {offsets = [0, 384], sizes = [8, 64], strides = [1, 1]} : vector<8x512xf32> to vector<8x64xf32>
    %274 = math.tanh %273 : vector<8x64xf32>
    %275 = arith.mulf %266, %232 : vector<8x64xf32>
    %276 = arith.mulf %260, %274 : vector<8x64xf32>
    %277 = arith.addf %275, %276 : vector<8x64xf32>
    %278 = math.tanh %277 : vector<8x64xf32>
    %279 = arith.mulf %272, %278 : vector<8x64xf32>
    %280 = vector.extract_strided_slice %279 {offsets = [0, 0], sizes = [8, 32], strides = [1, 1]} : vector<8x64xf32> to vector<8x32xf32>
    %281 = arith.truncf %280 : vector<8x32xf32> to vector<8x32xbf16>
    %c5_103 = arith.constant 5 : index
    %c0_104 = arith.constant 0 : index
    %c0_105 = arith.constant 0 : index
    %282 = vector.load %arg6[%c5_103, %c0_104, %c0_105] : memref<8x8x32xbf16, #tpu.memory_space<vmem>>, vector<1x8x32xbf16>
    %283 = vector.shape_cast %282 : vector<1x8x32xbf16> to vector<8x32xbf16>
    %284 = vector.shape_cast %281 : vector<8x32xbf16> to vector<1x8x32xbf16>
    tpu.vector_store %arg6[%c5_103, %c0_104, %c0_105], %284 {strides = array<i32>} : memref<8x8x32xbf16, #tpu.memory_space<vmem>>, vector<1x8x32xbf16>,
    %285 = vector.extract_strided_slice %279 {offsets = [0, 32], sizes = [8, 32], strides = [1, 1]} : vector<8x64xf32> to vector<8x32xf32>
    %286 = arith.truncf %285 : vector<8x32xf32> to vector<8x32xbf16>
    %c2_106 = arith.constant 2 : index
    %c0_107 = arith.constant 0 : index
    %c0_108 = arith.constant 0 : index
    %287 = vector.load %arg7[%c2_106, %c0_107, %c0_108] : memref<8x8x32xbf16, #tpu.memory_space<vmem>>, vector<1x8x32xbf16>
    %288 = vector.shape_cast %287 : vector<1x8x32xbf16> to vector<8x32xbf16>
    %289 = vector.shape_cast %286 : vector<8x32xbf16> to vector<1x8x32xbf16>
    tpu.vector_store %arg7[%c2_106, %c0_107, %c0_108], %289 {strides = array<i32>} : memref<8x8x32xbf16, #tpu.memory_space<vmem>>, vector<1x8x32xbf16>,
    %c6_109 = arith.constant 6 : index
    %c0_110 = arith.constant 0 : index
    %c0_111 = arith.constant 0 : index
    %290 = vector.load %arg8[%c6_109, %c0_110, %c0_111] : memref<8x8x512xbf16, #tpu.memory_space<vmem>>, vector<1x8x512xbf16>
    %291 = vector.shape_cast %290 : vector<1x8x512xbf16> to vector<8x512xbf16>
    %292 = arith.extf %291 : vector<8x512xbf16> to vector<8x512xf32>
    %c1_112 = arith.constant 1 : index
    %c0_113 = arith.constant 0 : index
    %c0_114 = arith.constant 0 : index
    %293 = vector.load %arg9[%c1_112, %c0_113, %c0_114] : memref<8x8x512xbf16, #tpu.memory_space<vmem>>, vector<1x8x512xbf16>
    %294 = vector.shape_cast %293 : vector<1x8x512xbf16> to vector<8x512xbf16>
    %295 = arith.extf %294 : vector<8x512xbf16> to vector<8x512xf32>
    %296 = arith.addf %292, %295 : vector<8x512xf32>
    %297 = arith.truncf %279 : vector<8x64xf32> to vector<8x64xbf16>
    %cst_115 = arith.constant dense<0.000000e+00> : vector<8x512xf32>
    %298 = tpu.matmul %297, %18, %cst_115 {dimension_numbers = #tpu.dot_dimension_numbers<[1], [0], [0], [1], [0, 0, 1, 1], [], []>} : vector<8x64xbf16>, vector<64x512xbf16>, vector<8x512xf32> -> vector<8x512xf32>
    %299 = arith.addf %296, %298 : vector<8x512xf32>
    %300 = vector.extract_strided_slice %299 {offsets = [0, 0], sizes = [8, 64], strides = [1, 1]} : vector<8x512xf32> to vector<8x64xf32>
    %301 = arith.negf %300 : vector<8x64xf32>
    %302 = math.exp %301 : vector<8x64xf32>
    %cst_116 = arith.constant 1.000000e+00 : f32
    %303 = vector.broadcast %cst_116 : f32 to vector<8x64xf32>
    %304 = arith.addf %303, %302 : vector<8x64xf32>
    %305 = arith.divf %303, %304 : vector<8x64xf32>
    %306 = vector.extract_strided_slice %299 {offsets = [0, 128], sizes = [8, 64], strides = [1, 1]} : vector<8x512xf32> to vector<8x64xf32>
    %307 = arith.negf %306 : vector<8x64xf32>
    %308 = math.exp %307 : vector<8x64xf32>
    %cst_117 = arith.constant 1.000000e+00 : f32
    %309 = vector.broadcast %cst_117 : f32 to vector<8x64xf32>
    %310 = arith.addf %309, %308 : vector<8x64xf32>
    %311 = arith.divf %309, %310 : vector<8x64xf32>
    %312 = vector.extract_strided_slice %299 {offsets = [0, 256], sizes = [8, 64], strides = [1, 1]} : vector<8x512xf32> to vector<8x64xf32>
    %313 = arith.negf %312 : vector<8x64xf32>
    %314 = math.exp %313 : vector<8x64xf32>
    %cst_118 = arith.constant 1.000000e+00 : f32
    %315 = vector.broadcast %cst_118 : f32 to vector<8x64xf32>
    %316 = arith.addf %315, %314 : vector<8x64xf32>
    %317 = arith.divf %315, %316 : vector<8x64xf32>
    %318 = vector.extract_strided_slice %299 {offsets = [0, 384], sizes = [8, 64], strides = [1, 1]} : vector<8x512xf32> to vector<8x64xf32>
    %319 = math.tanh %318 : vector<8x64xf32>
    %320 = arith.mulf %311, %277 : vector<8x64xf32>
    %321 = arith.mulf %305, %319 : vector<8x64xf32>
    %322 = arith.addf %320, %321 : vector<8x64xf32>
    %323 = math.tanh %322 : vector<8x64xf32>
    %324 = arith.mulf %317, %323 : vector<8x64xf32>
    %325 = vector.extract_strided_slice %324 {offsets = [0, 0], sizes = [8, 32], strides = [1, 1]} : vector<8x64xf32> to vector<8x32xf32>
    %326 = arith.truncf %325 : vector<8x32xf32> to vector<8x32xbf16>
    %c6_119 = arith.constant 6 : index
    %c0_120 = arith.constant 0 : index
    %c0_121 = arith.constant 0 : index
    %327 = vector.load %arg6[%c6_119, %c0_120, %c0_121] : memref<8x8x32xbf16, #tpu.memory_space<vmem>>, vector<1x8x32xbf16>
    %328 = vector.shape_cast %327 : vector<1x8x32xbf16> to vector<8x32xbf16>
    %329 = vector.shape_cast %326 : vector<8x32xbf16> to vector<1x8x32xbf16>
    tpu.vector_store %arg6[%c6_119, %c0_120, %c0_121], %329 {strides = array<i32>} : memref<8x8x32xbf16, #tpu.memory_space<vmem>>, vector<1x8x32xbf16>,
    %330 = vector.extract_strided_slice %324 {offsets = [0, 32], sizes = [8, 32], strides = [1, 1]} : vector<8x64xf32> to vector<8x32xf32>
    %331 = arith.truncf %330 : vector<8x32xf32> to vector<8x32xbf16>
    %c1_122 = arith.constant 1 : index
    %c0_123 = arith.constant 0 : index
    %c0_124 = arith.constant 0 : index
    %332 = vector.load %arg7[%c1_122, %c0_123, %c0_124] : memref<8x8x32xbf16, #tpu.memory_space<vmem>>, vector<1x8x32xbf16>
    %333 = vector.shape_cast %332 : vector<1x8x32xbf16> to vector<8x32xbf16>
    %334 = vector.shape_cast %331 : vector<8x32xbf16> to vector<1x8x32xbf16>
    tpu.vector_store %arg7[%c1_122, %c0_123, %c0_124], %334 {strides = array<i32>} : memref<8x8x32xbf16, #tpu.memory_space<vmem>>, vector<1x8x32xbf16>,
    %c7_125 = arith.constant 7 : index
    %c0_126 = arith.constant 0 : index
    %c0_127 = arith.constant 0 : index
    %335 = vector.load %arg8[%c7_125, %c0_126, %c0_127] : memref<8x8x512xbf16, #tpu.memory_space<vmem>>, vector<1x8x512xbf16>
    %336 = vector.shape_cast %335 : vector<1x8x512xbf16> to vector<8x512xbf16>
    %337 = arith.extf %336 : vector<8x512xbf16> to vector<8x512xf32>
    %c0_128 = arith.constant 0 : index
    %c0_129 = arith.constant 0 : index
    %c0_130 = arith.constant 0 : index
    %338 = vector.load %arg9[%c0_128, %c0_129, %c0_130] : memref<8x8x512xbf16, #tpu.memory_space<vmem>>, vector<1x8x512xbf16>
    %339 = vector.shape_cast %338 : vector<1x8x512xbf16> to vector<8x512xbf16>
    %340 = arith.extf %339 : vector<8x512xbf16> to vector<8x512xf32>
    %341 = arith.addf %337, %340 : vector<8x512xf32>
    %342 = arith.truncf %324 : vector<8x64xf32> to vector<8x64xbf16>
    %cst_131 = arith.constant dense<0.000000e+00> : vector<8x512xf32>
    %343 = tpu.matmul %342, %18, %cst_131 {dimension_numbers = #tpu.dot_dimension_numbers<[1], [0], [0], [1], [0, 0, 1, 1], [], []>} : vector<8x64xbf16>, vector<64x512xbf16>, vector<8x512xf32> -> vector<8x512xf32>
    %344 = arith.addf %341, %343 : vector<8x512xf32>
    %345 = vector.extract_strided_slice %344 {offsets = [0, 0], sizes = [8, 64], strides = [1, 1]} : vector<8x512xf32> to vector<8x64xf32>
    %346 = arith.negf %345 : vector<8x64xf32>
    %347 = math.exp %346 : vector<8x64xf32>
    %cst_132 = arith.constant 1.000000e+00 : f32
    %348 = vector.broadcast %cst_132 : f32 to vector<8x64xf32>
    %349 = arith.addf %348, %347 : vector<8x64xf32>
    %350 = arith.divf %348, %349 : vector<8x64xf32>
    %351 = vector.extract_strided_slice %344 {offsets = [0, 128], sizes = [8, 64], strides = [1, 1]} : vector<8x512xf32> to vector<8x64xf32>
    %352 = arith.negf %351 : vector<8x64xf32>
    %353 = math.exp %352 : vector<8x64xf32>
    %cst_133 = arith.constant 1.000000e+00 : f32
    %354 = vector.broadcast %cst_133 : f32 to vector<8x64xf32>
    %355 = arith.addf %354, %353 : vector<8x64xf32>
    %356 = arith.divf %354, %355 : vector<8x64xf32>
    %357 = vector.extract_strided_slice %344 {offsets = [0, 256], sizes = [8, 64], strides = [1, 1]} : vector<8x512xf32> to vector<8x64xf32>
    %358 = arith.negf %357 : vector<8x64xf32>
    %359 = math.exp %358 : vector<8x64xf32>
    %cst_134 = arith.constant 1.000000e+00 : f32
    %360 = vector.broadcast %cst_134 : f32 to vector<8x64xf32>
    %361 = arith.addf %360, %359 : vector<8x64xf32>
    %362 = arith.divf %360, %361 : vector<8x64xf32>
    %363 = vector.extract_strided_slice %344 {offsets = [0, 384], sizes = [8, 64], strides = [1, 1]} : vector<8x512xf32> to vector<8x64xf32>
    %364 = math.tanh %363 : vector<8x64xf32>
    %365 = arith.mulf %356, %322 : vector<8x64xf32>
    %366 = arith.mulf %350, %364 : vector<8x64xf32>
    %367 = arith.addf %365, %366 : vector<8x64xf32>
    %368 = math.tanh %367 : vector<8x64xf32>
    %369 = arith.mulf %362, %368 : vector<8x64xf32>
    %370 = vector.extract_strided_slice %369 {offsets = [0, 0], sizes = [8, 32], strides = [1, 1]} : vector<8x64xf32> to vector<8x32xf32>
    %371 = arith.truncf %370 : vector<8x32xf32> to vector<8x32xbf16>
    %c7_135 = arith.constant 7 : index
    %c0_136 = arith.constant 0 : index
    %c0_137 = arith.constant 0 : index
    %372 = vector.load %arg6[%c7_135, %c0_136, %c0_137] : memref<8x8x32xbf16, #tpu.memory_space<vmem>>, vector<1x8x32xbf16>
    %373 = vector.shape_cast %372 : vector<1x8x32xbf16> to vector<8x32xbf16>
    %374 = vector.shape_cast %371 : vector<8x32xbf16> to vector<1x8x32xbf16>
    tpu.vector_store %arg6[%c7_135, %c0_136, %c0_137], %374 {strides = array<i32>} : memref<8x8x32xbf16, #tpu.memory_space<vmem>>, vector<1x8x32xbf16>,
    %375 = vector.extract_strided_slice %369 {offsets = [0, 32], sizes = [8, 32], strides = [1, 1]} : vector<8x64xf32> to vector<8x32xf32>
    %376 = arith.truncf %375 : vector<8x32xf32> to vector<8x32xbf16>
    %c0_138 = arith.constant 0 : index
    %c0_139 = arith.constant 0 : index
    %c0_140 = arith.constant 0 : index
    %377 = vector.load %arg7[%c0_138, %c0_139, %c0_140] : memref<8x8x32xbf16, #tpu.memory_space<vmem>>, vector<1x8x32xbf16>
    %378 = vector.shape_cast %377 : vector<1x8x32xbf16> to vector<8x32xbf16>
    %379 = vector.shape_cast %376 : vector<8x32xbf16> to vector<1x8x32xbf16>
    tpu.vector_store %arg7[%c0_138, %c0_139, %c0_140], %379 {strides = array<i32>} : memref<8x8x32xbf16, #tpu.memory_space<vmem>>, vector<1x8x32xbf16>,
    return
  }
}

module attributes {stable_mosaic.version = 11 : i64} {
  func.func @_bilstm_last_fc_kernel(%arg0: memref<8x8x32xbf16, #tpu.memory_space<vmem>>, %arg1: memref<8x8x32xbf16, #tpu.memory_space<vmem>>, %arg2: memref<32x512xbf16, #tpu.memory_space<vmem>>, %arg3: memref<32x512xbf16, #tpu.memory_space<vmem>>, %arg4: memref<32x512xbf16, #tpu.memory_space<vmem>>, %arg5: memref<32x512xbf16, #tpu.memory_space<vmem>>, %arg6: memref<32x512xbf16, #tpu.memory_space<vmem>>, %arg7: memref<32x512xbf16, #tpu.memory_space<vmem>>, %arg8: memref<1x512xf32, #tpu.memory_space<vmem>>, %arg9: memref<1x512xf32, #tpu.memory_space<vmem>>, %arg10: memref<32x128xf32, #tpu.memory_space<vmem>>, %arg11: memref<32x128xf32, #tpu.memory_space<vmem>>, %arg12: memref<1x128xf32, #tpu.memory_space<vmem>>, %arg13: memref<8x128xf32, #tpu.memory_space<vmem>>, %arg14: memref<8x8x512xbf16, #tpu.memory_space<vmem>>) attributes {dimension_semantics = [], scalar_prefetch = 0 : i64, scratch_operands = 1 : i64, tpu.core_type = #tpu.core_type<tc>} {
    %c0 = arith.constant 0 : index
    %c0_0 = arith.constant 0 : index
    %0 = vector.load %arg8[%c0, %c0_0] : memref<1x512xf32, #tpu.memory_space<vmem>>, vector<1x512xf32>
    %c0_1 = arith.constant 0 : index
    %c0_2 = arith.constant 0 : index
    %c0_3 = arith.constant 0 : index
    %1 = vector.load %arg0[%c0_1, %c0_2, %c0_3] : memref<8x8x32xbf16, #tpu.memory_space<vmem>>, vector<8x8x32xbf16>
    %2 = vector.shape_cast %1 : vector<8x8x32xbf16> to vector<64x32xbf16>
    %c0_4 = arith.constant 0 : index
    %c0_5 = arith.constant 0 : index
    %3 = vector.load %arg2[%c0_4, %c0_5] : memref<32x512xbf16, #tpu.memory_space<vmem>>, vector<32x512xbf16>
    %cst = arith.constant dense<0.000000e+00> : vector<64x512xf32>
    %4 = tpu.matmul %2, %3, %cst {dimension_numbers = #tpu.dot_dimension_numbers<[1], [0], [0], [1], [0, 0, 1, 1], [], []>} : vector<64x32xbf16>, vector<32x512xbf16>, vector<64x512xf32> -> vector<64x512xf32>
    %5 = vector.broadcast %0 : vector<1x512xf32> to vector<64x512xf32>
    %6 = arith.addf %5, %4 : vector<64x512xf32>
    %c0_6 = arith.constant 0 : index
    %c0_7 = arith.constant 0 : index
    %c0_8 = arith.constant 0 : index
    %7 = vector.load %arg1[%c0_6, %c0_7, %c0_8] : memref<8x8x32xbf16, #tpu.memory_space<vmem>>, vector<8x8x32xbf16>
    %8 = vector.shape_cast %7 : vector<8x8x32xbf16> to vector<64x32xbf16>
    %c0_9 = arith.constant 0 : index
    %c0_10 = arith.constant 0 : index
    %9 = vector.load %arg3[%c0_9, %c0_10] : memref<32x512xbf16, #tpu.memory_space<vmem>>, vector<32x512xbf16>
    %cst_11 = arith.constant dense<0.000000e+00> : vector<64x512xf32>
    %10 = tpu.matmul %8, %9, %cst_11 {dimension_numbers = #tpu.dot_dimension_numbers<[1], [0], [0], [1], [0, 0, 1, 1], [], []>} : vector<64x32xbf16>, vector<32x512xbf16>, vector<64x512xf32> -> vector<64x512xf32>
    %11 = arith.addf %6, %10 : vector<64x512xf32>
    %12 = vector.shape_cast %11 : vector<64x512xf32> to vector<8x8x512xf32>
    %13 = arith.truncf %12 : vector<8x8x512xf32> to vector<8x8x512xbf16>
    %c0_12 = arith.constant 0 : index
    %c0_13 = arith.constant 0 : index
    %c0_14 = arith.constant 0 : index
    %14 = vector.load %arg14[%c0_12, %c0_13, %c0_14] : memref<8x8x512xbf16, #tpu.memory_space<vmem>>, vector<8x8x512xbf16>
    tpu.vector_store %arg14[%c0_12, %c0_13, %c0_14], %13 {strides = array<i32>} : memref<8x8x512xbf16, #tpu.memory_space<vmem>>, vector<8x8x512xbf16>,
    %c0_15 = arith.constant 0 : index
    %c0_16 = arith.constant 0 : index
    %15 = vector.load %arg6[%c0_15, %c0_16] : memref<32x512xbf16, #tpu.memory_space<vmem>>, vector<32x512xbf16>
    %cst_17 = arith.constant 0.000000e+00 : f32
    %16 = vector.broadcast %cst_17 : f32 to vector<8x32xf32>
    %c0_18 = arith.constant 0 : index
    %c0_19 = arith.constant 0 : index
    %c0_20 = arith.constant 0 : index
    %17 = vector.load %arg14[%c0_18, %c0_19, %c0_20] : memref<8x8x512xbf16, #tpu.memory_space<vmem>>, vector<1x8x512xbf16>
    %18 = vector.shape_cast %17 : vector<1x8x512xbf16> to vector<8x512xbf16>
    %19 = arith.truncf %16 : vector<8x32xf32> to vector<8x32xbf16>
    %cst_21 = arith.constant dense<0.000000e+00> : vector<8x512xf32>
    %20 = tpu.matmul %19, %15, %cst_21 {dimension_numbers = #tpu.dot_dimension_numbers<[1], [0], [0], [1], [0, 0, 1, 1], [], []>} : vector<8x32xbf16>, vector<32x512xbf16>, vector<8x512xf32> -> vector<8x512xf32>
    %21 = arith.extf %18 : vector<8x512xbf16> to vector<8x512xf32>
    %22 = arith.addf %21, %20 : vector<8x512xf32>
    %23 = vector.extract_strided_slice %22 {offsets = [0, 0], sizes = [8, 32], strides = [1, 1]} : vector<8x512xf32> to vector<8x32xf32>
    %24 = arith.negf %23 : vector<8x32xf32>
    %25 = math.exp %24 : vector<8x32xf32>
    %cst_22 = arith.constant 1.000000e+00 : f32
    %26 = vector.broadcast %cst_22 : f32 to vector<8x32xf32>
    %27 = arith.addf %26, %25 : vector<8x32xf32>
    %28 = arith.divf %26, %27 : vector<8x32xf32>
    %29 = vector.extract_strided_slice %22 {offsets = [0, 128], sizes = [8, 32], strides = [1, 1]} : vector<8x512xf32> to vector<8x32xf32>
    %30 = arith.negf %29 : vector<8x32xf32>
    %31 = math.exp %30 : vector<8x32xf32>
    %cst_23 = arith.constant 1.000000e+00 : f32
    %32 = vector.broadcast %cst_23 : f32 to vector<8x32xf32>
    %33 = arith.addf %32, %31 : vector<8x32xf32>
    %34 = arith.divf %32, %33 : vector<8x32xf32>
    %35 = vector.extract_strided_slice %22 {offsets = [0, 256], sizes = [8, 32], strides = [1, 1]} : vector<8x512xf32> to vector<8x32xf32>
    %36 = arith.negf %35 : vector<8x32xf32>
    %37 = math.exp %36 : vector<8x32xf32>
    %cst_24 = arith.constant 1.000000e+00 : f32
    %38 = vector.broadcast %cst_24 : f32 to vector<8x32xf32>
    %39 = arith.addf %38, %37 : vector<8x32xf32>
    %40 = arith.divf %38, %39 : vector<8x32xf32>
    %41 = vector.extract_strided_slice %22 {offsets = [0, 384], sizes = [8, 32], strides = [1, 1]} : vector<8x512xf32> to vector<8x32xf32>
    %42 = math.tanh %41 : vector<8x32xf32>
    %43 = arith.mulf %34, %16 : vector<8x32xf32>
    %44 = arith.mulf %28, %42 : vector<8x32xf32>
    %45 = arith.addf %43, %44 : vector<8x32xf32>
    %46 = math.tanh %45 : vector<8x32xf32>
    %47 = arith.mulf %40, %46 : vector<8x32xf32>
    %c1 = arith.constant 1 : index
    %c0_25 = arith.constant 0 : index
    %c0_26 = arith.constant 0 : index
    %48 = vector.load %arg14[%c1, %c0_25, %c0_26] : memref<8x8x512xbf16, #tpu.memory_space<vmem>>, vector<1x8x512xbf16>
    %49 = vector.shape_cast %48 : vector<1x8x512xbf16> to vector<8x512xbf16>
    %50 = arith.truncf %47 : vector<8x32xf32> to vector<8x32xbf16>
    %cst_27 = arith.constant dense<0.000000e+00> : vector<8x512xf32>
    %51 = tpu.matmul %50, %15, %cst_27 {dimension_numbers = #tpu.dot_dimension_numbers<[1], [0], [0], [1], [0, 0, 1, 1], [], []>} : vector<8x32xbf16>, vector<32x512xbf16>, vector<8x512xf32> -> vector<8x512xf32>
    %52 = arith.extf %49 : vector<8x512xbf16> to vector<8x512xf32>
    %53 = arith.addf %52, %51 : vector<8x512xf32>
    %54 = vector.extract_strided_slice %53 {offsets = [0, 0], sizes = [8, 32], strides = [1, 1]} : vector<8x512xf32> to vector<8x32xf32>
    %55 = arith.negf %54 : vector<8x32xf32>
    %56 = math.exp %55 : vector<8x32xf32>
    %cst_28 = arith.constant 1.000000e+00 : f32
    %57 = vector.broadcast %cst_28 : f32 to vector<8x32xf32>
    %58 = arith.addf %57, %56 : vector<8x32xf32>
    %59 = arith.divf %57, %58 : vector<8x32xf32>
    %60 = vector.extract_strided_slice %53 {offsets = [0, 128], sizes = [8, 32], strides = [1, 1]} : vector<8x512xf32> to vector<8x32xf32>
    %61 = arith.negf %60 : vector<8x32xf32>
    %62 = math.exp %61 : vector<8x32xf32>
    %cst_29 = arith.constant 1.000000e+00 : f32
    %63 = vector.broadcast %cst_29 : f32 to vector<8x32xf32>
    %64 = arith.addf %63, %62 : vector<8x32xf32>
    %65 = arith.divf %63, %64 : vector<8x32xf32>
    %66 = vector.extract_strided_slice %53 {offsets = [0, 256], sizes = [8, 32], strides = [1, 1]} : vector<8x512xf32> to vector<8x32xf32>
    %67 = arith.negf %66 : vector<8x32xf32>
    %68 = math.exp %67 : vector<8x32xf32>
    %cst_30 = arith.constant 1.000000e+00 : f32
    %69 = vector.broadcast %cst_30 : f32 to vector<8x32xf32>
    %70 = arith.addf %69, %68 : vector<8x32xf32>
    %71 = arith.divf %69, %70 : vector<8x32xf32>
    %72 = vector.extract_strided_slice %53 {offsets = [0, 384], sizes = [8, 32], strides = [1, 1]} : vector<8x512xf32> to vector<8x32xf32>
    %73 = math.tanh %72 : vector<8x32xf32>
    %74 = arith.mulf %65, %45 : vector<8x32xf32>
    %75 = arith.mulf %59, %73 : vector<8x32xf32>
    %76 = arith.addf %74, %75 : vector<8x32xf32>
    %77 = math.tanh %76 : vector<8x32xf32>
    %78 = arith.mulf %71, %77 : vector<8x32xf32>
    %c2 = arith.constant 2 : index
    %c0_31 = arith.constant 0 : index
    %c0_32 = arith.constant 0 : index
    %79 = vector.load %arg14[%c2, %c0_31, %c0_32] : memref<8x8x512xbf16, #tpu.memory_space<vmem>>, vector<1x8x512xbf16>
    %80 = vector.shape_cast %79 : vector<1x8x512xbf16> to vector<8x512xbf16>
    %81 = arith.truncf %78 : vector<8x32xf32> to vector<8x32xbf16>
    %cst_33 = arith.constant dense<0.000000e+00> : vector<8x512xf32>
    %82 = tpu.matmul %81, %15, %cst_33 {dimension_numbers = #tpu.dot_dimension_numbers<[1], [0], [0], [1], [0, 0, 1, 1], [], []>} : vector<8x32xbf16>, vector<32x512xbf16>, vector<8x512xf32> -> vector<8x512xf32>
    %83 = arith.extf %80 : vector<8x512xbf16> to vector<8x512xf32>
    %84 = arith.addf %83, %82 : vector<8x512xf32>
    %85 = vector.extract_strided_slice %84 {offsets = [0, 0], sizes = [8, 32], strides = [1, 1]} : vector<8x512xf32> to vector<8x32xf32>
    %86 = arith.negf %85 : vector<8x32xf32>
    %87 = math.exp %86 : vector<8x32xf32>
    %cst_34 = arith.constant 1.000000e+00 : f32
    %88 = vector.broadcast %cst_34 : f32 to vector<8x32xf32>
    %89 = arith.addf %88, %87 : vector<8x32xf32>
    %90 = arith.divf %88, %89 : vector<8x32xf32>
    %91 = vector.extract_strided_slice %84 {offsets = [0, 128], sizes = [8, 32], strides = [1, 1]} : vector<8x512xf32> to vector<8x32xf32>
    %92 = arith.negf %91 : vector<8x32xf32>
    %93 = math.exp %92 : vector<8x32xf32>
    %cst_35 = arith.constant 1.000000e+00 : f32
    %94 = vector.broadcast %cst_35 : f32 to vector<8x32xf32>
    %95 = arith.addf %94, %93 : vector<8x32xf32>
    %96 = arith.divf %94, %95 : vector<8x32xf32>
    %97 = vector.extract_strided_slice %84 {offsets = [0, 256], sizes = [8, 32], strides = [1, 1]} : vector<8x512xf32> to vector<8x32xf32>
    %98 = arith.negf %97 : vector<8x32xf32>
    %99 = math.exp %98 : vector<8x32xf32>
    %cst_36 = arith.constant 1.000000e+00 : f32
    %100 = vector.broadcast %cst_36 : f32 to vector<8x32xf32>
    %101 = arith.addf %100, %99 : vector<8x32xf32>
    %102 = arith.divf %100, %101 : vector<8x32xf32>
    %103 = vector.extract_strided_slice %84 {offsets = [0, 384], sizes = [8, 32], strides = [1, 1]} : vector<8x512xf32> to vector<8x32xf32>
    %104 = math.tanh %103 : vector<8x32xf32>
    %105 = arith.mulf %96, %76 : vector<8x32xf32>
    %106 = arith.mulf %90, %104 : vector<8x32xf32>
    %107 = arith.addf %105, %106 : vector<8x32xf32>
    %108 = math.tanh %107 : vector<8x32xf32>
    %109 = arith.mulf %102, %108 : vector<8x32xf32>
    %c3 = arith.constant 3 : index
    %c0_37 = arith.constant 0 : index
    %c0_38 = arith.constant 0 : index
    %110 = vector.load %arg14[%c3, %c0_37, %c0_38] : memref<8x8x512xbf16, #tpu.memory_space<vmem>>, vector<1x8x512xbf16>
    %111 = vector.shape_cast %110 : vector<1x8x512xbf16> to vector<8x512xbf16>
    %112 = arith.truncf %109 : vector<8x32xf32> to vector<8x32xbf16>
    %cst_39 = arith.constant dense<0.000000e+00> : vector<8x512xf32>
    %113 = tpu.matmul %112, %15, %cst_39 {dimension_numbers = #tpu.dot_dimension_numbers<[1], [0], [0], [1], [0, 0, 1, 1], [], []>} : vector<8x32xbf16>, vector<32x512xbf16>, vector<8x512xf32> -> vector<8x512xf32>
    %114 = arith.extf %111 : vector<8x512xbf16> to vector<8x512xf32>
    %115 = arith.addf %114, %113 : vector<8x512xf32>
    %116 = vector.extract_strided_slice %115 {offsets = [0, 0], sizes = [8, 32], strides = [1, 1]} : vector<8x512xf32> to vector<8x32xf32>
    %117 = arith.negf %116 : vector<8x32xf32>
    %118 = math.exp %117 : vector<8x32xf32>
    %cst_40 = arith.constant 1.000000e+00 : f32
    %119 = vector.broadcast %cst_40 : f32 to vector<8x32xf32>
    %120 = arith.addf %119, %118 : vector<8x32xf32>
    %121 = arith.divf %119, %120 : vector<8x32xf32>
    %122 = vector.extract_strided_slice %115 {offsets = [0, 128], sizes = [8, 32], strides = [1, 1]} : vector<8x512xf32> to vector<8x32xf32>
    %123 = arith.negf %122 : vector<8x32xf32>
    %124 = math.exp %123 : vector<8x32xf32>
    %cst_41 = arith.constant 1.000000e+00 : f32
    %125 = vector.broadcast %cst_41 : f32 to vector<8x32xf32>
    %126 = arith.addf %125, %124 : vector<8x32xf32>
    %127 = arith.divf %125, %126 : vector<8x32xf32>
    %128 = vector.extract_strided_slice %115 {offsets = [0, 256], sizes = [8, 32], strides = [1, 1]} : vector<8x512xf32> to vector<8x32xf32>
    %129 = arith.negf %128 : vector<8x32xf32>
    %130 = math.exp %129 : vector<8x32xf32>
    %cst_42 = arith.constant 1.000000e+00 : f32
    %131 = vector.broadcast %cst_42 : f32 to vector<8x32xf32>
    %132 = arith.addf %131, %130 : vector<8x32xf32>
    %133 = arith.divf %131, %132 : vector<8x32xf32>
    %134 = vector.extract_strided_slice %115 {offsets = [0, 384], sizes = [8, 32], strides = [1, 1]} : vector<8x512xf32> to vector<8x32xf32>
    %135 = math.tanh %134 : vector<8x32xf32>
    %136 = arith.mulf %127, %107 : vector<8x32xf32>
    %137 = arith.mulf %121, %135 : vector<8x32xf32>
    %138 = arith.addf %136, %137 : vector<8x32xf32>
    %139 = math.tanh %138 : vector<8x32xf32>
    %140 = arith.mulf %133, %139 : vector<8x32xf32>
    %c4 = arith.constant 4 : index
    %c0_43 = arith.constant 0 : index
    %c0_44 = arith.constant 0 : index
    %141 = vector.load %arg14[%c4, %c0_43, %c0_44] : memref<8x8x512xbf16, #tpu.memory_space<vmem>>, vector<1x8x512xbf16>
    %142 = vector.shape_cast %141 : vector<1x8x512xbf16> to vector<8x512xbf16>
    %143 = arith.truncf %140 : vector<8x32xf32> to vector<8x32xbf16>
    %cst_45 = arith.constant dense<0.000000e+00> : vector<8x512xf32>
    %144 = tpu.matmul %143, %15, %cst_45 {dimension_numbers = #tpu.dot_dimension_numbers<[1], [0], [0], [1], [0, 0, 1, 1], [], []>} : vector<8x32xbf16>, vector<32x512xbf16>, vector<8x512xf32> -> vector<8x512xf32>
    %145 = arith.extf %142 : vector<8x512xbf16> to vector<8x512xf32>
    %146 = arith.addf %145, %144 : vector<8x512xf32>
    %147 = vector.extract_strided_slice %146 {offsets = [0, 0], sizes = [8, 32], strides = [1, 1]} : vector<8x512xf32> to vector<8x32xf32>
    %148 = arith.negf %147 : vector<8x32xf32>
    %149 = math.exp %148 : vector<8x32xf32>
    %cst_46 = arith.constant 1.000000e+00 : f32
    %150 = vector.broadcast %cst_46 : f32 to vector<8x32xf32>
    %151 = arith.addf %150, %149 : vector<8x32xf32>
    %152 = arith.divf %150, %151 : vector<8x32xf32>
    %153 = vector.extract_strided_slice %146 {offsets = [0, 128], sizes = [8, 32], strides = [1, 1]} : vector<8x512xf32> to vector<8x32xf32>
    %154 = arith.negf %153 : vector<8x32xf32>
    %155 = math.exp %154 : vector<8x32xf32>
    %cst_47 = arith.constant 1.000000e+00 : f32
    %156 = vector.broadcast %cst_47 : f32 to vector<8x32xf32>
    %157 = arith.addf %156, %155 : vector<8x32xf32>
    %158 = arith.divf %156, %157 : vector<8x32xf32>
    %159 = vector.extract_strided_slice %146 {offsets = [0, 256], sizes = [8, 32], strides = [1, 1]} : vector<8x512xf32> to vector<8x32xf32>
    %160 = arith.negf %159 : vector<8x32xf32>
    %161 = math.exp %160 : vector<8x32xf32>
    %cst_48 = arith.constant 1.000000e+00 : f32
    %162 = vector.broadcast %cst_48 : f32 to vector<8x32xf32>
    %163 = arith.addf %162, %161 : vector<8x32xf32>
    %164 = arith.divf %162, %163 : vector<8x32xf32>
    %165 = vector.extract_strided_slice %146 {offsets = [0, 384], sizes = [8, 32], strides = [1, 1]} : vector<8x512xf32> to vector<8x32xf32>
    %166 = math.tanh %165 : vector<8x32xf32>
    %167 = arith.mulf %158, %138 : vector<8x32xf32>
    %168 = arith.mulf %152, %166 : vector<8x32xf32>
    %169 = arith.addf %167, %168 : vector<8x32xf32>
    %170 = math.tanh %169 : vector<8x32xf32>
    %171 = arith.mulf %164, %170 : vector<8x32xf32>
    %c5 = arith.constant 5 : index
    %c0_49 = arith.constant 0 : index
    %c0_50 = arith.constant 0 : index
    %172 = vector.load %arg14[%c5, %c0_49, %c0_50] : memref<8x8x512xbf16, #tpu.memory_space<vmem>>, vector<1x8x512xbf16>
    %173 = vector.shape_cast %172 : vector<1x8x512xbf16> to vector<8x512xbf16>
    %174 = arith.truncf %171 : vector<8x32xf32> to vector<8x32xbf16>
    %cst_51 = arith.constant dense<0.000000e+00> : vector<8x512xf32>
    %175 = tpu.matmul %174, %15, %cst_51 {dimension_numbers = #tpu.dot_dimension_numbers<[1], [0], [0], [1], [0, 0, 1, 1], [], []>} : vector<8x32xbf16>, vector<32x512xbf16>, vector<8x512xf32> -> vector<8x512xf32>
    %176 = arith.extf %173 : vector<8x512xbf16> to vector<8x512xf32>
    %177 = arith.addf %176, %175 : vector<8x512xf32>
    %178 = vector.extract_strided_slice %177 {offsets = [0, 0], sizes = [8, 32], strides = [1, 1]} : vector<8x512xf32> to vector<8x32xf32>
    %179 = arith.negf %178 : vector<8x32xf32>
    %180 = math.exp %179 : vector<8x32xf32>
    %cst_52 = arith.constant 1.000000e+00 : f32
    %181 = vector.broadcast %cst_52 : f32 to vector<8x32xf32>
    %182 = arith.addf %181, %180 : vector<8x32xf32>
    %183 = arith.divf %181, %182 : vector<8x32xf32>
    %184 = vector.extract_strided_slice %177 {offsets = [0, 128], sizes = [8, 32], strides = [1, 1]} : vector<8x512xf32> to vector<8x32xf32>
    %185 = arith.negf %184 : vector<8x32xf32>
    %186 = math.exp %185 : vector<8x32xf32>
    %cst_53 = arith.constant 1.000000e+00 : f32
    %187 = vector.broadcast %cst_53 : f32 to vector<8x32xf32>
    %188 = arith.addf %187, %186 : vector<8x32xf32>
    %189 = arith.divf %187, %188 : vector<8x32xf32>
    %190 = vector.extract_strided_slice %177 {offsets = [0, 256], sizes = [8, 32], strides = [1, 1]} : vector<8x512xf32> to vector<8x32xf32>
    %191 = arith.negf %190 : vector<8x32xf32>
    %192 = math.exp %191 : vector<8x32xf32>
    %cst_54 = arith.constant 1.000000e+00 : f32
    %193 = vector.broadcast %cst_54 : f32 to vector<8x32xf32>
    %194 = arith.addf %193, %192 : vector<8x32xf32>
    %195 = arith.divf %193, %194 : vector<8x32xf32>
    %196 = vector.extract_strided_slice %177 {offsets = [0, 384], sizes = [8, 32], strides = [1, 1]} : vector<8x512xf32> to vector<8x32xf32>
    %197 = math.tanh %196 : vector<8x32xf32>
    %198 = arith.mulf %189, %169 : vector<8x32xf32>
    %199 = arith.mulf %183, %197 : vector<8x32xf32>
    %200 = arith.addf %198, %199 : vector<8x32xf32>
    %201 = math.tanh %200 : vector<8x32xf32>
    %202 = arith.mulf %195, %201 : vector<8x32xf32>
    %c6 = arith.constant 6 : index
    %c0_55 = arith.constant 0 : index
    %c0_56 = arith.constant 0 : index
    %203 = vector.load %arg14[%c6, %c0_55, %c0_56] : memref<8x8x512xbf16, #tpu.memory_space<vmem>>, vector<1x8x512xbf16>
    %204 = vector.shape_cast %203 : vector<1x8x512xbf16> to vector<8x512xbf16>
    %205 = arith.truncf %202 : vector<8x32xf32> to vector<8x32xbf16>
    %cst_57 = arith.constant dense<0.000000e+00> : vector<8x512xf32>
    %206 = tpu.matmul %205, %15, %cst_57 {dimension_numbers = #tpu.dot_dimension_numbers<[1], [0], [0], [1], [0, 0, 1, 1], [], []>} : vector<8x32xbf16>, vector<32x512xbf16>, vector<8x512xf32> -> vector<8x512xf32>
    %207 = arith.extf %204 : vector<8x512xbf16> to vector<8x512xf32>
    %208 = arith.addf %207, %206 : vector<8x512xf32>
    %209 = vector.extract_strided_slice %208 {offsets = [0, 0], sizes = [8, 32], strides = [1, 1]} : vector<8x512xf32> to vector<8x32xf32>
    %210 = arith.negf %209 : vector<8x32xf32>
    %211 = math.exp %210 : vector<8x32xf32>
    %cst_58 = arith.constant 1.000000e+00 : f32
    %212 = vector.broadcast %cst_58 : f32 to vector<8x32xf32>
    %213 = arith.addf %212, %211 : vector<8x32xf32>
    %214 = arith.divf %212, %213 : vector<8x32xf32>
    %215 = vector.extract_strided_slice %208 {offsets = [0, 128], sizes = [8, 32], strides = [1, 1]} : vector<8x512xf32> to vector<8x32xf32>
    %216 = arith.negf %215 : vector<8x32xf32>
    %217 = math.exp %216 : vector<8x32xf32>
    %cst_59 = arith.constant 1.000000e+00 : f32
    %218 = vector.broadcast %cst_59 : f32 to vector<8x32xf32>
    %219 = arith.addf %218, %217 : vector<8x32xf32>
    %220 = arith.divf %218, %219 : vector<8x32xf32>
    %221 = vector.extract_strided_slice %208 {offsets = [0, 256], sizes = [8, 32], strides = [1, 1]} : vector<8x512xf32> to vector<8x32xf32>
    %222 = arith.negf %221 : vector<8x32xf32>
    %223 = math.exp %222 : vector<8x32xf32>
    %cst_60 = arith.constant 1.000000e+00 : f32
    %224 = vector.broadcast %cst_60 : f32 to vector<8x32xf32>
    %225 = arith.addf %224, %223 : vector<8x32xf32>
    %226 = arith.divf %224, %225 : vector<8x32xf32>
    %227 = vector.extract_strided_slice %208 {offsets = [0, 384], sizes = [8, 32], strides = [1, 1]} : vector<8x512xf32> to vector<8x32xf32>
    %228 = math.tanh %227 : vector<8x32xf32>
    %229 = arith.mulf %220, %200 : vector<8x32xf32>
    %230 = arith.mulf %214, %228 : vector<8x32xf32>
    %231 = arith.addf %229, %230 : vector<8x32xf32>
    %232 = math.tanh %231 : vector<8x32xf32>
    %233 = arith.mulf %226, %232 : vector<8x32xf32>
    %c7 = arith.constant 7 : index
    %c0_61 = arith.constant 0 : index
    %c0_62 = arith.constant 0 : index
    %234 = vector.load %arg14[%c7, %c0_61, %c0_62] : memref<8x8x512xbf16, #tpu.memory_space<vmem>>, vector<1x8x512xbf16>
    %235 = vector.shape_cast %234 : vector<1x8x512xbf16> to vector<8x512xbf16>
    %236 = arith.truncf %233 : vector<8x32xf32> to vector<8x32xbf16>
    %cst_63 = arith.constant dense<0.000000e+00> : vector<8x512xf32>
    %237 = tpu.matmul %236, %15, %cst_63 {dimension_numbers = #tpu.dot_dimension_numbers<[1], [0], [0], [1], [0, 0, 1, 1], [], []>} : vector<8x32xbf16>, vector<32x512xbf16>, vector<8x512xf32> -> vector<8x512xf32>
    %238 = arith.extf %235 : vector<8x512xbf16> to vector<8x512xf32>
    %239 = arith.addf %238, %237 : vector<8x512xf32>
    %240 = vector.extract_strided_slice %239 {offsets = [0, 0], sizes = [8, 32], strides = [1, 1]} : vector<8x512xf32> to vector<8x32xf32>
    %241 = arith.negf %240 : vector<8x32xf32>
    %242 = math.exp %241 : vector<8x32xf32>
    %cst_64 = arith.constant 1.000000e+00 : f32
    %243 = vector.broadcast %cst_64 : f32 to vector<8x32xf32>
    %244 = arith.addf %243, %242 : vector<8x32xf32>
    %245 = arith.divf %243, %244 : vector<8x32xf32>
    %246 = vector.extract_strided_slice %239 {offsets = [0, 128], sizes = [8, 32], strides = [1, 1]} : vector<8x512xf32> to vector<8x32xf32>
    %247 = arith.negf %246 : vector<8x32xf32>
    %248 = math.exp %247 : vector<8x32xf32>
    %cst_65 = arith.constant 1.000000e+00 : f32
    %249 = vector.broadcast %cst_65 : f32 to vector<8x32xf32>
    %250 = arith.addf %249, %248 : vector<8x32xf32>
    %251 = arith.divf %249, %250 : vector<8x32xf32>
    %252 = vector.extract_strided_slice %239 {offsets = [0, 256], sizes = [8, 32], strides = [1, 1]} : vector<8x512xf32> to vector<8x32xf32>
    %253 = arith.negf %252 : vector<8x32xf32>
    %254 = math.exp %253 : vector<8x32xf32>
    %cst_66 = arith.constant 1.000000e+00 : f32
    %255 = vector.broadcast %cst_66 : f32 to vector<8x32xf32>
    %256 = arith.addf %255, %254 : vector<8x32xf32>
    %257 = arith.divf %255, %256 : vector<8x32xf32>
    %258 = vector.extract_strided_slice %239 {offsets = [0, 384], sizes = [8, 32], strides = [1, 1]} : vector<8x512xf32> to vector<8x32xf32>
    %259 = math.tanh %258 : vector<8x32xf32>
    %260 = arith.mulf %251, %231 : vector<8x32xf32>
    %261 = arith.mulf %245, %259 : vector<8x32xf32>
    %262 = arith.addf %260, %261 : vector<8x32xf32>
    %263 = math.tanh %262 : vector<8x32xf32>
    %264 = arith.mulf %257, %263 : vector<8x32xf32>
    %c0_67 = arith.constant 0 : index
    %c0_68 = arith.constant 0 : index
    %265 = vector.load %arg9[%c0_67, %c0_68] : memref<1x512xf32, #tpu.memory_space<vmem>>, vector<1x512xf32>
    %c7_69 = arith.constant 7 : index
    %c0_70 = arith.constant 0 : index
    %c0_71 = arith.constant 0 : index
    %266 = vector.load %arg0[%c7_69, %c0_70, %c0_71] : memref<8x8x32xbf16, #tpu.memory_space<vmem>>, vector<1x8x32xbf16>
    %267 = vector.shape_cast %266 : vector<1x8x32xbf16> to vector<8x32xbf16>
    %c0_72 = arith.constant 0 : index
    %c0_73 = arith.constant 0 : index
    %268 = vector.load %arg4[%c0_72, %c0_73] : memref<32x512xbf16, #tpu.memory_space<vmem>>, vector<32x512xbf16>
    %cst_74 = arith.constant dense<0.000000e+00> : vector<8x512xf32>
    %269 = tpu.matmul %267, %268, %cst_74 {dimension_numbers = #tpu.dot_dimension_numbers<[1], [0], [0], [1], [0, 0, 1, 1], [], []>} : vector<8x32xbf16>, vector<32x512xbf16>, vector<8x512xf32> -> vector<8x512xf32>
    %270 = vector.broadcast %265 : vector<1x512xf32> to vector<8x512xf32>
    %271 = arith.addf %270, %269 : vector<8x512xf32>
    %c7_75 = arith.constant 7 : index
    %c0_76 = arith.constant 0 : index
    %c0_77 = arith.constant 0 : index
    %272 = vector.load %arg1[%c7_75, %c0_76, %c0_77] : memref<8x8x32xbf16, #tpu.memory_space<vmem>>, vector<1x8x32xbf16>
    %273 = vector.shape_cast %272 : vector<1x8x32xbf16> to vector<8x32xbf16>
    %c0_78 = arith.constant 0 : index
    %c0_79 = arith.constant 0 : index
    %274 = vector.load %arg5[%c0_78, %c0_79] : memref<32x512xbf16, #tpu.memory_space<vmem>>, vector<32x512xbf16>
    %cst_80 = arith.constant dense<0.000000e+00> : vector<8x512xf32>
    %275 = tpu.matmul %273, %274, %cst_80 {dimension_numbers = #tpu.dot_dimension_numbers<[1], [0], [0], [1], [0, 0, 1, 1], [], []>} : vector<8x32xbf16>, vector<32x512xbf16>, vector<8x512xf32> -> vector<8x512xf32>
    %276 = arith.addf %271, %275 : vector<8x512xf32>
    %c0_81 = arith.constant 0 : index
    %c0_82 = arith.constant 0 : index
    %277 = vector.load %arg7[%c0_81, %c0_82] : memref<32x512xbf16, #tpu.memory_space<vmem>>, vector<32x512xbf16>
    %278 = arith.truncf %16 : vector<8x32xf32> to vector<8x32xbf16>
    %cst_83 = arith.constant dense<0.000000e+00> : vector<8x512xf32>
    %279 = tpu.matmul %278, %277, %cst_83 {dimension_numbers = #tpu.dot_dimension_numbers<[1], [0], [0], [1], [0, 0, 1, 1], [], []>} : vector<8x32xbf16>, vector<32x512xbf16>, vector<8x512xf32> -> vector<8x512xf32>
    %280 = arith.addf %276, %279 : vector<8x512xf32>
    %281 = vector.extract_strided_slice %280 {offsets = [0, 0], sizes = [8, 32], strides = [1, 1]} : vector<8x512xf32> to vector<8x32xf32>
    %282 = arith.negf %281 : vector<8x32xf32>
    %283 = math.exp %282 : vector<8x32xf32>
    %cst_84 = arith.constant 1.000000e+00 : f32
    %284 = vector.broadcast %cst_84 : f32 to vector<8x32xf32>
    %285 = arith.addf %284, %283 : vector<8x32xf32>
    %286 = arith.divf %284, %285 : vector<8x32xf32>
    %287 = vector.extract_strided_slice %280 {offsets = [0, 128], sizes = [8, 32], strides = [1, 1]} : vector<8x512xf32> to vector<8x32xf32>
    %288 = arith.negf %287 : vector<8x32xf32>
    %289 = math.exp %288 : vector<8x32xf32>
    %cst_85 = arith.constant 1.000000e+00 : f32
    %290 = vector.broadcast %cst_85 : f32 to vector<8x32xf32>
    %291 = arith.addf %290, %289 : vector<8x32xf32>
    %292 = arith.divf %290, %291 : vector<8x32xf32>
    %293 = vector.extract_strided_slice %280 {offsets = [0, 256], sizes = [8, 32], strides = [1, 1]} : vector<8x512xf32> to vector<8x32xf32>
    %294 = arith.negf %293 : vector<8x32xf32>
    %295 = math.exp %294 : vector<8x32xf32>
    %cst_86 = arith.constant 1.000000e+00 : f32
    %296 = vector.broadcast %cst_86 : f32 to vector<8x32xf32>
    %297 = arith.addf %296, %295 : vector<8x32xf32>
    %298 = arith.divf %296, %297 : vector<8x32xf32>
    %299 = vector.extract_strided_slice %280 {offsets = [0, 384], sizes = [8, 32], strides = [1, 1]} : vector<8x512xf32> to vector<8x32xf32>
    %300 = math.tanh %299 : vector<8x32xf32>
    %301 = arith.mulf %292, %16 : vector<8x32xf32>
    %302 = arith.mulf %286, %300 : vector<8x32xf32>
    %303 = arith.addf %301, %302 : vector<8x32xf32>
    %304 = math.tanh %303 : vector<8x32xf32>
    %305 = arith.mulf %298, %304 : vector<8x32xf32>
    %c0_87 = arith.constant 0 : index
    %c0_88 = arith.constant 0 : index
    %306 = vector.load %arg10[%c0_87, %c0_88] : memref<32x128xf32, #tpu.memory_space<vmem>>, vector<32x128xf32>
    %cst_89 = arith.constant dense<0.000000e+00> : vector<8x128xf32>
    %307 = tpu.matmul %264, %306, %cst_89 {dimension_numbers = #tpu.dot_dimension_numbers<[1], [0], [0], [1], [0, 0, 1, 1], [], []>} : vector<8x32xf32>, vector<32x128xf32>, vector<8x128xf32> -> vector<8x128xf32>
    %c0_90 = arith.constant 0 : index
    %c0_91 = arith.constant 0 : index
    %308 = vector.load %arg11[%c0_90, %c0_91] : memref<32x128xf32, #tpu.memory_space<vmem>>, vector<32x128xf32>
    %cst_92 = arith.constant dense<0.000000e+00> : vector<8x128xf32>
    %309 = tpu.matmul %305, %308, %cst_92 {dimension_numbers = #tpu.dot_dimension_numbers<[1], [0], [0], [1], [0, 0, 1, 1], [], []>} : vector<8x32xf32>, vector<32x128xf32>, vector<8x128xf32> -> vector<8x128xf32>
    %310 = arith.addf %307, %309 : vector<8x128xf32>
    %c0_93 = arith.constant 0 : index
    %c0_94 = arith.constant 0 : index
    %311 = vector.load %arg12[%c0_93, %c0_94] : memref<1x128xf32, #tpu.memory_space<vmem>>, vector<1x128xf32>
    %312 = vector.broadcast %311 : vector<1x128xf32> to vector<8x128xf32>
    %313 = arith.addf %310, %312 : vector<8x128xf32>
    %c0_95 = arith.constant 0 : index
    %c0_96 = arith.constant 0 : index
    %314 = vector.load %arg13[%c0_95, %c0_96] : memref<8x128xf32, #tpu.memory_space<vmem>>, vector<8x128xf32>
    tpu.vector_store %arg13[%c0_95, %c0_96], %313 {strides = array<i32>} : memref<8x128xf32, #tpu.memory_space<vmem>>, vector<8x128xf32>,
    return
  }
}

</mosaic_0001>

<llo_original>
// kernel: bilstm_forward.2
$region0: #{bilstm_forward.2}
  #allocation0 [shape = 'u32[]', space=smem, size = 0x4, offset = 0x4, fixed_abs, tag = 'smem constant byte address 0x4 - core index']
  #allocation1 [shape = 'u32[144,128]{1,0:T(1,128)}', space=vmem, size = 0x12000, scoped, tag = 'internal scratch']
  #allocation2 [shape = 'bf16[8,8,512]{2,1,0:T(8,128)(2,1)}', space=vmem, size = 0x10000, scoped, tag = 'scratch operand']
  #allocation3 [shape = 'bf16[8,8,512]{2,1,0:T(8,128)(2,1)}', space=vmem, size = 0x10000, scoped, tag = 'scratch operand']
  %s0 = inlined_call_operand.hbm [shape: bf16[8,8,16], index: 0, kind: input, shape index: {}]
  %s1 = inlined_call_operand.hbm [shape: bf16[16,512], index: 1, kind: input, shape index: {}]
  %s2 = inlined_call_operand.hbm [shape: bf16[16,512], index: 2, kind: input, shape index: {}]
  %s3 = inlined_call_operand.hbm [shape: bf16[64,512], index: 3, kind: input, shape index: {}]
  %s4 = inlined_call_operand.hbm [shape: f32[1,512], index: 4, kind: input, shape index: {}]
  %s5 = inlined_call_operand.hbm [shape: f32[1,512], index: 5, kind: input, shape index: {}]
  %s6 = inlined_call_operand.hbm [shape: bf16[8,8,32], index: 6, kind: output, shape index: {0}]
  %s7 = inlined_call_operand.hbm [shape: bf16[8,8,32], index: 7, kind: output, shape index: {1}]
  %8 = xla_tuple %s6, %s7
  %s9 = sld [smem:[#allocation0]]
  $region66: #{bilstm_forward.2} parent=0
    _
  %s11 = ssub.s32 1, %s9
  %s12 = scalar_select 0, %s11, %s9
  $region1: #{bilstm_forward.2} parent=0
    #allocation4 [shape = 'u8[16384]{0}', space=vmem, size = 0x4000, scoped, tag = 'input window, operand 0, single buffered']
    #allocation5 [shape = 's32[1]{0}', space=sflag, size = 0x4, scoped, tag = 'scoped memory for bilstm_forward.2']
    #allocation6 [shape = 's32[1]{0}', space=sflag, size = 0x4, scoped, tag = 'scoped memory for bilstm_forward.2']
    #allocation7 [shape = 'u8[16384]{0}', space=vmem, size = 0x4000, scoped, tag = 'input window, operand 1, single buffered']
    #allocation8 [shape = 's32[1]{0}', space=sflag, size = 0x4, scoped, tag = 'scoped memory for bilstm_forward.2']
    #allocation9 [shape = 'u8[16384]{0}', space=vmem, size = 0x4000, scoped, tag = 'input window, operand 2, single buffered']
    #allocation10 [shape = 'u8[65536]{0}', space=vmem, size = 0x10000, scoped, tag = 'input window, operand 3, single buffered']
    #allocation11 [shape = 's32[1]{0}', space=sflag, size = 0x4, scoped, tag = 'scoped memory for bilstm_forward.2']
    #allocation12 [shape = 'u8[2048]{0}', space=vmem, size = 0x800, scoped, tag = 'input window, operand 4, single buffered']
    #allocation13 [shape = 'u8[2048]{0}', space=vmem, size = 0x800, scoped, tag = 'input window, operand 5, single buffered']
    #allocation14 [shape = 's32[1]{0}', space=sflag, size = 0x4, scoped, tag = 'scoped memory for bilstm_forward.2']
    #allocation15 [shape = 'u8[16384]{0}', space=vmem, size = 0x4000, scoped, tag = 'output window, operand 0, single buffered']
    #allocation16 [shape = 'u8[16384]{0}', space=vmem, size = 0x4000, scoped, tag = 'output window, operand 1, single buffered']
    #allocation17 [shape = 's32[1]{0}', space=sflag, size = 0x4, scoped, tag = 'scoped memory for bilstm_forward.2']
    %13 = vsyncpa [#allocation5], 0
    %14 = vsyncpa [#allocation8], 0
    %15 = vsyncpa [#allocation11], 0
    %16 = vsyncpa [#allocation14], 0
    %17 = vsyncpa [#allocation6], 0
    %18 = vsyncpa [#allocation17], 0
    // Predicated region
    $region2: #{bilstm_forward.2} parent=1 // pred_check
      _
    $region3: #{bilstm_forward.2} parent=1 // pred_check_branch
      %20 = sbr.rel (0) target = $region5
    $region4: #{bilstm_forward.2} parent=1 // pred_region
      %s22 = ssub.s32 512, 512
      %23 = vsyncadd [#allocation5], %s22
      %s24 = sshll.u32 [#allocation4], 4
      %s25 = int_to_ptr.vmem [resolvable:$true] %s24
      %30 = dma.hbm_to_vmem [thread:$0]  %s0, 512, %s25, [#allocation5], 64, 64, 4
    $region5: #{bilstm_forward.2} parent=1 // pred_fallthru
      _
    // Predicated region
    $region6: #{bilstm_forward.2} parent=1 // pred_check
      _
    $region7: #{bilstm_forward.2} parent=1 // pred_check_branch
      %32 = sbr.rel (0) target = $region9
    $region8: #{bilstm_forward.2} parent=1 // pred_region
      %s34 = ssub.s32 512, 512
      %35 = vsyncadd [#allocation8], %s34
      %s36 = sshll.u32 [#allocation7], 4
      %s37 = int_to_ptr.vmem [resolvable:$true] %s36
      %42 = dma.hbm_to_vmem [thread:$0]  %s1, 512, %s37, [#allocation8], 256, 256, 16
    $region9: #{bilstm_forward.2} parent=1 // pred_fallthru
      _
    // Predicated region
    $region10: #{bilstm_forward.2} parent=1 // pred_check
      _
    $region11: #{bilstm_forward.2} parent=1 // pred_check_branch
      %44 = sbr.rel (0) target = $region13
    $region12: #{bilstm_forward.2} parent=1 // pred_region
      %s46 = ssub.s32 512, 512
      %47 = vsyncadd [#allocation8], %s46
      %s48 = sshll.u32 [#allocation9], 4
      %s49 = int_to_ptr.vmem [resolvable:$true] %s48
      %54 = dma.hbm_to_vmem [thread:$0]  %s2, 512, %s49, [#allocation8], 256, 256, 16
    $region13: #{bilstm_forward.2} parent=1 // pred_fallthru
      _
    // Predicated region
    $region14: #{bilstm_forward.2} parent=1 // pred_check
      _
    $region15: #{bilstm_forward.2} parent=1 // pred_check_branch
      %56 = sbr.rel (0) target = $region17
    $region16: #{bilstm_forward.2} parent=1 // pred_region
      %s58 = ssub.s32 2048, 2048
      %59 = vsyncadd [#allocation11], %s58
      %s60 = sshll.u32 [#allocation10], 4
      %s61 = int_to_ptr.vmem [resolvable:$true] %s60
      %66 = dma.hbm_to_vmem [thread:$0]  %s3, 2048, %s61, [#allocation11], 256, 256, 16
    $region17: #{bilstm_forward.2} parent=1 // pred_fallthru
      _
    // Predicated region
    $region18: #{bilstm_forward.2} parent=1 // pred_check
      _
    $region19: #{bilstm_forward.2} parent=1 // pred_check_branch
      %68 = sbr.rel (0) target = $region21
    $region20: #{bilstm_forward.2} parent=1 // pred_region
      %s70 = ssub.s32 64, 64
      %71 = vsyncadd [#allocation11], %s70
      %s73 = sshll.u32 [#allocation12], 4
      %s74 = int_to_ptr.vmem [resolvable:$true] %s73
      %76 = dma.hbm_to_vmem [thread:$0]  %s4, 64, %s74, [#allocation11]
    $region21: #{bilstm_forward.2} parent=1 // pred_fallthru
      _
    // Predicated region
    $region22: #{bilstm_forward.2} parent=1 // pred_check
      _
    $region23: #{bilstm_forward.2} parent=1 // pred_check_branch
      %78 = sbr.rel (0) target = $region25
    $region24: #{bilstm_forward.2} parent=1 // pred_region
      %s80 = ssub.s32 64, 64
      %81 = vsyncadd [#allocation14], %s80
      %s83 = sshll.u32 [#allocation13], 4
      %s84 = int_to_ptr.vmem [resolvable:$true] %s83
      %86 = dma.hbm_to_vmem [thread:$0]  %s5, 64, %s84, [#allocation14]
    $region25: #{bilstm_forward.2} parent=1 // pred_fallthru
      _
    // Predicated region
    $region26: #{bilstm_forward.2} parent=1 // pred_check
      _
    $region27: #{bilstm_forward.2} parent=1 // pred_check_branch
      %88 = sbr.rel (0) target = $region29
    $region28: #{bilstm_forward.2} parent=1 // pred_region
      %89 = dma.done [#allocation5], 512
    $region29: #{bilstm_forward.2} parent=1 // pred_fallthru
      _
    // Predicated region
    $region30: #{bilstm_forward.2} parent=1 // pred_check
      _
    $region31: #{bilstm_forward.2} parent=1 // pred_check_branch
      %91 = sbr.rel (0) target = $region33
    $region32: #{bilstm_forward.2} parent=1 // pred_region
      %92 = dma.done [#allocation8], 512
    $region33: #{bilstm_forward.2} parent=1 // pred_fallthru
      _
    // Predicated region
    $region34: #{bilstm_forward.2} parent=1 // pred_check
      _
    $region35: #{bilstm_forward.2} parent=1 // pred_check_branch
      %94 = sbr.rel (0) target = $region37
    $region36: #{bilstm_forward.2} parent=1 // pred_region
      %95 = dma.done [#allocation8], 512
    $region37: #{bilstm_forward.2} parent=1 // pred_fallthru
      _
    // Predicated region
    $region38: #{bilstm_forward.2} parent=1 // pred_check
      _
    $region39: #{bilstm_forward.2} parent=1 // pred_check_branch
      %97 = sbr.rel (0) target = $region41
    $region40: #{bilstm_forward.2} parent=1 // pred_region
      %98 = dma.done [#allocation11], 2048
    $region41: #{bilstm_forward.2} parent=1 // pred_fallthru
      _
    // Predicated region
    $region42: #{bilstm_forward.2} parent=1 // pred_check
      _
    $region43: #{bilstm_forward.2} parent=1 // pred_check_branch
      %100 = sbr.rel (0) target = $region45
    $region44: #{bilstm_forward.2} parent=1 // pred_region
      %101 = dma.done [#allocation11], 64
    $region45: #{bilstm_forward.2} parent=1 // pred_fallthru
      _
    // Predicated region
    $region46: #{bilstm_forward.2} parent=1 // pred_check
      _
    $region47: #{bilstm_forward.2} parent=1 // pred_check_branch
      %103 = sbr.rel (0) target = $region49
    $region48: #{bilstm_forward.2} parent=1 // pred_region
      %104 = dma.done [#allocation14], 64
    $region49: #{bilstm_forward.2} parent=1 // pred_fallthru
      _
    %v106 = vld [vmem:[#allocation12] sm:$0xf]
    %v107 = vld [vmem:[#allocation13] sm:$0xf]
    %v108 = vld [vmem:[#allocation4] sm:$0xf]
    %v109 = vld [vmem:[#allocation4 + $0x4] sm:$0xf]
    %v110 = vld [vmem:[#allocation4 + $0x8] sm:$0xf]
    %v111 = vld [vmem:[#allocation4 + $0xc] sm:$0xf]
    %v112 = vld [vmem:[#allocation4 + $0x10] sm:$0xf]
    %v113 = vld [vmem:[#allocation4 + $0x14] sm:$0xf]
    %v114 = vld [vmem:[#allocation4 + $0x18] sm:$0xf]
    %v115 = vld [vmem:[#allocation4 + $0x1c] sm:$0xf]
    %v116 = vld [vmem:[#allocation7] sm:$0xff]
    %v117 = vld [vmem:[#allocation7 + $0x8] sm:$0xff]
    %v118 = vld [vmem:[#allocation7 + $0x10] sm:$0xff]
    %v119 = vld [vmem:[#allocation7 + $0x18] sm:$0xff]
    %v128 = vunpack.c.l.b16 %v108
    %v129 = vunpack.c.l.b16 %v109
    %v130 = vunpack.c.l.b16 %v110
    %v131 = vunpack.c.l.b16 %v111
    %v132 = vunpack.c.l.b16 %v112
    %v133 = vunpack.c.l.b16 %v113
    %v134 = vunpack.c.l.b16 %v114
    %v135 = vunpack.c.l.b16 %v115
    %v136 = vpack.c.b16 %v129, %v128
    %v137 = vpack.c.b16 %v131, %v130
    %v138 = vpack.c.b16 %v133, %v132
    %v139 = vpack.c.b16 %v135, %v134
    %v144 = vunpack.c.l.b16 %v116
    %v145 = vunpack.c.h.b16 %v116
    %v146 = vunpack.c.l.b16 %v117
    %v147 = vunpack.c.h.b16 %v117
    %v148 = vunpack.c.l.b16 %v118
    %v149 = vunpack.c.h.b16 %v118
    %v150 = vunpack.c.l.b16 %v119
    %v151 = vunpack.c.h.b16 %v119
    %v152 = vpack.c.b16 %v148, %v144
    %v153 = vpack.c.b16 %v149, %v145
    %v154 = vpack.c.b16 %v150, %v146
    %v155 = vpack.c.b16 %v151, %v147
    %vm160 = vcmask 130048
    %v162 = vsel %vm160, %v136, 0
    %v165 = vsel %vm160, %v137, 0
    %v168 = vsel %vm160, %v138, 0
    %v171 = vsel %vm160, %v139, 0
    %173 = vmatprep.subr.bf16.mxu0 %v153
    %174 = vmatpush1.bf16.msra.mxu0 %v152
    %175 = vmatprep.subr.bf16.mxu0 0
    %176 = vmatpush1.bf16.msra.mxu0 0
    %177 = vmatprep.subr.bf16.mxu0 0
    %178 = vmatpush1.bf16.msra.mxu0 0
    %179 = vmatprep.subr.bf16.mxu0 0
    %180 = vmatpush1.bf16.msra.mxu0 0
    %181 = vmatprep.subr.bf16.mxu0 0
    %182 = vmatpush1.bf16.msra.mxu0 0
    %183 = vmatprep.subr.bf16.mxu0 0
    %184 = vmatpush1.bf16.msra.mxu0 0
    %185 = vmatprep.subr.bf16.mxu0 0
    %186 = vmatpush1.bf16.msra.mxu0 0
    %187 = vmatprep.subr.bf16.mxu0 0
    %188 = vmatpush1.bf16.msra.mxu0 0
    %189 = vmatprep.subr.bf16.mxu0 0
    %190 = vmatpush1.bf16.msra.mxu0 0
    %191 = vmatprep.subr.bf16.mxu0 0
    %192 = vmatpush1.bf16.msra.mxu0 0
    %193 = vmatprep.subr.bf16.mxu0 0
    %194 = vmatpush1.bf16.msra.mxu0 0
    %195 = vmatprep.subr.bf16.mxu0 0
    %196 = vmatpush1.bf16.msra.mxu0 0
    %197 = vmatprep.subr.bf16.mxu0 0
    %198 = vmatpush1.bf16.msra.mxu0 0
    %199 = vmatprep.subr.bf16.mxu0 0
    %200 = vmatpush1.bf16.msra.mxu0 0
    %201 = vmatprep.subr.bf16.mxu0 0
    %202 = vmatpush1.bf16.msra.mxu0 0
    %203 = vmatprep.subr.bf16.mxu0 0
    %204 = vmatpush1.bf16.msra.mxu0 0
    %205 = vmatprep.mubr.bf16.mxu0 0
    %206 = vmatmul.mubr.bf16.gmra.mrb[0].mxu0 %v162
    %v207 = vpop.f32.mrb[0].mxu0
    %v208 = vadd.f32 0.0, %v207
    %v209 = vpop.f32.mrb[0].mxu0
    %v210 = vadd.f32 0.0, %v209
    %v211 = vpop.f32.mrb[0].mxu0
    %v212 = vadd.f32 0.0, %v211
    %v213 = vpop.f32.mrb[0].mxu0
    %v214 = vadd.f32 0.0, %v213
    %215 = vmatprep.mubr.bf16.mxu0 0
    %216 = vmatmul.mubr.bf16.gmra.mrb[0].mxu0 %v165
    %v217 = vpop.f32.mrb[0].mxu0
    %v218 = vadd.f32 0.0, %v217
    %v219 = vpop.f32.mrb[0].mxu0
    %v220 = vadd.f32 0.0, %v219
    %v221 = vpop.f32.mrb[0].mxu0
    %v222 = vadd.f32 0.0, %v221
    %v223 = vpop.f32.mrb[0].mxu0
    %v224 = vadd.f32 0.0, %v223
    %225 = vmatprep.mubr.bf16.mxu0 0
    %226 = vmatmul.mubr.bf16.gmra.mrb[0].mxu0 %v168
    %v227 = vpop.f32.mrb[0].mxu0
    %v228 = vadd.f32 0.0, %v227
    %v229 = vpop.f32.mrb[0].mxu0
    %v230 = vadd.f32 0.0, %v229
    %v231 = vpop.f32.mrb[0].mxu0
    %v232 = vadd.f32 0.0, %v231
    %v233 = vpop.f32.mrb[0].mxu0
    %v234 = vadd.f32 0.0, %v233
    %235 = vmatprep.mubr.bf16.mxu0 0
    %236 = vmatmul.mubr.bf16.gmra.mrb[0].mxu0 %v171
    %v237 = vpop.f32.mrb[0].mxu0
    %v238 = vadd.f32 0.0, %v237
    %v239 = vpop.f32.mrb[0].mxu0
    %v240 = vadd.f32 0.0, %v239
    %v241 = vpop.f32.mrb[0].mxu0
    %v242 = vadd.f32 0.0, %v241
    %v243 = vpop.f32.mrb[0].mxu0
    %v244 = vadd.f32 0.0, %v243
    %245 = vdwg.mxu0
    %246 = vmatprep.subr.bf16.mxu0 %v155
    %247 = vmatpush1.bf16.msra.mxu0 %v154
    %248 = vmatprep.subr.bf16.mxu0 0
    %249 = vmatpush1.bf16.msra.mxu0 0
    %250 = vmatprep.subr.bf16.mxu0 0
    %251 = vmatpush1.bf16.msra.mxu0 0
    %252 = vmatprep.subr.bf16.mxu0 0
    %253 = vmatpush1.bf16.msra.mxu0 0
    %254 = vmatprep.subr.bf16.mxu0 0
    %255 = vmatpush1.bf16.msra.mxu0 0
    %256 = vmatprep.subr.bf16.mxu0 0
    %257 = vmatpush1.bf16.msra.mxu0 0
    %258 = vmatprep.subr.bf16.mxu0 0
    %259 = vmatpush1.bf16.msra.mxu0 0
    %260 = vmatprep.subr.bf16.mxu0 0
    %261 = vmatpush1.bf16.msra.mxu0 0
    %262 = vmatprep.subr.bf16.mxu0 0
    %263 = vmatpush1.bf16.msra.mxu0 0
    %264 = vmatprep.subr.bf16.mxu0 0
    %265 = vmatpush1.bf16.msra.mxu0 0
    %266 = vmatprep.subr.bf16.mxu0 0
    %267 = vmatpush1.bf16.msra.mxu0 0
    %268 = vmatprep.subr.bf16.mxu0 0
    %269 = vmatpush1.bf16.msra.mxu0 0
    %270 = vmatprep.subr.bf16.mxu0 0
    %271 = vmatpush1.bf16.msra.mxu0 0
    %272 = vmatprep.subr.bf16.mxu0 0
    %273 = vmatpush1.bf16.msra.mxu0 0
    %274 = vmatprep.subr.bf16.mxu0 0
    %275 = vmatpush1.bf16.msra.mxu0 0
    %276 = vmatprep.subr.bf16.mxu0 0
    %277 = vmatpush1.bf16.msra.mxu0 0
    %278 = vmatprep.mubr.bf16.mxu0 0
    %279 = vmatmul.mubr.bf16.gmra.mrb[0].mxu0 %v162
    %v280 = vpop.f32.mrb[0].mxu0
    %v281 = vadd.f32 0.0, %v280
    %v282 = vpop.f32.mrb[0].mxu0
    %v283 = vadd.f32 0.0, %v282
    %v284 = vpop.f32.mrb[0].mxu0
    %v285 = vadd.f32 0.0, %v284
    %v286 = vpop.f32.mrb[0].mxu0
    %v287 = vadd.f32 0.0, %v286
    %288 = vmatprep.mubr.bf16.mxu0 0
    %289 = vmatmul.mubr.bf16.gmra.mrb[0].mxu0 %v165
    %v290 = vpop.f32.mrb[0].mxu0
    %v291 = vadd.f32 0.0, %v290
    %v292 = vpop.f32.mrb[0].mxu0
    %v293 = vadd.f32 0.0, %v292
    %v294 = vpop.f32.mrb[0].mxu0
    %v295 = vadd.f32 0.0, %v294
    %v296 = vpop.f32.mrb[0].mxu0
    %v297 = vadd.f32 0.0, %v296
    %298 = vmatprep.mubr.bf16.mxu0 0
    %299 = vmatmul.mubr.bf16.gmra.mrb[0].mxu0 %v168
    %v300 = vpop.f32.mrb[0].mxu0
    %v301 = vadd.f32 0.0, %v300
    %v302 = vpop.f32.mrb[0].mxu0
    %v303 = vadd.f32 0.0, %v302
    %v304 = vpop.f32.mrb[0].mxu0
    %v305 = vadd.f32 0.0, %v304
    %v306 = vpop.f32.mrb[0].mxu0
    %v307 = vadd.f32 0.0, %v306
    %308 = vmatprep.mubr.bf16.mxu0 0
    %309 = vmatmul.mubr.bf16.gmra.mrb[0].mxu0 %v171
    %v310 = vpop.f32.mrb[0].mxu0
    %v311 = vadd.f32 0.0, %v310
    %v312 = vpop.f32.mrb[0].mxu0
    %v313 = vadd.f32 0.0, %v312
    %v314 = vpop.f32.mrb[0].mxu0
    %v315 = vadd.f32 0.0, %v314
    %v316 = vpop.f32.mrb[0].mxu0
    %v317 = vadd.f32 0.0, %v316
    %318 = vdwg.mxu0
    %v320 = vlaneseq
    %v321 = vshrl.u32 %v320, 7
    %v322 = vsub.s32 0, %v321
    %v323 = vrot.slane %v106, %v322
    %v324 = vlaneseq
    %v325 = vshrl.u32 %v324, 7
    %v326 = vsub.s32 1, %v325
    %v327 = vrot.slane %v106, %v326
    %v328 = vlaneseq
    %v329 = vshrl.u32 %v328, 7
    %v330 = vsub.s32 2, %v329
    %v331 = vrot.slane %v106, %v330
    %v332 = vlaneseq
    %v333 = vshrl.u32 %v332, 7
    %v334 = vsub.s32 3, %v333
    %v335 = vrot.slane %v106, %v334
    %v340 = vadd.f32 %v323, %v208
    %v341 = vadd.f32 %v327, %v210
    %v342 = vadd.f32 %v331, %v281
    %v343 = vadd.f32 %v335, %v283
    %v344 = vadd.f32 %v323, %v212
    %v345 = vadd.f32 %v327, %v214
    %v346 = vadd.f32 %v331, %v285
    %v347 = vadd.f32 %v335, %v287
    %v348 = vadd.f32 %v323, %v218
    %v349 = vadd.f32 %v327, %v220
    %v350 = vadd.f32 %v331, %v291
    %v351 = vadd.f32 %v335, %v293
    %v352 = vadd.f32 %v323, %v222
    %v353 = vadd.f32 %v327, %v224
    %v354 = vadd.f32 %v331, %v295
    %v355 = vadd.f32 %v335, %v297
    %v356 = vadd.f32 %v323, %v228
    %v357 = vadd.f32 %v327, %v230
    %v358 = vadd.f32 %v331, %v301
    %v359 = vadd.f32 %v335, %v303
    %v360 = vadd.f32 %v323, %v232
    %v361 = vadd.f32 %v327, %v234
    %v362 = vadd.f32 %v331, %v305
    %v363 = vadd.f32 %v335, %v307
    %v364 = vadd.f32 %v323, %v238
    %v365 = vadd.f32 %v327, %v240
    %v366 = vadd.f32 %v331, %v311
    %v367 = vadd.f32 %v335, %v313
    %v368 = vadd.f32 %v323, %v242
    %v369 = vadd.f32 %v327, %v244
    %v370 = vadd.f32 %v331, %v315
    %v371 = vadd.f32 %v335, %v317
    %v372 = vld [vmem:[#allocation9] sm:$0xff]
    %v373 = vld [vmem:[#allocation9 + $0x8] sm:$0xff]
    %v374 = vld [vmem:[#allocation9 + $0x10] sm:$0xff]
    %v375 = vld [vmem:[#allocation9 + $0x18] sm:$0xff]
    %v380 = vunpack.c.l.b16 %v372
    %v381 = vunpack.c.h.b16 %v372
    %v382 = vunpack.c.l.b16 %v373
    %v383 = vunpack.c.h.b16 %v373
    %v384 = vunpack.c.l.b16 %v374
    %v385 = vunpack.c.h.b16 %v374
    %v386 = vunpack.c.l.b16 %v375
    %v387 = vunpack.c.h.b16 %v375
    %v388 = vpack.c.b16 %v384, %v380
    %v389 = vpack.c.b16 %v385, %v381
    %v390 = vpack.c.b16 %v386, %v382
    %v391 = vpack.c.b16 %v387, %v383
    %396 = vmatprep.subr.bf16.mxu0 %v389
    %397 = vmatpush1.bf16.msra.mxu0 %v388
    %398 = vmatprep.subr.bf16.mxu0 0
    %399 = vmatpush1.bf16.msra.mxu0 0
    %400 = vmatprep.subr.bf16.mxu0 0
    %401 = vmatpush1.bf16.msra.mxu0 0
    %402 = vmatprep.subr.bf16.mxu0 0
    %403 = vmatpush1.bf16.msra.mxu0 0
    %404 = vmatprep.subr.bf16.mxu0 0
    %405 = vmatpush1.bf16.msra.mxu0 0
    %406 = vmatprep.subr.bf16.mxu0 0
    %407 = vmatpush1.bf16.msra.mxu0 0
    %408 = vmatprep.subr.bf16.mxu0 0
    %409 = vmatpush1.bf16.msra.mxu0 0
    %410 = vmatprep.subr.bf16.mxu0 0
    %411 = vmatpush1.bf16.msra.mxu0 0
    %412 = vmatprep.subr.bf16.mxu0 0
    %413 = vmatpush1.bf16.msra.mxu0 0
    %414 = vmatprep.subr.bf16.mxu0 0
    %415 = vmatpush1.bf16.msra.mxu0 0
    %416 = vmatprep.subr.bf16.mxu0 0
    %417 = vmatpush1.bf16.msra.mxu0 0
    %418 = vmatprep.subr.bf16.mxu0 0
    %419 = vmatpush1.bf16.msra.mxu0 0
    %420 = vmatprep.subr.bf16.mxu0 0
    %421 = vmatpush1.bf16.msra.mxu0 0
    %422 = vmatprep.subr.bf16.mxu0 0
    %423 = vmatpush1.bf16.msra.mxu0 0
    %424 = vmatprep.subr.bf16.mxu0 0
    %425 = vmatpush1.bf16.msra.mxu0 0
    %426 = vmatprep.subr.bf16.mxu0 0
    %427 = vmatpush1.bf16.msra.mxu0 0
    %428 = vmatprep.mubr.bf16.mxu0 0
    %429 = vmatmul.mubr.bf16.gmra.mrb[0].mxu0 %v162
    %v430 = vpop.f32.mrb[0].mxu0
    %v431 = vadd.f32 0.0, %v430
    %v432 = vpop.f32.mrb[0].mxu0
    %v433 = vadd.f32 0.0, %v432
    %v434 = vpop.f32.mrb[0].mxu0
    %v435 = vadd.f32 0.0, %v434
    %v436 = vpop.f32.mrb[0].mxu0
    %v437 = vadd.f32 0.0, %v436
    %438 = vmatprep.mubr.bf16.mxu0 0
    %439 = vmatmul.mubr.bf16.gmra.mrb[0].mxu0 %v165
    %v440 = vpop.f32.mrb[0].mxu0
    %v441 = vadd.f32 0.0, %v440
    %v442 = vpop.f32.mrb[0].mxu0
    %v443 = vadd.f32 0.0, %v442
    %v444 = vpop.f32.mrb[0].mxu0
    %v445 = vadd.f32 0.0, %v444
    %v446 = vpop.f32.mrb[0].mxu0
    %v447 = vadd.f32 0.0, %v446
    %448 = vmatprep.mubr.bf16.mxu0 0
    %449 = vmatmul.mubr.bf16.gmra.mrb[0].mxu0 %v168
    %v450 = vpop.f32.mrb[0].mxu0
    %v451 = vadd.f32 0.0, %v450
    %v452 = vpop.f32.mrb[0].mxu0
    %v453 = vadd.f32 0.0, %v452
    %v454 = vpop.f32.mrb[0].mxu0
    %v455 = vadd.f32 0.0, %v454
    %v456 = vpop.f32.mrb[0].mxu0
    %v457 = vadd.f32 0.0, %v456
    %458 = vmatprep.mubr.bf16.mxu0 0
    %459 = vmatmul.mubr.bf16.gmra.mrb[0].mxu0 %v171
    %v460 = vpop.f32.mrb[0].mxu0
    %v461 = vadd.f32 0.0, %v460
    %v462 = vpop.f32.mrb[0].mxu0
    %v463 = vadd.f32 0.0, %v462
    %v464 = vpop.f32.mrb[0].mxu0
    %v465 = vadd.f32 0.0, %v464
    %v466 = vpop.f32.mrb[0].mxu0
    %v467 = vadd.f32 0.0, %v466
    %468 = vdwg.mxu0
    %469 = vmatprep.subr.bf16.mxu0 %v391
    %470 = vmatpush1.bf16.msra.mxu0 %v390
    %471 = vmatprep.subr.bf16.mxu0 0
    %472 = vmatpush1.bf16.msra.mxu0 0
    %473 = vmatprep.subr.bf16.mxu0 0
    %474 = vmatpush1.bf16.msra.mxu0 0
    %475 = vmatprep.subr.bf16.mxu0 0
    %476 = vmatpush1.bf16.msra.mxu0 0
    %477 = vmatprep.subr.bf16.mxu0 0
    %478 = vmatpush1.bf16.msra.mxu0 0
    %479 = vmatprep.subr.bf16.mxu0 0
    %480 = vmatpush1.bf16.msra.mxu0 0
    %481 = vmatprep.subr.bf16.mxu0 0
    %482 = vmatpush1.bf16.msra.mxu0 0
    %483 = vmatprep.subr.bf16.mxu0 0
    %484 = vmatpush1.bf16.msra.mxu0 0
    %485 = vmatprep.subr.bf16.mxu0 0
    %486 = vmatpush1.bf16.msra.mxu0 0
    %487 = vmatprep.subr.bf16.mxu0 0
    %488 = vmatpush1.bf16.msra.mxu0 0
    %489 = vmatprep.subr.bf16.mxu0 0
    %490 = vmatpush1.bf16.msra.mxu0 0
    %491 = vmatprep.subr.bf16.mxu0 0
    %492 = vmatpush1.bf16.msra.mxu0 0
    %493 = vmatprep.subr.bf16.mxu0 0
    %494 = vmatpush1.bf16.msra.mxu0 0
    %495 = vmatprep.subr.bf16.mxu0 0
    %496 = vmatpush1.bf16.msra.mxu0 0
    %497 = vmatprep.subr.bf16.mxu0 0
    %498 = vmatpush1.bf16.msra.mxu0 0
    %499 = vmatprep.subr.bf16.mxu0 0
    %500 = vmatpush1.bf16.msra.mxu0 0
    %501 = vmatprep.mubr.bf16.mxu0 0
    %502 = vmatmul.mubr.bf16.gmra.mrb[0].mxu0 %v162
    %v503 = vpop.f32.mrb[0].mxu0
    %v504 = vadd.f32 0.0, %v503
    %v505 = vpop.f32.mrb[0].mxu0
    %v506 = vadd.f32 0.0, %v505
    %v507 = vpop.f32.mrb[0].mxu0
    %v508 = vadd.f32 0.0, %v507
    %v509 = vpop.f32.mrb[0].mxu0
    %v510 = vadd.f32 0.0, %v509
    %511 = vmatprep.mubr.bf16.mxu0 0
    %512 = vmatmul.mubr.bf16.gmra.mrb[0].mxu0 %v165
    %v513 = vpop.f32.mrb[0].mxu0
    %v514 = vadd.f32 0.0, %v513
    %v515 = vpop.f32.mrb[0].mxu0
    %v516 = vadd.f32 0.0, %v515
    %v517 = vpop.f32.mrb[0].mxu0
    %v518 = vadd.f32 0.0, %v517
    %v519 = vpop.f32.mrb[0].mxu0
    %v520 = vadd.f32 0.0, %v519
    %521 = vmatprep.mubr.bf16.mxu0 0
    %522 = vmatmul.mubr.bf16.gmra.mrb[0].mxu0 %v168
    %v523 = vpop.f32.mrb[0].mxu0
    %v524 = vadd.f32 0.0, %v523
    %v525 = vpop.f32.mrb[0].mxu0
    %v526 = vadd.f32 0.0, %v525
    %v527 = vpop.f32.mrb[0].mxu0
    %v528 = vadd.f32 0.0, %v527
    %v529 = vpop.f32.mrb[0].mxu0
    %v530 = vadd.f32 0.0, %v529
    %531 = vmatprep.mubr.bf16.mxu0 0
    %532 = vmatmul.mubr.bf16.gmra.mrb[0].mxu0 %v171
    %v533 = vpop.f32.mrb[0].mxu0
    %v534 = vadd.f32 0.0, %v533
    %v535 = vpop.f32.mrb[0].mxu0
    %v536 = vadd.f32 0.0, %v535
    %v537 = vpop.f32.mrb[0].mxu0
    %v538 = vadd.f32 0.0, %v537
    %v539 = vpop.f32.mrb[0].mxu0
    %v540 = vadd.f32 0.0, %v539
    %541 = vdwg.mxu0
    %v543 = vlaneseq
    %v544 = vshrl.u32 %v543, 7
    %v545 = vsub.s32 0, %v544
    %v546 = vrot.slane %v107, %v545
    %v547 = vlaneseq
    %v548 = vshrl.u32 %v547, 7
    %v549 = vsub.s32 1, %v548
    %v550 = vrot.slane %v107, %v549
    %v551 = vlaneseq
    %v552 = vshrl.u32 %v551, 7
    %v553 = vsub.s32 2, %v552
    %v554 = vrot.slane %v107, %v553
    %v555 = vlaneseq
    %v556 = vshrl.u32 %v555, 7
    %v557 = vsub.s32 3, %v556
    %v558 = vrot.slane %v107, %v557
    %v563 = vadd.f32 %v546, %v431
    %v564 = vadd.f32 %v550, %v433
    %v565 = vadd.f32 %v554, %v504
    %v566 = vadd.f32 %v558, %v506
    %v567 = vadd.f32 %v546, %v435
    %v568 = vadd.f32 %v550, %v437
    %v569 = vadd.f32 %v554, %v508
    %v570 = vadd.f32 %v558, %v510
    %v571 = vadd.f32 %v546, %v441
    %v572 = vadd.f32 %v550, %v443
    %v573 = vadd.f32 %v554, %v514
    %v574 = vadd.f32 %v558, %v516
    %v575 = vadd.f32 %v546, %v445
    %v576 = vadd.f32 %v550, %v447
    %v577 = vadd.f32 %v554, %v518
    %v578 = vadd.f32 %v558, %v520
    %v579 = vadd.f32 %v546, %v451
    %v580 = vadd.f32 %v550, %v453
    %v581 = vadd.f32 %v554, %v524
    %v582 = vadd.f32 %v558, %v526
    %v583 = vadd.f32 %v546, %v455
    %v584 = vadd.f32 %v550, %v457
    %v585 = vadd.f32 %v554, %v528
    %v586 = vadd.f32 %v558, %v530
    %v587 = vadd.f32 %v546, %v461
    %v588 = vadd.f32 %v550, %v463
    %v589 = vadd.f32 %v554, %v534
    %v590 = vadd.f32 %v558, %v536
    %v591 = vadd.f32 %v546, %v465
    %v592 = vadd.f32 %v550, %v467
    %v593 = vadd.f32 %v554, %v538
    %v594 = vadd.f32 %v558, %v540
    %v595 = vpack.c.bf16 %v340, %v340
    %v596 = vpack.c.bf16 %v341, %v341
    %v597 = vpack.c.bf16 %v342, %v342
    %v598 = vpack.c.bf16 %v343, %v343
    %v599 = vpack.c.bf16 %v344, %v344
    %v600 = vpack.c.bf16 %v345, %v345
    %v601 = vpack.c.bf16 %v346, %v346
    %v602 = vpack.c.bf16 %v347, %v347
    %v603 = vpack.c.bf16 %v348, %v348
    %v604 = vpack.c.bf16 %v349, %v349
    %v605 = vpack.c.bf16 %v350, %v350
    %v606 = vpack.c.bf16 %v351, %v351
    %v607 = vpack.c.bf16 %v352, %v352
    %v608 = vpack.c.bf16 %v353, %v353
    %v609 = vpack.c.bf16 %v354, %v354
    %v610 = vpack.c.bf16 %v355, %v355
    %v611 = vpack.c.bf16 %v356, %v356
    %v612 = vpack.c.bf16 %v357, %v357
    %v613 = vpack.c.bf16 %v358, %v358
    %v614 = vpack.c.bf16 %v359, %v359
    %v615 = vpack.c.bf16 %v360, %v360
    %v616 = vpack.c.bf16 %v361, %v361
    %v617 = vpack.c.bf16 %v362, %v362
    %v618 = vpack.c.bf16 %v363, %v363
    %v619 = vpack.c.bf16 %v364, %v364
    %v620 = vpack.c.bf16 %v365, %v365
    %v621 = vpack.c.bf16 %v366, %v366
    %v622 = vpack.c.bf16 %v367, %v367
    %v623 = vpack.c.bf16 %v368, %v368
    %v624 = vpack.c.bf16 %v369, %v369
    %v625 = vpack.c.bf16 %v370, %v370
    %v626 = vpack.c.bf16 %v371, %v371
    %v659 = vunpack.c.l.b16 %v595
    %v660 = vunpack.c.l.b16 %v596
    %v661 = vunpack.c.l.b16 %v597
    %v662 = vunpack.c.l.b16 %v598
    %v663 = vunpack.c.l.b16 %v599
    %v664 = vunpack.c.l.b16 %v600
    %v665 = vunpack.c.l.b16 %v601
    %v666 = vunpack.c.l.b16 %v602
    %v667 = vunpack.c.l.b16 %v603
    %v668 = vunpack.c.l.b16 %v604
    %v669 = vunpack.c.l.b16 %v605
    %v670 = vunpack.c.l.b16 %v606
    %v671 = vunpack.c.l.b16 %v607
    %v672 = vunpack.c.l.b16 %v608
    %v673 = vunpack.c.l.b16 %v609
    %v674 = vunpack.c.l.b16 %v610
    %v675 = vunpack.c.l.b16 %v611
    %v676 = vunpack.c.l.b16 %v612
    %v677 = vunpack.c.l.b16 %v613
    %v678 = vunpack.c.l.b16 %v614
    %v679 = vunpack.c.l.b16 %v615
    %v680 = vunpack.c.l.b16 %v616
    %v681 = vunpack.c.l.b16 %v617
    %v682 = vunpack.c.l.b16 %v618
    %v683 = vunpack.c.l.b16 %v619
    %v684 = vunpack.c.l.b16 %v620
    %v685 = vunpack.c.l.b16 %v621
    %v686 = vunpack.c.l.b16 %v622
    %v687 = vunpack.c.l.b16 %v623
    %v688 = vunpack.c.l.b16 %v624
    %v689 = vunpack.c.l.b16 %v625
    %v690 = vunpack.c.l.b16 %v626
    %v691 = vpack.c.b16 %v660, %v659
    %v692 = vpack.c.b16 %v662, %v661
    %v693 = vpack.c.b16 %v664, %v663
    %v694 = vpack.c.b16 %v666, %v665
    %v695 = vpack.c.b16 %v668, %v667
    %v696 = vpack.c.b16 %v670, %v669
    %v697 = vpack.c.b16 %v672, %v671
    %v698 = vpack.c.b16 %v674, %v673
    %v699 = vpack.c.b16 %v676, %v675
    %v700 = vpack.c.b16 %v678, %v677
    %v701 = vpack.c.b16 %v680, %v679
    %v702 = vpack.c.b16 %v682, %v681
    %v703 = vpack.c.b16 %v684, %v683
    %v704 = vpack.c.b16 %v686, %v685
    %v705 = vpack.c.b16 %v688, %v687
    %v706 = vpack.c.b16 %v690, %v689
    %723 = vst [vmem:[#allocation2] sm:$0xff] %v691
    %724 = vst [vmem:[#allocation2 + $0x8] sm:$0xff] %v692
    %725 = vst [vmem:[#allocation2 + $0x10] sm:$0xff] %v693
    %726 = vst [vmem:[#allocation2 + $0x18] sm:$0xff] %v694
    %727 = vst [vmem:[#allocation2 + $0x20] sm:$0xff] %v695
    %728 = vst [vmem:[#allocation2 + $0x28] sm:$0xff] %v696
    %729 = vst [vmem:[#allocation2 + $0x30] sm:$0xff] %v697
    %730 = vst [vmem:[#allocation2 + $0x38] sm:$0xff] %v698
    %731 = vst [vmem:[#allocation2 + $0x40] sm:$0xff] %v699
    %732 = vst [vmem:[#allocation2 + $0x48] sm:$0xff] %v700
    %733 = vst [vmem:[#allocation2 + $0x50] sm:$0xff] %v701
    %734 = vst [vmem:[#allocation2 + $0x58] sm:$0xff] %v702
    %735 = vst [vmem:[#allocation2 + $0x60] sm:$0xff] %v703
    %736 = vst [vmem:[#allocation2 + $0x68] sm:$0xff] %v704
    %737 = vst [vmem:[#allocation2 + $0x70] sm:$0xff] %v705
    %738 = vst [vmem:[#allocation2 + $0x78] sm:$0xff] %v706
    %v739 = vpack.c.bf16 %v563, %v563
    %v740 = vpack.c.bf16 %v564, %v564
    %v741 = vpack.c.bf16 %v565, %v565
    %v742 = vpack.c.bf16 %v566, %v566
    %v743 = vpack.c.bf16 %v567, %v567
    %v744 = vpack.c.bf16 %v568, %v568
    %v745 = vpack.c.bf16 %v569, %v569
    %v746 = vpack.c.bf16 %v570, %v570
    %v747 = vpack.c.bf16 %v571, %v571
    %v748 = vpack.c.bf16 %v572, %v572
    %v749 = vpack.c.bf16 %v573, %v573
    %v750 = vpack.c.bf16 %v574, %v574
    %v751 = vpack.c.bf16 %v575, %v575
    %v752 = vpack.c.bf16 %v576, %v576
    %v753 = vpack.c.bf16 %v577, %v577
    %v754 = vpack.c.bf16 %v578, %v578
    %v755 = vpack.c.bf16 %v579, %v579
    %v756 = vpack.c.bf16 %v580, %v580
    %v757 = vpack.c.bf16 %v581, %v581
    %v758 = vpack.c.bf16 %v582, %v582
    %v759 = vpack.c.bf16 %v583, %v583
    %v760 = vpack.c.bf16 %v584, %v584
    %v761 = vpack.c.bf16 %v585, %v585
    %v762 = vpack.c.bf16 %v586, %v586
    %v763 = vpack.c.bf16 %v587, %v587
    %v764 = vpack.c.bf16 %v588, %v588
    %v765 = vpack.c.bf16 %v589, %v589
    %v766 = vpack.c.bf16 %v590, %v590
    %v767 = vpack.c.bf16 %v591, %v591
    %v768 = vpack.c.bf16 %v592, %v592
    %v769 = vpack.c.bf16 %v593, %v593
    %v770 = vpack.c.bf16 %v594, %v594
    %v803 = vunpack.c.l.b16 %v739
    %v804 = vunpack.c.l.b16 %v740
    %v805 = vunpack.c.l.b16 %v741
    %v806 = vunpack.c.l.b16 %v742
    %v807 = vunpack.c.l.b16 %v743
    %v808 = vunpack.c.l.b16 %v744
    %v809 = vunpack.c.l.b16 %v745
    %v810 = vunpack.c.l.b16 %v746
    %v811 = vunpack.c.l.b16 %v747
    %v812 = vunpack.c.l.b16 %v748
    %v813 = vunpack.c.l.b16 %v749
    %v814 = vunpack.c.l.b16 %v750
    %v815 = vunpack.c.l.b16 %v751
    %v816 = vunpack.c.l.b16 %v752
    %v817 = vunpack.c.l.b16 %v753
    %v818 = vunpack.c.l.b16 %v754
    %v819 = vunpack.c.l.b16 %v755
    %v820 = vunpack.c.l.b16 %v756
    %v821 = vunpack.c.l.b16 %v757
    %v822 = vunpack.c.l.b16 %v758
    %v823 = vunpack.c.l.b16 %v759
    %v824 = vunpack.c.l.b16 %v760
    %v825 = vunpack.c.l.b16 %v761
    %v826 = vunpack.c.l.b16 %v762
    %v827 = vunpack.c.l.b16 %v763
    %v828 = vunpack.c.l.b16 %v764
    %v829 = vunpack.c.l.b16 %v765
    %v830 = vunpack.c.l.b16 %v766
    %v831 = vunpack.c.l.b16 %v767
    %v832 = vunpack.c.l.b16 %v768
    %v833 = vunpack.c.l.b16 %v769
    %v834 = vunpack.c.l.b16 %v770
    %v835 = vpack.c.b16 %v804, %v803
    %v836 = vpack.c.b16 %v806, %v805
    %v837 = vpack.c.b16 %v808, %v807
    %v838 = vpack.c.b16 %v810, %v809
    %v839 = vpack.c.b16 %v812, %v811
    %v840 = vpack.c.b16 %v814, %v813
    %v841 = vpack.c.b16 %v816, %v815
    %v842 = vpack.c.b16 %v818, %v817
    %v843 = vpack.c.b16 %v820, %v819
    %v844 = vpack.c.b16 %v822, %v821
    %v845 = vpack.c.b16 %v824, %v823
    %v846 = vpack.c.b16 %v826, %v825
    %v847 = vpack.c.b16 %v828, %v827
    %v848 = vpack.c.b16 %v830, %v829
    %v849 = vpack.c.b16 %v832, %v831
    %v850 = vpack.c.b16 %v834, %v833
    %867 = vst [vmem:[#allocation3] sm:$0xff] %v835
    %868 = vst [vmem:[#allocation3 + $0x8] sm:$0xff] %v836
    %869 = vst [vmem:[#allocation3 + $0x10] sm:$0xff] %v837
    %870 = vst [vmem:[#allocation3 + $0x18] sm:$0xff] %v838
    %871 = vst [vmem:[#allocation3 + $0x20] sm:$0xff] %v839
    %872 = vst [vmem:[#allocation3 + $0x28] sm:$0xff] %v840
    %873 = vst [vmem:[#allocation3 + $0x30] sm:$0xff] %v841
    %874 = vst [vmem:[#allocation3 + $0x38] sm:$0xff] %v842
    %875 = vst [vmem:[#allocation3 + $0x40] sm:$0xff] %v843
    %876 = vst [vmem:[#allocation3 + $0x48] sm:$0xff] %v844
    %877 = vst [vmem:[#allocation3 + $0x50] sm:$0xff] %v845
    %878 = vst [vmem:[#allocation3 + $0x58] sm:$0xff] %v846
    %879 = vst [vmem:[#allocation3 + $0x60] sm:$0xff] %v847
    %880 = vst [vmem:[#allocation3 + $0x68] sm:$0xff] %v848
    %881 = vst [vmem:[#allocation3 + $0x70] sm:$0xff] %v849
    %882 = vst [vmem:[#allocation3 + $0x78] sm:$0xff] %v850
    %v883 = vld [vmem:[#allocation10] sm:$0xff]
    %v884 = vld [vmem:[#allocation10 + $0x8] sm:$0xff]
    %v885 = vld [vmem:[#allocation10 + $0x10] sm:$0xff]
    %v886 = vld [vmem:[#allocation10 + $0x18] sm:$0xff]
    %v887 = vld [vmem:[#allocation10 + $0x20] sm:$0xff]
    %v888 = vld [vmem:[#allocation10 + $0x28] sm:$0xff]
    %v889 = vld [vmem:[#allocation10 + $0x30] sm:$0xff]
    %v890 = vld [vmem:[#allocation10 + $0x38] sm:$0xff]
    %v891 = vld [vmem:[#allocation10 + $0x40] sm:$0xff]
    %v892 = vld [vmem:[#allocation10 + $0x48] sm:$0xff]
    %v893 = vld [vmem:[#allocation10 + $0x50] sm:$0xff]
    %v894 = vld [vmem:[#allocation10 + $0x58] sm:$0xff]
    %v895 = vld [vmem:[#allocation10 + $0x60] sm:$0xff]
    %v896 = vld [vmem:[#allocation10 + $0x68] sm:$0xff]
    %v897 = vld [vmem:[#allocation10 + $0x70] sm:$0xff]
    %v898 = vld [vmem:[#allocation10 + $0x78] sm:$0xff]
    %v899 = vld [vmem:[#allocation2] sm:$0xff]
    %v900 = vld [vmem:[#allocation2 + $0x8] sm:$0xff]
    %v901 = vunpack.c.l.bf16 %v899
    %v902 = vunpack.c.h.bf16 %v899
    %v903 = vunpack.c.l.bf16 %v900
    %v904 = vunpack.c.h.bf16 %v900
    %s905 = scalar_lea.vmem [#allocation3], 112
    %v906 = vld [vmem:[%s905] sm:$0xff]
    %v907 = vld [vmem:[%s905 + $0x8] sm:$0xff]
    %v908 = vunpack.c.l.bf16 %v906
    %v909 = vunpack.c.h.bf16 %v906
    %v910 = vunpack.c.l.bf16 %v907
    %v911 = vunpack.c.h.bf16 %v907
    %v912 = vadd.f32 %v901, %v908
    %v913 = vadd.f32 %v902, %v909
    %v914 = vadd.f32 %v903, %v910
    %v915 = vadd.f32 %v904, %v911
    %v932 = vunpack.c.l.b16 %v883
    %v933 = vunpack.c.h.b16 %v883
    %v934 = vunpack.c.l.b16 %v884
    %v935 = vunpack.c.h.b16 %v884
    %v936 = vunpack.c.l.b16 %v885
    %v937 = vunpack.c.h.b16 %v885
    %v938 = vunpack.c.l.b16 %v886
    %v939 = vunpack.c.h.b16 %v886
    %v940 = vunpack.c.l.b16 %v887
    %v941 = vunpack.c.h.b16 %v887
    %v942 = vunpack.c.l.b16 %v888
    %v943 = vunpack.c.h.b16 %v888
    %v944 = vunpack.c.l.b16 %v889
    %v945 = vunpack.c.h.b16 %v889
    %v946 = vunpack.c.l.b16 %v890
    %v947 = vunpack.c.h.b16 %v890
    %v948 = vunpack.c.l.b16 %v891
    %v949 = vunpack.c.h.b16 %v891
    %v950 = vunpack.c.l.b16 %v892
    %v951 = vunpack.c.h.b16 %v892
    %v952 = vunpack.c.l.b16 %v893
    %v953 = vunpack.c.h.b16 %v893
    %v954 = vunpack.c.l.b16 %v894
    %v955 = vunpack.c.h.b16 %v894
    %v956 = vunpack.c.l.b16 %v895
    %v957 = vunpack.c.h.b16 %v895
    %v958 = vunpack.c.l.b16 %v896
    %v959 = vunpack.c.h.b16 %v896
    %v960 = vunpack.c.l.b16 %v897
    %v961 = vunpack.c.h.b16 %v897
    %v962 = vunpack.c.l.b16 %v898
    %v963 = vunpack.c.h.b16 %v898
    %v964 = vpack.c.b16 %v936, %v932
    %v965 = vpack.c.b16 %v937, %v933
    %v966 = vpack.c.b16 %v938, %v934
    %v967 = vpack.c.b16 %v939, %v935
    %v968 = vpack.c.b16 %v944, %v940
    %v969 = vpack.c.b16 %v945, %v941
    %v970 = vpack.c.b16 %v946, %v942
    %v971 = vpack.c.b16 %v947, %v943
    %v972 = vpack.c.b16 %v952, %v948
    %v973 = vpack.c.b16 %v953, %v949
    %v974 = vpack.c.b16 %v954, %v950
    %v975 = vpack.c.b16 %v955, %v951
    %v976 = vpack.c.b16 %v960, %v956
    %v977 = vpack.c.b16 %v961, %v957
    %v978 = vpack.c.b16 %v962, %v958
    %v979 = vpack.c.b16 %v963, %v959
    %vm996 = vcmask 523264
    %v998 = vsel %vm996, 0, 0
    %1000 = vmatprep.subr.bf16.mxu0 %v965
    %1001 = vmatpush1.bf16.msra.mxu0 %v964
    %1002 = vmatprep.subr.bf16.mxu0 %v969
    %1003 = vmatpush1.bf16.msra.mxu0 %v968
    %1004 = vmatprep.subr.bf16.mxu0 %v973
    %1005 = vmatpush1.bf16.msra.mxu0 %v972
    %1006 = vmatprep.subr.bf16.mxu0 %v977
    %1007 = vmatpush1.bf16.msra.mxu0 %v976
    %1008 = vmatprep.subr.bf16.mxu0 0
    %1009 = vmatpush1.bf16.msra.mxu0 0
    %1010 = vmatprep.subr.bf16.mxu0 0
    %1011 = vmatpush1.bf16.msra.mxu0 0
    %1012 = vmatprep.subr.bf16.mxu0 0
    %1013 = vmatpush1.bf16.msra.mxu0 0
    %1014 = vmatprep.subr.bf16.mxu0 0
    %1015 = vmatpush1.bf16.msra.mxu0 0
    %1016 = vmatprep.subr.bf16.mxu0 0
    %1017 = vmatpush1.bf16.msra.mxu0 0
    %1018 = vmatprep.subr.bf16.mxu0 0
    %1019 = vmatpush1.bf16.msra.mxu0 0
    %1020 = vmatprep.subr.bf16.mxu0 0
    %1021 = vmatpush1.bf16.msra.mxu0 0
    %1022 = vmatprep.subr.bf16.mxu0 0
    %1023 = vmatpush1.bf16.msra.mxu0 0
    %1024 = vmatprep.subr.bf16.mxu0 0
    %1025 = vmatpush1.bf16.msra.mxu0 0
    %1026 = vmatprep.subr.bf16.mxu0 0
    %1027 = vmatpush1.bf16.msra.mxu0 0
    %1028 = vmatprep.subr.bf16.mxu0 0
    %1029 = vmatpush1.bf16.msra.mxu0 0
    %1030 = vmatprep.subr.bf16.mxu0 0
    %1031 = vmatpush1.bf16.msra.mxu0 0
    %1032 = vmatprep.mubr.bf16.mxu0 0
    %1033 = vmatmul.mubr.bf16.gmra.mrb[0].mxu0 %v998
    %v1034 = vpop.f32.mrb[0].mxu0
    %v1035 = vadd.f32 0.0, %v1034
    %v1036 = vpop.f32.mrb[0].mxu0
    %v1037 = vadd.f32 0.0, %v1036
    %v1038 = vpop.f32.mrb[0].mxu0
    %v1039 = vpop.f32.mrb[0].mxu0
    %1040 = vdwg.mxu0
    %1041 = vmatprep.subr.bf16.mxu0 %v967
    %1042 = vmatpush1.bf16.msra.mxu0 %v966
    %1043 = vmatprep.subr.bf16.mxu0 %v971
    %1044 = vmatpush1.bf16.msra.mxu0 %v970
    %1045 = vmatprep.subr.bf16.mxu0 %v975
    %1046 = vmatpush1.bf16.msra.mxu0 %v974
    %1047 = vmatprep.subr.bf16.mxu0 %v979
    %1048 = vmatpush1.bf16.msra.mxu0 %v978
    %1049 = vmatprep.subr.bf16.mxu0 0
    %1050 = vmatpush1.bf16.msra.mxu0 0
    %1051 = vmatprep.subr.bf16.mxu0 0
    %1052 = vmatpush1.bf16.msra.mxu0 0
    %1053 = vmatprep.subr.bf16.mxu0 0
    %1054 = vmatpush1.bf16.msra.mxu0 0
    %1055 = vmatprep.subr.bf16.mxu0 0
    %1056 = vmatpush1.bf16.msra.mxu0 0
    %1057 = vmatprep.subr.bf16.mxu0 0
    %1058 = vmatpush1.bf16.msra.mxu0 0
    %1059 = vmatprep.subr.bf16.mxu0 0
    %1060 = vmatpush1.bf16.msra.mxu0 0
    %1061 = vmatprep.subr.bf16.mxu0 0
    %1062 = vmatpush1.bf16.msra.mxu0 0
    %1063 = vmatprep.subr.bf16.mxu0 0
    %1064 = vmatpush1.bf16.msra.mxu0 0
    %1065 = vmatprep.subr.bf16.mxu0 0
    %1066 = vmatpush1.bf16.msra.mxu0 0
    %1067 = vmatprep.subr.bf16.mxu0 0
    %1068 = vmatpush1.bf16.msra.mxu0 0
    %1069 = vmatprep.subr.bf16.mxu0 0
    %1070 = vmatpush1.bf16.msra.mxu0 0
    %1071 = vmatprep.subr.bf16.mxu0 0
    %1072 = vmatpush1.bf16.msra.mxu0 0
    %1073 = vmatprep.mubr.bf16.mxu0 0
    %1074 = vmatmul.mubr.bf16.gmra.mrb[0].mxu0 %v998
    %v1075 = vpop.f32.mrb[0].mxu0
    %v1076 = vadd.f32 0.0, %v1075
    %v1077 = vpop.f32.mrb[0].mxu0
    %v1078 = vadd.f32 0.0, %v1077
    %v1079 = vpop.f32.mrb[0].mxu0
    %v1080 = vpop.f32.mrb[0].mxu0
    %1081 = vdwg.mxu0
    %v1082 = vadd.f32 %v912, %v1035
    %v1083 = vadd.f32 %v913, %v1037
    %v1084 = vadd.f32 %v914, %v1076
    %v1085 = vadd.f32 %v915, %v1078
    %v1086 = vxor.u32 %v1082, 2147483648
    %v1087 = vmul.f32 %v1086, 1.442695
    %v1088 = vpow.pop %v1087
    %v1089 = vadd.f32 %v1088, 1.0
    %v1090 = vrcp.pop %v1089
    %v1091 = vmul.f32 1.0, %v1090
    %v1092 = vxor.u32 %v1083, 2147483648
    %v1093 = vmul.f32 %v1092, 1.442695
    %v1094 = vpow.pop %v1093
    %v1095 = vadd.f32 %v1094, 1.0
    %v1096 = vrcp.pop %v1095
    %v1097 = vmul.f32 1.0, %v1096
    %v1098 = vxor.u32 %v1084, 2147483648
    %v1099 = vmul.f32 %v1098, 1.442695
    %v1100 = vpow.pop %v1099
    %v1101 = vadd.f32 %v1100, 1.0
    %v1102 = vrcp.pop %v1101
    %v1103 = vmul.f32 1.0, %v1102
    %v1104 = vtanh.pop %v1085
    %v1105 = vmul.f32 %v1097, 0.0
    %v1106 = vmul.f32 %v1091, %v1104
    %v1107 = vadd.f32 %v1105, %v1106
    %v1108 = vtanh.pop %v1107
    %v1109 = vmul.f32 %v1103, %v1108
    %v1110 = vpack.c.bf16 %v1109, %v1109
    %vm1111 = vcmask 257024
    %1112 = vst.msk [vmem:[#allocation15] sm:$0xf] %vm1111, %v1110
    %v1114 = vunpack.c.l.b16 %v1110
    %v1115 = vpack.c.b16 %v1114, %v1114
    %1116 = vrot.lane.b32.xlu0 %v1115, 96
    %v1117 = vpop.permute.xlu0 %1116
    %s1119 = scalar_lea.vmem [#allocation16], 28
    %1120 = vst.msk [vmem:[%s1119] sm:$0xf] %vm1111, %v1117
    %s1121 = scalar_lea.vmem [#allocation2], 16
    %v1122 = vld [vmem:[%s1121] sm:$0xff]
    %v1123 = vld [vmem:[%s1121 + $0x8] sm:$0xff]
    %v1124 = vunpack.c.l.bf16 %v1122
    %v1125 = vunpack.c.h.bf16 %v1122
    %v1126 = vunpack.c.l.bf16 %v1123
    %v1127 = vunpack.c.h.bf16 %v1123
    %s1128 = scalar_lea.vmem [#allocation3], 96
    %v1129 = vld [vmem:[%s1128] sm:$0xff]
    %v1130 = vld [vmem:[%s1128 + $0x8] sm:$0xff]
    %v1131 = vunpack.c.l.bf16 %v1129
    %v1132 = vunpack.c.h.bf16 %v1129
    %v1133 = vunpack.c.l.bf16 %v1130
    %v1134 = vunpack.c.h.bf16 %v1130
    %v1135 = vadd.f32 %v1124, %v1131
    %v1136 = vadd.f32 %v1125, %v1132
    %v1137 = vadd.f32 %v1126, %v1133
    %v1138 = vadd.f32 %v1127, %v1134
    %v1140 = vsel %vm996, %v1110, 0
    %1142 = vmatprep.subr.bf16.mxu0 %v965
    %1143 = vmatpush1.bf16.msra.mxu0 %v964
    %1144 = vmatprep.subr.bf16.mxu0 %v969
    %1145 = vmatpush1.bf16.msra.mxu0 %v968
    %1146 = vmatprep.subr.bf16.mxu0 %v973
    %1147 = vmatpush1.bf16.msra.mxu0 %v972
    %1148 = vmatprep.subr.bf16.mxu0 %v977
    %1149 = vmatpush1.bf16.msra.mxu0 %v976
    %1150 = vmatprep.subr.bf16.mxu0 0
    %1151 = vmatpush1.bf16.msra.mxu0 0
    %1152 = vmatprep.subr.bf16.mxu0 0
    %1153 = vmatpush1.bf16.msra.mxu0 0
    %1154 = vmatprep.subr.bf16.mxu0 0
    %1155 = vmatpush1.bf16.msra.mxu0 0
    %1156 = vmatprep.subr.bf16.mxu0 0
    %1157 = vmatpush1.bf16.msra.mxu0 0
    %1158 = vmatprep.subr.bf16.mxu0 0
    %1159 = vmatpush1.bf16.msra.mxu0 0
    %1160 = vmatprep.subr.bf16.mxu0 0
    %1161 = vmatpush1.bf16.msra.mxu0 0
    %1162 = vmatprep.subr.bf16.mxu0 0
    %1163 = vmatpush1.bf16.msra.mxu0 0
    %1164 = vmatprep.subr.bf16.mxu0 0
    %1165 = vmatpush1.bf16.msra.mxu0 0
    %1166 = vmatprep.subr.bf16.mxu0 0
    %1167 = vmatpush1.bf16.msra.mxu0 0
    %1168 = vmatprep.subr.bf16.mxu0 0
    %1169 = vmatpush1.bf16.msra.mxu0 0
    %1170 = vmatprep.subr.bf16.mxu0 0
    %1171 = vmatpush1.bf16.msra.mxu0 0
    %1172 = vmatprep.subr.bf16.mxu0 0
    %1173 = vmatpush1.bf16.msra.mxu0 0
    %1174 = vmatprep.mubr.bf16.mxu0 0
    %1175 = vmatmul.mubr.bf16.gmra.mrb[0].mxu0 %v1140
    %v1176 = vpop.f32.mrb[0].mxu0
    %v1177 = vadd.f32 0.0, %v1176
    %v1178 = vpop.f32.mrb[0].mxu0
    %v1179 = vadd.f32 0.0, %v1178
    %v1180 = vpop.f32.mrb[0].mxu0
    %v1181 = vpop.f32.mrb[0].mxu0
    %1182 = vdwg.mxu0
    %1183 = vmatprep.subr.bf16.mxu0 %v967
    %1184 = vmatpush1.bf16.msra.mxu0 %v966
    %1185 = vmatprep.subr.bf16.mxu0 %v971
    %1186 = vmatpush1.bf16.msra.mxu0 %v970
    %1187 = vmatprep.subr.bf16.mxu0 %v975
    %1188 = vmatpush1.bf16.msra.mxu0 %v974
    %1189 = vmatprep.subr.bf16.mxu0 %v979
    %1190 = vmatpush1.bf16.msra.mxu0 %v978
    %1191 = vmatprep.subr.bf16.mxu0 0
    %1192 = vmatpush1.bf16.msra.mxu0 0
    %1193 = vmatprep.subr.bf16.mxu0 0
    %1194 = vmatpush1.bf16.msra.mxu0 0
    %1195 = vmatprep.subr.bf16.mxu0 0
    %1196 = vmatpush1.bf16.msra.mxu0 0
    %1197 = vmatprep.subr.bf16.mxu0 0
    %1198 = vmatpush1.bf16.msra.mxu0 0
    %1199 = vmatprep.subr.bf16.mxu0 0
    %1200 = vmatpush1.bf16.msra.mxu0 0
    %1201 = vmatprep.subr.bf16.mxu0 0
    %1202 = vmatpush1.bf16.msra.mxu0 0
    %1203 = vmatprep.subr.bf16.mxu0 0
    %1204 = vmatpush1.bf16.msra.mxu0 0
    %1205 = vmatprep.subr.bf16.mxu0 0
    %1206 = vmatpush1.bf16.msra.mxu0 0
    %1207 = vmatprep.subr.bf16.mxu0 0
    %1208 = vmatpush1.bf16.msra.mxu0 0
    %1209 = vmatprep.subr.bf16.mxu0 0
    %1210 = vmatpush1.bf16.msra.mxu0 0
    %1211 = vmatprep.subr.bf16.mxu0 0
    %1212 = vmatpush1.bf16.msra.mxu0 0
    %1213 = vmatprep.subr.bf16.mxu0 0
    %1214 = vmatpush1.bf16.msra.mxu0 0
    %1215 = vmatprep.mubr.bf16.mxu0 0
    %1216 = vmatmul.mubr.bf16.gmra.mrb[0].mxu0 %v1140
    %v1217 = vpop.f32.mrb[0].mxu0
    %v1218 = vadd.f32 0.0, %v1217
    %v1219 = vpop.f32.mrb[0].mxu0
    %v1220 = vadd.f32 0.0, %v1219
    %v1221 = vpop.f32.mrb[0].mxu0
    %v1222 = vpop.f32.mrb[0].mxu0
    %1223 = vdwg.mxu0
    %v1224 = vadd.f32 %v1135, %v1177
    %v1225 = vadd.f32 %v1136, %v1179
    %v1226 = vadd.f32 %v1137, %v1218
    %v1227 = vadd.f32 %v1138, %v1220
    %v1228 = vxor.u32 %v1224, 2147483648
    %v1229 = vmul.f32 %v1228, 1.442695
    %v1230 = vpow.pop %v1229
    %v1231 = vadd.f32 %v1230, 1.0
    %v1232 = vrcp.pop %v1231
    %v1233 = vmul.f32 1.0, %v1232
    %v1234 = vxor.u32 %v1225, 2147483648
    %v1235 = vmul.f32 %v1234, 1.442695
    %v1236 = vpow.pop %v1235
    %v1237 = vadd.f32 %v1236, 1.0
    %v1238 = vrcp.pop %v1237
    %v1239 = vmul.f32 1.0, %v1238
    %v1240 = vxor.u32 %v1226, 2147483648
    %v1241 = vmul.f32 %v1240, 1.442695
    %v1242 = vpow.pop %v1241
    %v1243 = vadd.f32 %v1242, 1.0
    %v1244 = vrcp.pop %v1243
    %v1245 = vmul.f32 1.0, %v1244
    %v1246 = vtanh.pop %v1227
    %v1247 = vmul.f32 %v1239, %v1107
    %v1248 = vmul.f32 %v1233, %v1246
    %v1249 = vadd.f32 %v1247, %v1248
    %v1250 = vtanh.pop %v1249
    %v1251 = vmul.f32 %v1245, %v1250
    %v1252 = vpack.c.bf16 %v1251, %v1251
    %s1253 = scalar_lea.vmem [#allocation15], 4
    %1254 = vst.msk [vmem:[%s1253] sm:$0xf] %vm1111, %v1252
    %v1256 = vunpack.c.l.b16 %v1252
    %v1257 = vpack.c.b16 %v1256, %v1256
    %1258 = vrot.lane.b32.xlu0 %v1257, 96
    %v1259 = vpop.permute.xlu0 %1258
    %s1261 = scalar_lea.vmem [#allocation16], 24
    %1262 = vst.msk [vmem:[%s1261] sm:$0xf] %vm1111, %v1259
    %s1263 = scalar_lea.vmem [#allocation2], 32
    %v1264 = vld [vmem:[%s1263] sm:$0xff]
    %v1265 = vld [vmem:[%s1263 + $0x8] sm:$0xff]
    %v1266 = vunpack.c.l.bf16 %v1264
    %v1267 = vunpack.c.h.bf16 %v1264
    %v1268 = vunpack.c.l.bf16 %v1265
    %v1269 = vunpack.c.h.bf16 %v1265
    %s1270 = scalar_lea.vmem [#allocation3], 80
    %v1271 = vld [vmem:[%s1270] sm:$0xff]
    %v1272 = vld [vmem:[%s1270 + $0x8] sm:$0xff]
    %v1273 = vunpack.c.l.bf16 %v1271
    %v1274 = vunpack.c.h.bf16 %v1271
    %v1275 = vunpack.c.l.bf16 %v1272
    %v1276 = vunpack.c.h.bf16 %v1272
    %v1277 = vadd.f32 %v1266, %v1273
    %v1278 = vadd.f32 %v1267, %v1274
    %v1279 = vadd.f32 %v1268, %v1275
    %v1280 = vadd.f32 %v1269, %v1276
    %v1282 = vsel %vm996, %v1252, 0
    %1284 = vmatprep.subr.bf16.mxu0 %v965
    %1285 = vmatpush1.bf16.msra.mxu0 %v964
    %1286 = vmatprep.subr.bf16.mxu0 %v969
    %1287 = vmatpush1.bf16.msra.mxu0 %v968
    %1288 = vmatprep.subr.bf16.mxu0 %v973
    %1289 = vmatpush1.bf16.msra.mxu0 %v972
    %1290 = vmatprep.subr.bf16.mxu0 %v977
    %1291 = vmatpush1.bf16.msra.mxu0 %v976
    %1292 = vmatprep.subr.bf16.mxu0 0
    %1293 = vmatpush1.bf16.msra.mxu0 0
    %1294 = vmatprep.subr.bf16.mxu0 0
    %1295 = vmatpush1.bf16.msra.mxu0 0
    %1296 = vmatprep.subr.bf16.mxu0 0
    %1297 = vmatpush1.bf16.msra.mxu0 0
    %1298 = vmatprep.subr.bf16.mxu0 0
    %1299 = vmatpush1.bf16.msra.mxu0 0
    %1300 = vmatprep.subr.bf16.mxu0 0
    %1301 = vmatpush1.bf16.msra.mxu0 0
    %1302 = vmatprep.subr.bf16.mxu0 0
    %1303 = vmatpush1.bf16.msra.mxu0 0
    %1304 = vmatprep.subr.bf16.mxu0 0
    %1305 = vmatpush1.bf16.msra.mxu0 0
    %1306 = vmatprep.subr.bf16.mxu0 0
    %1307 = vmatpush1.bf16.msra.mxu0 0
    %1308 = vmatprep.subr.bf16.mxu0 0
    %1309 = vmatpush1.bf16.msra.mxu0 0
    %1310 = vmatprep.subr.bf16.mxu0 0
    %1311 = vmatpush1.bf16.msra.mxu0 0
    %1312 = vmatprep.subr.bf16.mxu0 0
    %1313 = vmatpush1.bf16.msra.mxu0 0
    %1314 = vmatprep.subr.bf16.mxu0 0
    %1315 = vmatpush1.bf16.msra.mxu0 0
    %1316 = vmatprep.mubr.bf16.mxu0 0
    %1317 = vmatmul.mubr.bf16.gmra.mrb[0].mxu0 %v1282
    %v1318 = vpop.f32.mrb[0].mxu0
    %v1319 = vadd.f32 0.0, %v1318
    %v1320 = vpop.f32.mrb[0].mxu0
    %v1321 = vadd.f32 0.0, %v1320
    %v1322 = vpop.f32.mrb[0].mxu0
    %v1323 = vpop.f32.mrb[0].mxu0
    %1324 = vdwg.mxu0
    %1325 = vmatprep.subr.bf16.mxu0 %v967
    %1326 = vmatpush1.bf16.msra.mxu0 %v966
    %1327 = vmatprep.subr.bf16.mxu0 %v971
    %1328 = vmatpush1.bf16.msra.mxu0 %v970
    %1329 = vmatprep.subr.bf16.mxu0 %v975
    %1330 = vmatpush1.bf16.msra.mxu0 %v974
    %1331 = vmatprep.subr.bf16.mxu0 %v979
    %1332 = vmatpush1.bf16.msra.mxu0 %v978
    %1333 = vmatprep.subr.bf16.mxu0 0
    %1334 = vmatpush1.bf16.msra.mxu0 0
    %1335 = vmatprep.subr.bf16.mxu0 0
    %1336 = vmatpush1.bf16.msra.mxu0 0
    %1337 = vmatprep.subr.bf16.mxu0 0
    %1338 = vmatpush1.bf16.msra.mxu0 0
    %1339 = vmatprep.subr.bf16.mxu0 0
    %1340 = vmatpush1.bf16.msra.mxu0 0
    %1341 = vmatprep.subr.bf16.mxu0 0
    %1342 = vmatpush1.bf16.msra.mxu0 0
    %1343 = vmatprep.subr.bf16.mxu0 0
    %1344 = vmatpush1.bf16.msra.mxu0 0
    %1345 = vmatprep.subr.bf16.mxu0 0
    %1346 = vmatpush1.bf16.msra.mxu0 0
    %1347 = vmatprep.subr.bf16.mxu0 0
    %1348 = vmatpush1.bf16.msra.mxu0 0
    %1349 = vmatprep.subr.bf16.mxu0 0
    %1350 = vmatpush1.bf16.msra.mxu0 0
    %1351 = vmatprep.subr.bf16.mxu0 0
    %1352 = vmatpush1.bf16.msra.mxu0 0
    %1353 = vmatprep.subr.bf16.mxu0 0
    %1354 = vmatpush1.bf16.msra.mxu0 0
    %1355 = vmatprep.subr.bf16.mxu0 0
    %1356 = vmatpush1.bf16.msra.mxu0 0
    %1357 = vmatprep.mubr.bf16.mxu0 0
    %1358 = vmatmul.mubr.bf16.gmra.mrb[0].mxu0 %v1282
    %v1359 = vpop.f32.mrb[0].mxu0
    %v1360 = vadd.f32 0.0, %v1359
    %v1361 = vpop.f32.mrb[0].mxu0
    %v1362 = vadd.f32 0.0, %v1361
    %v1363 = vpop.f32.mrb[0].mxu0
    %v1364 = vpop.f32.mrb[0].mxu0
    %1365 = vdwg.mxu0
    %v1366 = vadd.f32 %v1277, %v1319
    %v1367 = vadd.f32 %v1278, %v1321
    %v1368 = vadd.f32 %v1279, %v1360
    %v1369 = vadd.f32 %v1280, %v1362
    %v1370 = vxor.u32 %v1366, 2147483648
    %v1371 = vmul.f32 %v1370, 1.442695
    %v1372 = vpow.pop %v1371
    %v1373 = vadd.f32 %v1372, 1.0
    %v1374 = vrcp.pop %v1373
    %v1375 = vmul.f32 1.0, %v1374
    %v1376 = vxor.u32 %v1367, 2147483648
    %v1377 = vmul.f32 %v1376, 1.442695
    %v1378 = vpow.pop %v1377
    %v1379 = vadd.f32 %v1378, 1.0
    %v1380 = vrcp.pop %v1379
    %v1381 = vmul.f32 1.0, %v1380
    %v1382 = vxor.u32 %v1368, 2147483648
    %v1383 = vmul.f32 %v1382, 1.442695
    %v1384 = vpow.pop %v1383
    %v1385 = vadd.f32 %v1384, 1.0
    %v1386 = vrcp.pop %v1385
    %v1387 = vmul.f32 1.0, %v1386
    %v1388 = vtanh.pop %v1369
    %v1389 = vmul.f32 %v1381, %v1249
    %v1390 = vmul.f32 %v1375, %v1388
    %v1391 = vadd.f32 %v1389, %v1390
    %v1392 = vtanh.pop %v1391
    %v1393 = vmul.f32 %v1387, %v1392
    %v1394 = vpack.c.bf16 %v1393, %v1393
    %s1395 = scalar_lea.vmem [#allocation15], 8
    %1396 = vst.msk [vmem:[%s1395] sm:$0xf] %vm1111, %v1394
    %v1398 = vunpack.c.l.b16 %v1394
    %v1399 = vpack.c.b16 %v1398, %v1398
    %1400 = vrot.lane.b32.xlu0 %v1399, 96
    %v1401 = vpop.permute.xlu0 %1400
    %s1403 = scalar_lea.vmem [#allocation16], 20
    %1404 = vst.msk [vmem:[%s1403] sm:$0xf] %vm1111, %v1401
    %s1405 = scalar_lea.vmem [#allocation2], 48
    %v1406 = vld [vmem:[%s1405] sm:$0xff]
    %v1407 = vld [vmem:[%s1405 + $0x8] sm:$0xff]
    %v1408 = vunpack.c.l.bf16 %v1406
    %v1409 = vunpack.c.h.bf16 %v1406
    %v1410 = vunpack.c.l.bf16 %v1407
    %v1411 = vunpack.c.h.bf16 %v1407
    %s1412 = scalar_lea.vmem [#allocation3], 64
    %v1413 = vld [vmem:[%s1412] sm:$0xff]
    %v1414 = vld [vmem:[%s1412 + $0x8] sm:$0xff]
    %v1415 = vunpack.c.l.bf16 %v1413
    %v1416 = vunpack.c.h.bf16 %v1413
    %v1417 = vunpack.c.l.bf16 %v1414
    %v1418 = vunpack.c.h.bf16 %v1414
    %v1419 = vadd.f32 %v1408, %v1415
    %v1420 = vadd.f32 %v1409, %v1416
    %v1421 = vadd.f32 %v1410, %v1417
    %v1422 = vadd.f32 %v1411, %v1418
    %v1424 = vsel %vm996, %v1394, 0
    %1426 = vmatprep.subr.bf16.mxu0 %v965
    %1427 = vmatpush1.bf16.msra.mxu0 %v964
    %1428 = vmatprep.subr.bf16.mxu0 %v969
    %1429 = vmatpush1.bf16.msra.mxu0 %v968
    %1430 = vmatprep.subr.bf16.mxu0 %v973
    %1431 = vmatpush1.bf16.msra.mxu0 %v972
    %1432 = vmatprep.subr.bf16.mxu0 %v977
    %1433 = vmatpush1.bf16.msra.mxu0 %v976
    %1434 = vmatprep.subr.bf16.mxu0 0
    %1435 = vmatpush1.bf16.msra.mxu0 0
    %1436 = vmatprep.subr.bf16.mxu0 0
    %1437 = vmatpush1.bf16.msra.mxu0 0
    %1438 = vmatprep.subr.bf16.mxu0 0
    %1439 = vmatpush1.bf16.msra.mxu0 0
    %1440 = vmatprep.subr.bf16.mxu0 0
    %1441 = vmatpush1.bf16.msra.mxu0 0
    %1442 = vmatprep.subr.bf16.mxu0 0
    %1443 = vmatpush1.bf16.msra.mxu0 0
    %1444 = vmatprep.subr.bf16.mxu0 0
    %1445 = vmatpush1.bf16.msra.mxu0 0
    %1446 = vmatprep.subr.bf16.mxu0 0
    %1447 = vmatpush1.bf16.msra.mxu0 0
    %1448 = vmatprep.subr.bf16.mxu0 0
    %1449 = vmatpush1.bf16.msra.mxu0 0
    %1450 = vmatprep.subr.bf16.mxu0 0
    %1451 = vmatpush1.bf16.msra.mxu0 0
    %1452 = vmatprep.subr.bf16.mxu0 0
    %1453 = vmatpush1.bf16.msra.mxu0 0
    %1454 = vmatprep.subr.bf16.mxu0 0
    %1455 = vmatpush1.bf16.msra.mxu0 0
    %1456 = vmatprep.subr.bf16.mxu0 0
    %1457 = vmatpush1.bf16.msra.mxu0 0
    %1458 = vmatprep.mubr.bf16.mxu0 0
    %1459 = vmatmul.mubr.bf16.gmra.mrb[0].mxu0 %v1424
    %v1460 = vpop.f32.mrb[0].mxu0
    %v1461 = vadd.f32 0.0, %v1460
    %v1462 = vpop.f32.mrb[0].mxu0
    %v1463 = vadd.f32 0.0, %v1462
    %v1464 = vpop.f32.mrb[0].mxu0
    %v1465 = vpop.f32.mrb[0].mxu0
    %1466 = vdwg.mxu0
    %1467 = vmatprep.subr.bf16.mxu0 %v967
    %1468 = vmatpush1.bf16.msra.mxu0 %v966
    %1469 = vmatprep.subr.bf16.mxu0 %v971
    %1470 = vmatpush1.bf16.msra.mxu0 %v970
    %1471 = vmatprep.subr.bf16.mxu0 %v975
    %1472 = vmatpush1.bf16.msra.mxu0 %v974
    %1473 = vmatprep.subr.bf16.mxu0 %v979
    %1474 = vmatpush1.bf16.msra.mxu0 %v978
    %1475 = vmatprep.subr.bf16.mxu0 0
    %1476 = vmatpush1.bf16.msra.mxu0 0
    %1477 = vmatprep.subr.bf16.mxu0 0
    %1478 = vmatpush1.bf16.msra.mxu0 0
    %1479 = vmatprep.subr.bf16.mxu0 0
    %1480 = vmatpush1.bf16.msra.mxu0 0
    %1481 = vmatprep.subr.bf16.mxu0 0
    %1482 = vmatpush1.bf16.msra.mxu0 0
    %1483 = vmatprep.subr.bf16.mxu0 0
    %1484 = vmatpush1.bf16.msra.mxu0 0
    %1485 = vmatprep.subr.bf16.mxu0 0
    %1486 = vmatpush1.bf16.msra.mxu0 0
    %1487 = vmatprep.subr.bf16.mxu0 0
    %1488 = vmatpush1.bf16.msra.mxu0 0
    %1489 = vmatprep.subr.bf16.mxu0 0
    %1490 = vmatpush1.bf16.msra.mxu0 0
    %1491 = vmatprep.subr.bf16.mxu0 0
    %1492 = vmatpush1.bf16.msra.mxu0 0
    %1493 = vmatprep.subr.bf16.mxu0 0
    %1494 = vmatpush1.bf16.msra.mxu0 0
    %1495 = vmatprep.subr.bf16.mxu0 0
    %1496 = vmatpush1.bf16.msra.mxu0 0
    %1497 = vmatprep.subr.bf16.mxu0 0
    %1498 = vmatpush1.bf16.msra.mxu0 0
    %1499 = vmatprep.mubr.bf16.mxu0 0
    %1500 = vmatmul.mubr.bf16.gmra.mrb[0].mxu0 %v1424
    %v1501 = vpop.f32.mrb[0].mxu0
    %v1502 = vadd.f32 0.0, %v1501
    %v1503 = vpop.f32.mrb[0].mxu0
    %v1504 = vadd.f32 0.0, %v1503
    %v1505 = vpop.f32.mrb[0].mxu0
    %v1506 = vpop.f32.mrb[0].mxu0
    %1507 = vdwg.mxu0
    %v1508 = vadd.f32 %v1419, %v1461
    %v1509 = vadd.f32 %v1420, %v1463
    %v1510 = vadd.f32 %v1421, %v1502
    %v1511 = vadd.f32 %v1422, %v1504
    %v1512 = vxor.u32 %v1508, 2147483648
    %v1513 = vmul.f32 %v1512, 1.442695
    %v1514 = vpow.pop %v1513
    %v1515 = vadd.f32 %v1514, 1.0
    %v1516 = vrcp.pop %v1515
    %v1517 = vmul.f32 1.0, %v1516
    %v1518 = vxor.u32 %v1509, 2147483648
    %v1519 = vmul.f32 %v1518, 1.442695
    %v1520 = vpow.pop %v1519
    %v1521 = vadd.f32 %v1520, 1.0
    %v1522 = vrcp.pop %v1521
    %v1523 = vmul.f32 1.0, %v1522
    %v1524 = vxor.u32 %v1510, 2147483648
    %v1525 = vmul.f32 %v1524, 1.442695
    %v1526 = vpow.pop %v1525
    %v1527 = vadd.f32 %v1526, 1.0
    %v1528 = vrcp.pop %v1527
    %v1529 = vmul.f32 1.0, %v1528
    %v1530 = vtanh.pop %v1511
    %v1531 = vmul.f32 %v1523, %v1391
    %v1532 = vmul.f32 %v1517, %v1530
    %v1533 = vadd.f32 %v1531, %v1532
    %v1534 = vtanh.pop %v1533
    %v1535 = vmul.f32 %v1529, %v1534
    %v1536 = vpack.c.bf16 %v1535, %v1535
    %s1537 = scalar_lea.vmem [#allocation15], 12
    %1538 = vst.msk [vmem:[%s1537] sm:$0xf] %vm1111, %v1536
    %v1540 = vunpack.c.l.b16 %v1536
    %v1541 = vpack.c.b16 %v1540, %v1540
    %1542 = vrot.lane.b32.xlu0 %v1541, 96
    %v1543 = vpop.permute.xlu0 %1542
    %s1545 = scalar_lea.vmem [#allocation16], 16
    %1546 = vst.msk [vmem:[%s1545] sm:$0xf] %vm1111, %v1543
    %s1547 = scalar_lea.vmem [#allocation2], 64
    %v1548 = vld [vmem:[%s1547] sm:$0xff]
    %v1549 = vld [vmem:[%s1547 + $0x8] sm:$0xff]
    %v1550 = vunpack.c.l.bf16 %v1548
    %v1551 = vunpack.c.h.bf16 %v1548
    %v1552 = vunpack.c.l.bf16 %v1549
    %v1553 = vunpack.c.h.bf16 %v1549
    %s1554 = scalar_lea.vmem [#allocation3], 48
    %v1555 = vld [vmem:[%s1554] sm:$0xff]
    %v1556 = vld [vmem:[%s1554 + $0x8] sm:$0xff]
    %v1557 = vunpack.c.l.bf16 %v1555
    %v1558 = vunpack.c.h.bf16 %v1555
    %v1559 = vunpack.c.l.bf16 %v1556
    %v1560 = vunpack.c.h.bf16 %v1556
    %v1561 = vadd.f32 %v1550, %v1557
    %v1562 = vadd.f32 %v1551, %v1558
    %v1563 = vadd.f32 %v1552, %v1559
    %v1564 = vadd.f32 %v1553, %v1560
    %v1566 = vsel %vm996, %v1536, 0
    %1568 = vmatprep.subr.bf16.mxu0 %v965
    %1569 = vmatpush1.bf16.msra.mxu0 %v964
    %1570 = vmatprep.subr.bf16.mxu0 %v969
    %1571 = vmatpush1.bf16.msra.mxu0 %v968
    %1572 = vmatprep.subr.bf16.mxu0 %v973
    %1573 = vmatpush1.bf16.msra.mxu0 %v972
    %1574 = vmatprep.subr.bf16.mxu0 %v977
    %1575 = vmatpush1.bf16.msra.mxu0 %v976
    %1576 = vmatprep.subr.bf16.mxu0 0
    %1577 = vmatpush1.bf16.msra.mxu0 0
    %1578 = vmatprep.subr.bf16.mxu0 0
    %1579 = vmatpush1.bf16.msra.mxu0 0
    %1580 = vmatprep.subr.bf16.mxu0 0
    %1581 = vmatpush1.bf16.msra.mxu0 0
    %1582 = vmatprep.subr.bf16.mxu0 0
    %1583 = vmatpush1.bf16.msra.mxu0 0
    %1584 = vmatprep.subr.bf16.mxu0 0
    %1585 = vmatpush1.bf16.msra.mxu0 0
    %1586 = vmatprep.subr.bf16.mxu0 0
    %1587 = vmatpush1.bf16.msra.mxu0 0
    %1588 = vmatprep.subr.bf16.mxu0 0
    %1589 = vmatpush1.bf16.msra.mxu0 0
    %1590 = vmatprep.subr.bf16.mxu0 0
    %1591 = vmatpush1.bf16.msra.mxu0 0
    %1592 = vmatprep.subr.bf16.mxu0 0
    %1593 = vmatpush1.bf16.msra.mxu0 0
    %1594 = vmatprep.subr.bf16.mxu0 0
    %1595 = vmatpush1.bf16.msra.mxu0 0
    %1596 = vmatprep.subr.bf16.mxu0 0
    %1597 = vmatpush1.bf16.msra.mxu0 0
    %1598 = vmatprep.subr.bf16.mxu0 0
    %1599 = vmatpush1.bf16.msra.mxu0 0
    %1600 = vmatprep.mubr.bf16.mxu0 0
    %1601 = vmatmul.mubr.bf16.gmra.mrb[0].mxu0 %v1566
    %v1602 = vpop.f32.mrb[0].mxu0
    %v1603 = vadd.f32 0.0, %v1602
    %v1604 = vpop.f32.mrb[0].mxu0
    %v1605 = vadd.f32 0.0, %v1604
    %v1606 = vpop.f32.mrb[0].mxu0
    %v1607 = vpop.f32.mrb[0].mxu0
    %1608 = vdwg.mxu0
    %1609 = vmatprep.subr.bf16.mxu0 %v967
    %1610 = vmatpush1.bf16.msra.mxu0 %v966
    %1611 = vmatprep.subr.bf16.mxu0 %v971
    %1612 = vmatpush1.bf16.msra.mxu0 %v970
    %1613 = vmatprep.subr.bf16.mxu0 %v975
    %1614 = vmatpush1.bf16.msra.mxu0 %v974
    %1615 = vmatprep.subr.bf16.mxu0 %v979
    %1616 = vmatpush1.bf16.msra.mxu0 %v978
    %1617 = vmatprep.subr.bf16.mxu0 0
    %1618 = vmatpush1.bf16.msra.mxu0 0
    %1619 = vmatprep.subr.bf16.mxu0 0
    %1620 = vmatpush1.bf16.msra.mxu0 0
    %1621 = vmatprep.subr.bf16.mxu0 0
    %1622 = vmatpush1.bf16.msra.mxu0 0
    %1623 = vmatprep.subr.bf16.mxu0 0
    %1624 = vmatpush1.bf16.msra.mxu0 0
    %1625 = vmatprep.subr.bf16.mxu0 0
    %1626 = vmatpush1.bf16.msra.mxu0 0
    %1627 = vmatprep.subr.bf16.mxu0 0
    %1628 = vmatpush1.bf16.msra.mxu0 0
    %1629 = vmatprep.subr.bf16.mxu0 0
    %1630 = vmatpush1.bf16.msra.mxu0 0
    %1631 = vmatprep.subr.bf16.mxu0 0
    %1632 = vmatpush1.bf16.msra.mxu0 0
    %1633 = vmatprep.subr.bf16.mxu0 0
    %1634 = vmatpush1.bf16.msra.mxu0 0
    %1635 = vmatprep.subr.bf16.mxu0 0
    %1636 = vmatpush1.bf16.msra.mxu0 0
    %1637 = vmatprep.subr.bf16.mxu0 0
    %1638 = vmatpush1.bf16.msra.mxu0 0
    %1639 = vmatprep.subr.bf16.mxu0 0
    %1640 = vmatpush1.bf16.msra.mxu0 0
    %1641 = vmatprep.mubr.bf16.mxu0 0
    %1642 = vmatmul.mubr.bf16.gmra.mrb[0].mxu0 %v1566
    %v1643 = vpop.f32.mrb[0].mxu0
    %v1644 = vadd.f32 0.0, %v1643
    %v1645 = vpop.f32.mrb[0].mxu0
    %v1646 = vadd.f32 0.0, %v1645
    %v1647 = vpop.f32.mrb[0].mxu0
    %v1648 = vpop.f32.mrb[0].mxu0
    %1649 = vdwg.mxu0
    %v1650 = vadd.f32 %v1561, %v1603
    %v1651 = vadd.f32 %v1562, %v1605
    %v1652 = vadd.f32 %v1563, %v1644
    %v1653 = vadd.f32 %v1564, %v1646
    %v1654 = vxor.u32 %v1650, 2147483648
    %v1655 = vmul.f32 %v1654, 1.442695
    %v1656 = vpow.pop %v1655
    %v1657 = vadd.f32 %v1656, 1.0
    %v1658 = vrcp.pop %v1657
    %v1659 = vmul.f32 1.0, %v1658
    %v1660 = vxor.u32 %v1651, 2147483648
    %v1661 = vmul.f32 %v1660, 1.442695
    %v1662 = vpow.pop %v1661
    %v1663 = vadd.f32 %v1662, 1.0
    %v1664 = vrcp.pop %v1663
    %v1665 = vmul.f32 1.0, %v1664
    %v1666 = vxor.u32 %v1652, 2147483648
    %v1667 = vmul.f32 %v1666, 1.442695
    %v1668 = vpow.pop %v1667
    %v1669 = vadd.f32 %v1668, 1.0
    %v1670 = vrcp.pop %v1669
    %v1671 = vmul.f32 1.0, %v1670
    %v1672 = vtanh.pop %v1653
    %v1673 = vmul.f32 %v1665, %v1533
    %v1674 = vmul.f32 %v1659, %v1672
    %v1675 = vadd.f32 %v1673, %v1674
    %v1676 = vtanh.pop %v1675
    %v1677 = vmul.f32 %v1671, %v1676
    %v1678 = vpack.c.bf16 %v1677, %v1677
    %s1679 = scalar_lea.vmem [#allocation15], 16
    %1680 = vst.msk [vmem:[%s1679] sm:$0xf] %vm1111, %v1678
    %v1682 = vunpack.c.l.b16 %v1678
    %v1683 = vpack.c.b16 %v1682, %v1682
    %1684 = vrot.lane.b32.xlu0 %v1683, 96
    %v1685 = vpop.permute.xlu0 %1684
    %s1687 = scalar_lea.vmem [#allocation16], 12
    %1688 = vst.msk [vmem:[%s1687] sm:$0xf] %vm1111, %v1685
    %s1689 = scalar_lea.vmem [#allocation2], 80
    %v1690 = vld [vmem:[%s1689] sm:$0xff]
    %v1691 = vld [vmem:[%s1689 + $0x8] sm:$0xff]
    %v1692 = vunpack.c.l.bf16 %v1690
    %v1693 = vunpack.c.h.bf16 %v1690
    %v1694 = vunpack.c.l.bf16 %v1691
    %v1695 = vunpack.c.h.bf16 %v1691
    %s1696 = scalar_lea.vmem [#allocation3], 32
    %v1697 = vld [vmem:[%s1696] sm:$0xff]
    %v1698 = vld [vmem:[%s1696 + $0x8] sm:$0xff]
    %v1699 = vunpack.c.l.bf16 %v1697
    %v1700 = vunpack.c.h.bf16 %v1697
    %v1701 = vunpack.c.l.bf16 %v1698
    %v1702 = vunpack.c.h.bf16 %v1698
    %v1703 = vadd.f32 %v1692, %v1699
    %v1704 = vadd.f32 %v1693, %v1700
    %v1705 = vadd.f32 %v1694, %v1701
    %v1706 = vadd.f32 %v1695, %v1702
    %v1708 = vsel %vm996, %v1678, 0
    %1710 = vmatprep.subr.bf16.mxu0 %v965
    %1711 = vmatpush1.bf16.msra.mxu0 %v964
    %1712 = vmatprep.subr.bf16.mxu0 %v969
    %1713 = vmatpush1.bf16.msra.mxu0 %v968
    %1714 = vmatprep.subr.bf16.mxu0 %v973
    %1715 = vmatpush1.bf16.msra.mxu0 %v972
    %1716 = vmatprep.subr.bf16.mxu0 %v977
    %1717 = vmatpush1.bf16.msra.mxu0 %v976
    %1718 = vmatprep.subr.bf16.mxu0 0
    %1719 = vmatpush1.bf16.msra.mxu0 0
    %1720 = vmatprep.subr.bf16.mxu0 0
    %1721 = vmatpush1.bf16.msra.mxu0 0
    %1722 = vmatprep.subr.bf16.mxu0 0
    %1723 = vmatpush1.bf16.msra.mxu0 0
    %1724 = vmatprep.subr.bf16.mxu0 0
    %1725 = vmatpush1.bf16.msra.mxu0 0
    %1726 = vmatprep.subr.bf16.mxu0 0
    %1727 = vmatpush1.bf16.msra.mxu0 0
    %1728 = vmatprep.subr.bf16.mxu0 0
    %1729 = vmatpush1.bf16.msra.mxu0 0
    %1730 = vmatprep.subr.bf16.mxu0 0
    %1731 = vmatpush1.bf16.msra.mxu0 0
    %1732 = vmatprep.subr.bf16.mxu0 0
    %1733 = vmatpush1.bf16.msra.mxu0 0
    %1734 = vmatprep.subr.bf16.mxu0 0
    %1735 = vmatpush1.bf16.msra.mxu0 0
    %1736 = vmatprep.subr.bf16.mxu0 0
    %1737 = vmatpush1.bf16.msra.mxu0 0
    %1738 = vmatprep.subr.bf16.mxu0 0
    %1739 = vmatpush1.bf16.msra.mxu0 0
    %1740 = vmatprep.subr.bf16.mxu0 0
    %1741 = vmatpush1.bf16.msra.mxu0 0
    %1742 = vmatprep.mubr.bf16.mxu0 0
    %1743 = vmatmul.mubr.bf16.gmra.mrb[0].mxu0 %v1708
    %v1744 = vpop.f32.mrb[0].mxu0
    %v1745 = vadd.f32 0.0, %v1744
    %v1746 = vpop.f32.mrb[0].mxu0
    %v1747 = vadd.f32 0.0, %v1746
    %v1748 = vpop.f32.mrb[0].mxu0
    %v1749 = vpop.f32.mrb[0].mxu0
    %1750 = vdwg.mxu0
    %1751 = vmatprep.subr.bf16.mxu0 %v967
    %1752 = vmatpush1.bf16.msra.mxu0 %v966
    %1753 = vmatprep.subr.bf16.mxu0 %v971
    %1754 = vmatpush1.bf16.msra.mxu0 %v970
    %1755 = vmatprep.subr.bf16.mxu0 %v975
    %1756 = vmatpush1.bf16.msra.mxu0 %v974
    %1757 = vmatprep.subr.bf16.mxu0 %v979
    %1758 = vmatpush1.bf16.msra.mxu0 %v978
    %1759 = vmatprep.subr.bf16.mxu0 0
    %1760 = vmatpush1.bf16.msra.mxu0 0
    %1761 = vmatprep.subr.bf16.mxu0 0
    %1762 = vmatpush1.bf16.msra.mxu0 0
    %1763 = vmatprep.subr.bf16.mxu0 0
    %1764 = vmatpush1.bf16.msra.mxu0 0
    %1765 = vmatprep.subr.bf16.mxu0 0
    %1766 = vmatpush1.bf16.msra.mxu0 0
    %1767 = vmatprep.subr.bf16.mxu0 0
    %1768 = vmatpush1.bf16.msra.mxu0 0
    %1769 = vmatprep.subr.bf16.mxu0 0
    %1770 = vmatpush1.bf16.msra.mxu0 0
    %1771 = vmatprep.subr.bf16.mxu0 0
    %1772 = vmatpush1.bf16.msra.mxu0 0
    %1773 = vmatprep.subr.bf16.mxu0 0
    %1774 = vmatpush1.bf16.msra.mxu0 0
    %1775 = vmatprep.subr.bf16.mxu0 0
    %1776 = vmatpush1.bf16.msra.mxu0 0
    %1777 = vmatprep.subr.bf16.mxu0 0
    %1778 = vmatpush1.bf16.msra.mxu0 0
    %1779 = vmatprep.subr.bf16.mxu0 0
    %1780 = vmatpush1.bf16.msra.mxu0 0
    %1781 = vmatprep.subr.bf16.mxu0 0
    %1782 = vmatpush1.bf16.msra.mxu0 0
    %1783 = vmatprep.mubr.bf16.mxu0 0
    %1784 = vmatmul.mubr.bf16.gmra.mrb[0].mxu0 %v1708
    %v1785 = vpop.f32.mrb[0].mxu0
    %v1786 = vadd.f32 0.0, %v1785
    %v1787 = vpop.f32.mrb[0].mxu0
    %v1788 = vadd.f32 0.0, %v1787
    %v1789 = vpop.f32.mrb[0].mxu0
    %v1790 = vpop.f32.mrb[0].mxu0
    %1791 = vdwg.mxu0
    %v1792 = vadd.f32 %v1703, %v1745
    %v1793 = vadd.f32 %v1704, %v1747
    %v1794 = vadd.f32 %v1705, %v1786
    %v1795 = vadd.f32 %v1706, %v1788
    %v1796 = vxor.u32 %v1792, 2147483648
    %v1797 = vmul.f32 %v1796, 1.442695
    %v1798 = vpow.pop %v1797
    %v1799 = vadd.f32 %v1798, 1.0
    %v1800 = vrcp.pop %v1799
    %v1801 = vmul.f32 1.0, %v1800
    %v1802 = vxor.u32 %v1793, 2147483648
    %v1803 = vmul.f32 %v1802, 1.442695
    %v1804 = vpow.pop %v1803
    %v1805 = vadd.f32 %v1804, 1.0
    %v1806 = vrcp.pop %v1805
    %v1807 = vmul.f32 1.0, %v1806
    %v1808 = vxor.u32 %v1794, 2147483648
    %v1809 = vmul.f32 %v1808, 1.442695
    %v1810 = vpow.pop %v1809
    %v1811 = vadd.f32 %v1810, 1.0
    %v1812 = vrcp.pop %v1811
    %v1813 = vmul.f32 1.0, %v1812
    %v1814 = vtanh.pop %v1795
    %v1815 = vmul.f32 %v1807, %v1675
    %v1816 = vmul.f32 %v1801, %v1814
    %v1817 = vadd.f32 %v1815, %v1816
    %v1818 = vtanh.pop %v1817
    %v1819 = vmul.f32 %v1813, %v1818
    %v1820 = vpack.c.bf16 %v1819, %v1819
    %s1821 = scalar_lea.vmem [#allocation15], 20
    %1822 = vst.msk [vmem:[%s1821] sm:$0xf] %vm1111, %v1820
    %v1824 = vunpack.c.l.b16 %v1820
    %v1825 = vpack.c.b16 %v1824, %v1824
    %1826 = vrot.lane.b32.xlu0 %v1825, 96
    %v1827 = vpop.permute.xlu0 %1826
    %s1829 = scalar_lea.vmem [#allocation16], 8
    %1830 = vst.msk [vmem:[%s1829] sm:$0xf] %vm1111, %v1827
    %s1831 = scalar_lea.vmem [#allocation2], 96
    %v1832 = vld [vmem:[%s1831] sm:$0xff]
    %v1833 = vld [vmem:[%s1831 + $0x8] sm:$0xff]
    %v1834 = vunpack.c.l.bf16 %v1832
    %v1835 = vunpack.c.h.bf16 %v1832
    %v1836 = vunpack.c.l.bf16 %v1833
    %v1837 = vunpack.c.h.bf16 %v1833
    %s1838 = scalar_lea.vmem [#allocation3], 16
    %v1839 = vld [vmem:[%s1838] sm:$0xff]
    %v1840 = vld [vmem:[%s1838 + $0x8] sm:$0xff]
    %v1841 = vunpack.c.l.bf16 %v1839
    %v1842 = vunpack.c.h.bf16 %v1839
    %v1843 = vunpack.c.l.bf16 %v1840
    %v1844 = vunpack.c.h.bf16 %v1840
    %v1845 = vadd.f32 %v1834, %v1841
    %v1846 = vadd.f32 %v1835, %v1842
    %v1847 = vadd.f32 %v1836, %v1843
    %v1848 = vadd.f32 %v1837, %v1844
    %v1850 = vsel %vm996, %v1820, 0
    %1852 = vmatprep.subr.bf16.mxu0 %v965
    %1853 = vmatpush1.bf16.msra.mxu0 %v964
    %1854 = vmatprep.subr.bf16.mxu0 %v969
    %1855 = vmatpush1.bf16.msra.mxu0 %v968
    %1856 = vmatprep.subr.bf16.mxu0 %v973
    %1857 = vmatpush1.bf16.msra.mxu0 %v972
    %1858 = vmatprep.subr.bf16.mxu0 %v977
    %1859 = vmatpush1.bf16.msra.mxu0 %v976
    %1860 = vmatprep.subr.bf16.mxu0 0
    %1861 = vmatpush1.bf16.msra.mxu0 0
    %1862 = vmatprep.subr.bf16.mxu0 0
    %1863 = vmatpush1.bf16.msra.mxu0 0
    %1864 = vmatprep.subr.bf16.mxu0 0
    %1865 = vmatpush1.bf16.msra.mxu0 0
    %1866 = vmatprep.subr.bf16.mxu0 0
    %1867 = vmatpush1.bf16.msra.mxu0 0
    %1868 = vmatprep.subr.bf16.mxu0 0
    %1869 = vmatpush1.bf16.msra.mxu0 0
    %1870 = vmatprep.subr.bf16.mxu0 0
    %1871 = vmatpush1.bf16.msra.mxu0 0
    %1872 = vmatprep.subr.bf16.mxu0 0
    %1873 = vmatpush1.bf16.msra.mxu0 0
    %1874 = vmatprep.subr.bf16.mxu0 0
    %1875 = vmatpush1.bf16.msra.mxu0 0
    %1876 = vmatprep.subr.bf16.mxu0 0
    %1877 = vmatpush1.bf16.msra.mxu0 0
    %1878 = vmatprep.subr.bf16.mxu0 0
    %1879 = vmatpush1.bf16.msra.mxu0 0
    %1880 = vmatprep.subr.bf16.mxu0 0
    %1881 = vmatpush1.bf16.msra.mxu0 0
    %1882 = vmatprep.subr.bf16.mxu0 0
    %1883 = vmatpush1.bf16.msra.mxu0 0
    %1884 = vmatprep.mubr.bf16.mxu0 0
    %1885 = vmatmul.mubr.bf16.gmra.mrb[0].mxu0 %v1850
    %v1886 = vpop.f32.mrb[0].mxu0
    %v1887 = vadd.f32 0.0, %v1886
    %v1888 = vpop.f32.mrb[0].mxu0
    %v1889 = vadd.f32 0.0, %v1888
    %v1890 = vpop.f32.mrb[0].mxu0
    %v1891 = vpop.f32.mrb[0].mxu0
    %1892 = vdwg.mxu0
    %1893 = vmatprep.subr.bf16.mxu0 %v967
    %1894 = vmatpush1.bf16.msra.mxu0 %v966
    %1895 = vmatprep.subr.bf16.mxu0 %v971
    %1896 = vmatpush1.bf16.msra.mxu0 %v970
    %1897 = vmatprep.subr.bf16.mxu0 %v975
    %1898 = vmatpush1.bf16.msra.mxu0 %v974
    %1899 = vmatprep.subr.bf16.mxu0 %v979
    %1900 = vmatpush1.bf16.msra.mxu0 %v978
    %1901 = vmatprep.subr.bf16.mxu0 0
    %1902 = vmatpush1.bf16.msra.mxu0 0
    %1903 = vmatprep.subr.bf16.mxu0 0
    %1904 = vmatpush1.bf16.msra.mxu0 0
    %1905 = vmatprep.subr.bf16.mxu0 0
    %1906 = vmatpush1.bf16.msra.mxu0 0
    %1907 = vmatprep.subr.bf16.mxu0 0
    %1908 = vmatpush1.bf16.msra.mxu0 0
    %1909 = vmatprep.subr.bf16.mxu0 0
    %1910 = vmatpush1.bf16.msra.mxu0 0
    %1911 = vmatprep.subr.bf16.mxu0 0
    %1912 = vmatpush1.bf16.msra.mxu0 0
    %1913 = vmatprep.subr.bf16.mxu0 0
    %1914 = vmatpush1.bf16.msra.mxu0 0
    %1915 = vmatprep.subr.bf16.mxu0 0
    %1916 = vmatpush1.bf16.msra.mxu0 0
    %1917 = vmatprep.subr.bf16.mxu0 0
    %1918 = vmatpush1.bf16.msra.mxu0 0
    %1919 = vmatprep.subr.bf16.mxu0 0
    %1920 = vmatpush1.bf16.msra.mxu0 0
    %1921 = vmatprep.subr.bf16.mxu0 0
    %1922 = vmatpush1.bf16.msra.mxu0 0
    %1923 = vmatprep.subr.bf16.mxu0 0
    %1924 = vmatpush1.bf16.msra.mxu0 0
    %1925 = vmatprep.mubr.bf16.mxu0 0
    %1926 = vmatmul.mubr.bf16.gmra.mrb[0].mxu0 %v1850
    %v1927 = vpop.f32.mrb[0].mxu0
    %v1928 = vadd.f32 0.0, %v1927
    %v1929 = vpop.f32.mrb[0].mxu0
    %v1930 = vadd.f32 0.0, %v1929
    %v1931 = vpop.f32.mrb[0].mxu0
    %v1932 = vpop.f32.mrb[0].mxu0
    %1933 = vdwg.mxu0
    %v1934 = vadd.f32 %v1845, %v1887
    %v1935 = vadd.f32 %v1846, %v1889
    %v1936 = vadd.f32 %v1847, %v1928
    %v1937 = vadd.f32 %v1848, %v1930
    %v1938 = vxor.u32 %v1934, 2147483648
    %v1939 = vmul.f32 %v1938, 1.442695
    %v1940 = vpow.pop %v1939
    %v1941 = vadd.f32 %v1940, 1.0
    %v1942 = vrcp.pop %v1941
    %v1943 = vmul.f32 1.0, %v1942
    %v1944 = vxor.u32 %v1935, 2147483648
    %v1945 = vmul.f32 %v1944, 1.442695
    %v1946 = vpow.pop %v1945
    %v1947 = vadd.f32 %v1946, 1.0
    %v1948 = vrcp.pop %v1947
    %v1949 = vmul.f32 1.0, %v1948
    %v1950 = vxor.u32 %v1936, 2147483648
    %v1951 = vmul.f32 %v1950, 1.442695
    %v1952 = vpow.pop %v1951
    %v1953 = vadd.f32 %v1952, 1.0
    %v1954 = vrcp.pop %v1953
    %v1955 = vmul.f32 1.0, %v1954
    %v1956 = vtanh.pop %v1937
    %v1957 = vmul.f32 %v1949, %v1817
    %v1958 = vmul.f32 %v1943, %v1956
    %v1959 = vadd.f32 %v1957, %v1958
    %v1960 = vtanh.pop %v1959
    %v1961 = vmul.f32 %v1955, %v1960
    %v1962 = vpack.c.bf16 %v1961, %v1961
    %s1963 = scalar_lea.vmem [#allocation15], 24
    %1964 = vst.msk [vmem:[%s1963] sm:$0xf] %vm1111, %v1962
    %v1966 = vunpack.c.l.b16 %v1962
    %v1967 = vpack.c.b16 %v1966, %v1966
    %1968 = vrot.lane.b32.xlu0 %v1967, 96
    %v1969 = vpop.permute.xlu0 %1968
    %s1971 = scalar_lea.vmem [#allocation16], 4
    %1972 = vst.msk [vmem:[%s1971] sm:$0xf] %vm1111, %v1969
    %s1973 = scalar_lea.vmem [#allocation2], 112
    %v1974 = vld [vmem:[%s1973] sm:$0xff]
    %v1975 = vld [vmem:[%s1973 + $0x8] sm:$0xff]
    %v1976 = vunpack.c.l.bf16 %v1974
    %v1977 = vunpack.c.h.bf16 %v1974
    %v1978 = vunpack.c.l.bf16 %v1975
    %v1979 = vunpack.c.h.bf16 %v1975
    %v1980 = vld [vmem:[#allocation3] sm:$0xff]
    %v1981 = vld [vmem:[#allocation3 + $0x8] sm:$0xff]
    %v1982 = vunpack.c.l.bf16 %v1980
    %v1983 = vunpack.c.h.bf16 %v1980
    %v1984 = vunpack.c.l.bf16 %v1981
    %v1985 = vunpack.c.h.bf16 %v1981
    %v1986 = vadd.f32 %v1976, %v1982
    %v1987 = vadd.f32 %v1977, %v1983
    %v1988 = vadd.f32 %v1978, %v1984
    %v1989 = vadd.f32 %v1979, %v1985
    %v1991 = vsel %vm996, %v1962, 0
    %1993 = vmatprep.subr.bf16.mxu0 %v965
    %1994 = vmatpush1.bf16.msra.mxu0 %v964
    %1995 = vmatprep.subr.bf16.mxu0 %v969
    %1996 = vmatpush1.bf16.msra.mxu0 %v968
    %1997 = vmatprep.subr.bf16.mxu0 %v973
    %1998 = vmatpush1.bf16.msra.mxu0 %v972
    %1999 = vmatprep.subr.bf16.mxu0 %v977
    %2000 = vmatpush1.bf16.msra.mxu0 %v976
    %2001 = vmatprep.subr.bf16.mxu0 0
    %2002 = vmatpush1.bf16.msra.mxu0 0
    %2003 = vmatprep.subr.bf16.mxu0 0
    %2004 = vmatpush1.bf16.msra.mxu0 0
    %2005 = vmatprep.subr.bf16.mxu0 0
    %2006 = vmatpush1.bf16.msra.mxu0 0
    %2007 = vmatprep.subr.bf16.mxu0 0
    %2008 = vmatpush1.bf16.msra.mxu0 0
    %2009 = vmatprep.subr.bf16.mxu0 0
    %2010 = vmatpush1.bf16.msra.mxu0 0
    %2011 = vmatprep.subr.bf16.mxu0 0
    %2012 = vmatpush1.bf16.msra.mxu0 0
    %2013 = vmatprep.subr.bf16.mxu0 0
    %2014 = vmatpush1.bf16.msra.mxu0 0
    %2015 = vmatprep.subr.bf16.mxu0 0
    %2016 = vmatpush1.bf16.msra.mxu0 0
    %2017 = vmatprep.subr.bf16.mxu0 0
    %2018 = vmatpush1.bf16.msra.mxu0 0
    %2019 = vmatprep.subr.bf16.mxu0 0
    %2020 = vmatpush1.bf16.msra.mxu0 0
    %2021 = vmatprep.subr.bf16.mxu0 0
    %2022 = vmatpush1.bf16.msra.mxu0 0
    %2023 = vmatprep.subr.bf16.mxu0 0
    %2024 = vmatpush1.bf16.msra.mxu0 0
    %2025 = vmatprep.mubr.bf16.mxu0 0
    %2026 = vmatmul.mubr.bf16.gmra.mrb[0].mxu0 %v1991
    %v2027 = vpop.f32.mrb[0].mxu0
    %v2028 = vadd.f32 0.0, %v2027
    %v2029 = vpop.f32.mrb[0].mxu0
    %v2030 = vadd.f32 0.0, %v2029
    %v2031 = vpop.f32.mrb[0].mxu0
    %v2032 = vpop.f32.mrb[0].mxu0
    %2033 = vdwg.mxu0
    %2034 = vmatprep.subr.bf16.mxu0 %v967
    %2035 = vmatpush1.bf16.msra.mxu0 %v966
    %2036 = vmatprep.subr.bf16.mxu0 %v971
    %2037 = vmatpush1.bf16.msra.mxu0 %v970
    %2038 = vmatprep.subr.bf16.mxu0 %v975
    %2039 = vmatpush1.bf16.msra.mxu0 %v974
    %2040 = vmatprep.subr.bf16.mxu0 %v979
    %2041 = vmatpush1.bf16.msra.mxu0 %v978
    %2042 = vmatprep.subr.bf16.mxu0 0
    %2043 = vmatpush1.bf16.msra.mxu0 0
    %2044 = vmatprep.subr.bf16.mxu0 0
    %2045 = vmatpush1.bf16.msra.mxu0 0
    %2046 = vmatprep.subr.bf16.mxu0 0
    %2047 = vmatpush1.bf16.msra.mxu0 0
    %2048 = vmatprep.subr.bf16.mxu0 0
    %2049 = vmatpush1.bf16.msra.mxu0 0
    %2050 = vmatprep.subr.bf16.mxu0 0
    %2051 = vmatpush1.bf16.msra.mxu0 0
    %2052 = vmatprep.subr.bf16.mxu0 0
    %2053 = vmatpush1.bf16.msra.mxu0 0
    %2054 = vmatprep.subr.bf16.mxu0 0
    %2055 = vmatpush1.bf16.msra.mxu0 0
    %2056 = vmatprep.subr.bf16.mxu0 0
    %2057 = vmatpush1.bf16.msra.mxu0 0
    %2058 = vmatprep.subr.bf16.mxu0 0
    %2059 = vmatpush1.bf16.msra.mxu0 0
    %2060 = vmatprep.subr.bf16.mxu0 0
    %2061 = vmatpush1.bf16.msra.mxu0 0
    %2062 = vmatprep.subr.bf16.mxu0 0
    %2063 = vmatpush1.bf16.msra.mxu0 0
    %2064 = vmatprep.subr.bf16.mxu0 0
    %2065 = vmatpush1.bf16.msra.mxu0 0
    %2066 = vmatprep.mubr.bf16.mxu0 0
    %2067 = vmatmul.mubr.bf16.gmra.mrb[0].mxu0 %v1991
    %v2068 = vpop.f32.mrb[0].mxu0
    %v2069 = vadd.f32 0.0, %v2068
    %v2070 = vpop.f32.mrb[0].mxu0
    %v2071 = vadd.f32 0.0, %v2070
    %v2072 = vpop.f32.mrb[0].mxu0
    %v2073 = vpop.f32.mrb[0].mxu0
    %2074 = vdwg.mxu0
    %v2075 = vadd.f32 %v1986, %v2028
    %v2076 = vadd.f32 %v1987, %v2030
    %v2077 = vadd.f32 %v1988, %v2069
    %v2078 = vadd.f32 %v1989, %v2071
    %v2079 = vxor.u32 %v2075, 2147483648
    %v2080 = vmul.f32 %v2079, 1.442695
    %v2081 = vpow.pop %v2080
    %v2082 = vadd.f32 %v2081, 1.0
    %v2083 = vrcp.pop %v2082
    %v2084 = vmul.f32 1.0, %v2083
    %v2085 = vxor.u32 %v2076, 2147483648
    %v2086 = vmul.f32 %v2085, 1.442695
    %v2087 = vpow.pop %v2086
    %v2088 = vadd.f32 %v2087, 1.0
    %v2089 = vrcp.pop %v2088
    %v2090 = vmul.f32 1.0, %v2089
    %v2091 = vxor.u32 %v2077, 2147483648
    %v2092 = vmul.f32 %v2091, 1.442695
    %v2093 = vpow.pop %v2092
    %v2094 = vadd.f32 %v2093, 1.0
    %v2095 = vrcp.pop %v2094
    %v2096 = vmul.f32 1.0, %v2095
    %v2097 = vtanh.pop %v2078
    %v2098 = vmul.f32 %v2090, %v1959
    %v2099 = vmul.f32 %v2084, %v2097
    %v2100 = vadd.f32 %v2098, %v2099
    %v2101 = vtanh.pop %v2100
    %v2102 = vmul.f32 %v2096, %v2101
    %v2103 = vpack.c.bf16 %v2102, %v2102
    %s2104 = scalar_lea.vmem [#allocation15], 28
    %2105 = vst.msk [vmem:[%s2104] sm:$0xf] %vm1111, %v2103
    %v2107 = vunpack.c.l.b16 %v2103
    %v2108 = vpack.c.b16 %v2107, %v2107
    %2109 = vrot.lane.b32.xlu0 %v2108, 96
    %v2110 = vpop.permute.xlu0 %2109
    %2112 = vst.msk [vmem:[#allocation16] sm:$0xf] %vm1111, %v2110
    // Predicated region
    $region50: #{bilstm_forward.2} parent=1 // pred_check
      _
    $region51: #{bilstm_forward.2} parent=1 // pred_check_branch
      %2114 = sbr.rel (0) target = $region53
    $region52: #{bilstm_forward.2} parent=1 // pred_region
      %s2116 = ssub.s32 512, 512
      %2117 = vsyncadd [#allocation6], %s2116
      %s2118 = sshll.u32 [#allocation15], 4
      %s2119 = int_to_ptr.vmem [resolvable:$true] %s2118
      %2124 = dma.vmem_to_hbm [thread:$0]  %s2119, 512, %s6, [#allocation6], 64, 64, 4
    $region53: #{bilstm_forward.2} parent=1 // pred_fallthru
      _
    // Predicated region
    $region54: #{bilstm_forward.2} parent=1 // pred_check
      _
    $region55: #{bilstm_forward.2} parent=1 // pred_check_branch
      %2126 = sbr.rel (0) target = $region57
    $region56: #{bilstm_forward.2} parent=1 // pred_region
      %s2128 = ssub.s32 512, 512
      %2129 = vsyncadd [#allocation17], %s2128
      %s2130 = sshll.u32 [#allocation16], 4
      %s2131 = int_to_ptr.vmem [resolvable:$true] %s2130
      %2136 = dma.vmem_to_hbm [thread:$0]  %s2131, 512, %s7, [#allocation17], 64, 64, 4
    $region57: #{bilstm_forward.2} parent=1 // pred_fallthru
      _
    // Predicated region
    $region58: #{bilstm_forward.2} parent=1 // pred_check
      _
    $region59: #{bilstm_forward.2} parent=1 // pred_check_branch
      %2138 = sbr.rel (0) target = $region61
    $region60: #{bilstm_forward.2} parent=1 // pred_region
      %2139 = dma.done [#allocation6], 512
    $region61: #{bilstm_forward.2} parent=1 // pred_fallthru
      _
    // Predicated region
    $region62: #{bilstm_forward.2} parent=1 // pred_check
      _
    $region63: #{bilstm_forward.2} parent=1 // pred_check_branch
      %2141 = sbr.rel (0) target = $region65
    $region64: #{bilstm_forward.2} parent=1 // pred_region
      %2142 = dma.done [#allocation17], 512
    $region65: #{bilstm_forward.2} parent=1 // pred_fallthru
      _
    %2143 = vsyncpa [#allocation5], 1
    %2144 = vsyncpa [#allocation8], 1
    %2145 = vsyncpa [#allocation11], 1
    %2146 = vsyncpa [#allocation14], 1
    %2147 = vsyncpa [#allocation6], 1
    %2148 = vsyncpa [#allocation17], 1

// kernel: bilstm_forward.3
$region0: #{bilstm_forward.3}
  #allocation0 [shape = 'u32[]', space=smem, size = 0x4, offset = 0x4, fixed_abs, tag = 'smem constant byte address 0x4 - core index']
  #allocation1 [shape = 'u32[144,128]{1,0:T(1,128)}', space=vmem, size = 0x12000, scoped, tag = 'internal scratch']
  #allocation2 [shape = 'bf16[8,8,512]{2,1,0:T(8,128)(2,1)}', space=vmem, size = 0x10000, scoped, tag = 'scratch operand']
  %s0 = inlined_call_operand.hbm [shape: bf16[8,8,32], index: 0, kind: input, shape index: {}]
  %s1 = inlined_call_operand.hbm [shape: bf16[8,8,32], index: 1, kind: input, shape index: {}]
  %s2 = inlined_call_operand.hbm [shape: bf16[32,512], index: 2, kind: input, shape index: {}]
  %s3 = inlined_call_operand.hbm [shape: bf16[32,512], index: 3, kind: input, shape index: {}]
  %s4 = inlined_call_operand.hbm [shape: bf16[32,512], index: 4, kind: input, shape index: {}]
  %s5 = inlined_call_operand.hbm [shape: bf16[32,512], index: 5, kind: input, shape index: {}]
  %s6 = inlined_call_operand.hbm [shape: bf16[32,512], index: 6, kind: input, shape index: {}]
  %s7 = inlined_call_operand.hbm [shape: bf16[32,512], index: 7, kind: input, shape index: {}]
  %s8 = inlined_call_operand.hbm [shape: f32[1,512], index: 8, kind: input, shape index: {}]
  %s9 = inlined_call_operand.hbm [shape: f32[1,512], index: 9, kind: input, shape index: {}]
  %s10 = inlined_call_operand.hbm [shape: f32[32,128], index: 10, kind: input, shape index: {}]
  %s11 = inlined_call_operand.hbm [shape: f32[32,128], index: 11, kind: input, shape index: {}]
  %s12 = inlined_call_operand.hbm [shape: f32[1,128], index: 12, kind: input, shape index: {}]
  %s13 = inlined_call_operand.hbm [shape: f32[8,128], index: 13, kind: output, shape index: {}]
  %s14 = sld [smem:[#allocation0]]
  $region114: #{bilstm_forward.3} parent=0
    _
  %s16 = ssub.s32 1, %s14
  %s17 = scalar_select 0, %s16, %s14
  $region1: #{bilstm_forward.3} parent=0
    #allocation3 [shape = 'u8[16384]{0}', space=vmem, size = 0x4000, scoped, tag = 'input window, operand 0, single buffered']
    #allocation4 [shape = 's32[1]{0}', space=sflag, size = 0x4, scoped, tag = 'scoped memory for bilstm_forward.3']
    #allocation5 [shape = 's32[1]{0}', space=sflag, size = 0x4, scoped, tag = 'scoped memory for bilstm_forward.3']
    #allocation6 [shape = 'u8[16384]{0}', space=vmem, size = 0x4000, scoped, tag = 'input window, operand 1, single buffered']
    #allocation7 [shape = 's32[1]{0}', space=sflag, size = 0x4, scoped, tag = 'scoped memory for bilstm_forward.3']
    #allocation8 [shape = 'u8[32768]{0}', space=vmem, size = 0x8000, scoped, tag = 'input window, operand 2, single buffered']
    #allocation9 [shape = 'u8[32768]{0}', space=vmem, size = 0x8000, scoped, tag = 'input window, operand 3, single buffered']
    #allocation10 [shape = 's32[1]{0}', space=sflag, size = 0x4, scoped, tag = 'scoped memory for bilstm_forward.3']
    #allocation11 [shape = 'u8[32768]{0}', space=vmem, size = 0x8000, scoped, tag = 'input window, operand 4, single buffered']
    #allocation12 [shape = 'u8[32768]{0}', space=vmem, size = 0x8000, scoped, tag = 'input window, operand 5, single buffered']
    #allocation13 [shape = 's32[1]{0}', space=sflag, size = 0x4, scoped, tag = 'scoped memory for bilstm_forward.3']
    #allocation14 [shape = 'u8[32768]{0}', space=vmem, size = 0x8000, scoped, tag = 'input window, operand 6, single buffered']
    #allocation15 [shape = 'u8[32768]{0}', space=vmem, size = 0x8000, scoped, tag = 'input window, operand 7, single buffered']
    #allocation16 [shape = 's32[1]{0}', space=sflag, size = 0x4, scoped, tag = 'scoped memory for bilstm_forward.3']
    #allocation17 [shape = 'u8[2048]{0}', space=vmem, size = 0x800, scoped, tag = 'input window, operand 8, single buffered']
    #allocation18 [shape = 'u8[2048]{0}', space=vmem, size = 0x800, scoped, tag = 'input window, operand 9, single buffered']
    #allocation19 [shape = 's32[1]{0}', space=sflag, size = 0x4, scoped, tag = 'scoped memory for bilstm_forward.3']
    #allocation20 [shape = 'u8[16384]{0}', space=vmem, size = 0x4000, scoped, tag = 'input window, operand 10, single buffered']
    #allocation21 [shape = 'u8[16384]{0}', space=vmem, size = 0x4000, scoped, tag = 'input window, operand 11, single buffered']
    #allocation22 [shape = 's32[1]{0}', space=sflag, size = 0x4, scoped, tag = 'scoped memory for bilstm_forward.3']
    #allocation23 [shape = 'u8[512]{0}', space=vmem, size = 0x400, scoped, tag = 'input window, operand 12, single buffered']
    #allocation24 [shape = 'u8[4096]{0}', space=vmem, size = 0x1000, scoped, tag = 'output window, operand 0, single buffered']
    %18 = vsyncpa [#allocation4], 0
    %19 = vsyncpa [#allocation7], 0
    %20 = vsyncpa [#allocation10], 0
    %21 = vsyncpa [#allocation13], 0
    %22 = vsyncpa [#allocation16], 0
    %23 = vsyncpa [#allocation19], 0
    %24 = vsyncpa [#allocation22], 0
    %25 = vsyncpa [#allocation5], 0
    // Predicated region
    $region2: #{bilstm_forward.3} parent=1 // pred_check
      _
    $region3: #{bilstm_forward.3} parent=1 // pred_check_branch
      %27 = sbr.rel (0) target = $region5
    $region4: #{bilstm_forward.3} parent=1 // pred_region
      %s29 = ssub.s32 512, 512
      %30 = vsyncadd [#allocation4], %s29
      %s31 = sshll.u32 [#allocation3], 4
      %s32 = int_to_ptr.vmem [resolvable:$true] %s31
      %37 = dma.hbm_to_vmem [thread:$0]  %s0, 512, %s32, [#allocation4], 64, 64, 4
    $region5: #{bilstm_forward.3} parent=1 // pred_fallthru
      _
    // Predicated region
    $region6: #{bilstm_forward.3} parent=1 // pred_check
      _
    $region7: #{bilstm_forward.3} parent=1 // pred_check_branch
      %39 = sbr.rel (0) target = $region9
    $region8: #{bilstm_forward.3} parent=1 // pred_region
      %s41 = ssub.s32 512, 512
      %42 = vsyncadd [#allocation7], %s41
      %s43 = sshll.u32 [#allocation6], 4
      %s44 = int_to_ptr.vmem [resolvable:$true] %s43
      %49 = dma.hbm_to_vmem [thread:$0]  %s1, 512, %s44, [#allocation7], 64, 64, 4
    $region9: #{bilstm_forward.3} parent=1 // pred_fallthru
      _
    // Predicated region
    $region10: #{bilstm_forward.3} parent=1 // pred_check
      _
    $region11: #{bilstm_forward.3} parent=1 // pred_check_branch
      %51 = sbr.rel (0) target = $region13
    $region12: #{bilstm_forward.3} parent=1 // pred_region
      %s53 = ssub.s32 1024, 1024
      %54 = vsyncadd [#allocation7], %s53
      %s55 = sshll.u32 [#allocation8], 4
      %s56 = int_to_ptr.vmem [resolvable:$true] %s55
      %61 = dma.hbm_to_vmem [thread:$0]  %s2, 1024, %s56, [#allocation7], 256, 256, 16
    $region13: #{bilstm_forward.3} parent=1 // pred_fallthru
      _
    // Predicated region
    $region14: #{bilstm_forward.3} parent=1 // pred_check
      _
    $region15: #{bilstm_forward.3} parent=1 // pred_check_branch
      %63 = sbr.rel (0) target = $region17
    $region16: #{bilstm_forward.3} parent=1 // pred_region
      %s65 = ssub.s32 1024, 1024
      %66 = vsyncadd [#allocation10], %s65
      %s67 = sshll.u32 [#allocation9], 4
      %s68 = int_to_ptr.vmem [resolvable:$true] %s67
      %73 = dma.hbm_to_vmem [thread:$0]  %s3, 1024, %s68, [#allocation10], 256, 256, 16
    $region17: #{bilstm_forward.3} parent=1 // pred_fallthru
      _
    // Predicated region
    $region18: #{bilstm_forward.3} parent=1 // pred_check
      _
    $region19: #{bilstm_forward.3} parent=1 // pred_check_branch
      %75 = sbr.rel (0) target = $region21
    $region20: #{bilstm_forward.3} parent=1 // pred_region
      %s77 = ssub.s32 1024, 1024
      %78 = vsyncadd [#allocation10], %s77
      %s79 = sshll.u32 [#allocation11], 4
      %s80 = int_to_ptr.vmem [resolvable:$true] %s79
      %85 = dma.hbm_to_vmem [thread:$0]  %s4, 1024, %s80, [#allocation10], 256, 256, 16
    $region21: #{bilstm_forward.3} parent=1 // pred_fallthru
      _
    // Predicated region
    $region22: #{bilstm_forward.3} parent=1 // pred_check
      _
    $region23: #{bilstm_forward.3} parent=1 // pred_check_branch
      %87 = sbr.rel (0) target = $region25
    $region24: #{bilstm_forward.3} parent=1 // pred_region
      %s89 = ssub.s32 1024, 1024
      %90 = vsyncadd [#allocation13], %s89
      %s91 = sshll.u32 [#allocation12], 4
      %s92 = int_to_ptr.vmem [resolvable:$true] %s91
      %97 = dma.hbm_to_vmem [thread:$0]  %s5, 1024, %s92, [#allocation13], 256, 256, 16
    $region25: #{bilstm_forward.3} parent=1 // pred_fallthru
      _
    // Predicated region
    $region26: #{bilstm_forward.3} parent=1 // pred_check
      _
    $region27: #{bilstm_forward.3} parent=1 // pred_check_branch
      %99 = sbr.rel (0) target = $region29
    $region28: #{bilstm_forward.3} parent=1 // pred_region
      %s101 = ssub.s32 1024, 1024
      %102 = vsyncadd [#allocation13], %s101
      %s103 = sshll.u32 [#allocation14], 4
      %s104 = int_to_ptr.vmem [resolvable:$true] %s103
      %109 = dma.hbm_to_vmem [thread:$0]  %s6, 1024, %s104, [#allocation13], 256, 256, 16
    $region29: #{bilstm_forward.3} parent=1 // pred_fallthru
      _
    // Predicated region
    $region30: #{bilstm_forward.3} parent=1 // pred_check
      _
    $region31: #{bilstm_forward.3} parent=1 // pred_check_branch
      %111 = sbr.rel (0) target = $region33
    $region32: #{bilstm_forward.3} parent=1 // pred_region
      %s113 = ssub.s32 1024, 1024
      %114 = vsyncadd [#allocation16], %s113
      %s115 = sshll.u32 [#allocation15], 4
      %s116 = int_to_ptr.vmem [resolvable:$true] %s115
      %121 = dma.hbm_to_vmem [thread:$0]  %s7, 1024, %s116, [#allocation16], 256, 256, 16
    $region33: #{bilstm_forward.3} parent=1 // pred_fallthru
      _
    // Predicated region
    $region34: #{bilstm_forward.3} parent=1 // pred_check
      _
    $region35: #{bilstm_forward.3} parent=1 // pred_check_branch
      %123 = sbr.rel (0) target = $region37
    $region36: #{bilstm_forward.3} parent=1 // pred_region
      %s125 = ssub.s32 64, 64
      %126 = vsyncadd [#allocation16], %s125
      %s128 = sshll.u32 [#allocation17], 4
      %s129 = int_to_ptr.vmem [resolvable:$true] %s128
      %131 = dma.hbm_to_vmem [thread:$0]  %s8, 64, %s129, [#allocation16]
    $region37: #{bilstm_forward.3} parent=1 // pred_fallthru
      _
    // Predicated region
    $region38: #{bilstm_forward.3} parent=1 // pred_check
      _
    $region39: #{bilstm_forward.3} parent=1 // pred_check_branch
      %133 = sbr.rel (0) target = $region41
    $region40: #{bilstm_forward.3} parent=1 // pred_region
      %s135 = ssub.s32 64, 64
      %136 = vsyncadd [#allocation19], %s135
      %s138 = sshll.u32 [#allocation18], 4
      %s139 = int_to_ptr.vmem [resolvable:$true] %s138
      %141 = dma.hbm_to_vmem [thread:$0]  %s9, 64, %s139, [#allocation19]
    $region41: #{bilstm_forward.3} parent=1 // pred_fallthru
      _
    // Predicated region
    $region42: #{bilstm_forward.3} parent=1 // pred_check
      _
    $region43: #{bilstm_forward.3} parent=1 // pred_check_branch
      %143 = sbr.rel (0) target = $region45
    $region44: #{bilstm_forward.3} parent=1 // pred_region
      %s145 = ssub.s32 512, 512
      %146 = vsyncadd [#allocation19], %s145
      %s147 = sshll.u32 [#allocation20], 4
      %s148 = int_to_ptr.vmem [resolvable:$true] %s147
      %153 = dma.hbm_to_vmem [thread:$0]  %s10, 512, %s148, [#allocation19], 128, 128, 8
    $region45: #{bilstm_forward.3} parent=1 // pred_fallthru
      _
    // Predicated region
    $region46: #{bilstm_forward.3} parent=1 // pred_check
      _
    $region47: #{bilstm_forward.3} parent=1 // pred_check_branch
      %155 = sbr.rel (0) target = $region49
    $region48: #{bilstm_forward.3} parent=1 // pred_region
      %s157 = ssub.s32 512, 512
      %158 = vsyncadd [#allocation22], %s157
      %s159 = sshll.u32 [#allocation21], 4
      %s160 = int_to_ptr.vmem [resolvable:$true] %s159
      %165 = dma.hbm_to_vmem [thread:$0]  %s11, 512, %s160, [#allocation22], 128, 128, 8
    $region49: #{bilstm_forward.3} parent=1 // pred_fallthru
      _
    // Predicated region
    $region50: #{bilstm_forward.3} parent=1 // pred_check
      _
    $region51: #{bilstm_forward.3} parent=1 // pred_check_branch
      %167 = sbr.rel (0) target = $region53
    $region52: #{bilstm_forward.3} parent=1 // pred_region
      %s169 = ssub.s32 16, 16
      %170 = vsyncadd [#allocation22], %s169
      %s172 = sshll.u32 [#allocation23], 4
      %s173 = int_to_ptr.vmem [resolvable:$true] %s172
      %175 = dma.hbm_to_vmem [thread:$0]  %s12, 16, %s173, [#allocation22]
    $region53: #{bilstm_forward.3} parent=1 // pred_fallthru
      _
    // Predicated region
    $region54: #{bilstm_forward.3} parent=1 // pred_check
      _
    $region55: #{bilstm_forward.3} parent=1 // pred_check_branch
      %177 = sbr.rel (0) target = $region57
    $region56: #{bilstm_forward.3} parent=1 // pred_region
      %178 = dma.done [#allocation4], 512
    $region57: #{bilstm_forward.3} parent=1 // pred_fallthru
      _
    // Predicated region
    $region58: #{bilstm_forward.3} parent=1 // pred_check
      _
    $region59: #{bilstm_forward.3} parent=1 // pred_check_branch
      %180 = sbr.rel (0) target = $region61
    $region60: #{bilstm_forward.3} parent=1 // pred_region
      %181 = dma.done [#allocation7], 512
    $region61: #{bilstm_forward.3} parent=1 // pred_fallthru
      _
    // Predicated region
    $region62: #{bilstm_forward.3} parent=1 // pred_check
      _
    $region63: #{bilstm_forward.3} parent=1 // pred_check_branch
      %183 = sbr.rel (0) target = $region65
    $region64: #{bilstm_forward.3} parent=1 // pred_region
      %184 = dma.done [#allocation7], 1024
    $region65: #{bilstm_forward.3} parent=1 // pred_fallthru
      _
    // Predicated region
    $region66: #{bilstm_forward.3} parent=1 // pred_check
      _
    $region67: #{bilstm_forward.3} parent=1 // pred_check_branch
      %186 = sbr.rel (0) target = $region69
    $region68: #{bilstm_forward.3} parent=1 // pred_region
      %187 = dma.done [#allocation10], 1024
    $region69: #{bilstm_forward.3} parent=1 // pred_fallthru
      _
    // Predicated region
    $region70: #{bilstm_forward.3} parent=1 // pred_check
      _
    $region71: #{bilstm_forward.3} parent=1 // pred_check_branch
      %189 = sbr.rel (0) target = $region73
    $region72: #{bilstm_forward.3} parent=1 // pred_region
      %190 = dma.done [#allocation10], 1024
    $region73: #{bilstm_forward.3} parent=1 // pred_fallthru
      _
    // Predicated region
    $region74: #{bilstm_forward.3} parent=1 // pred_check
      _
    $region75: #{bilstm_forward.3} parent=1 // pred_check_branch
      %192 = sbr.rel (0) target = $region77
    $region76: #{bilstm_forward.3} parent=1 // pred_region
      %193 = dma.done [#allocation13], 1024
    $region77: #{bilstm_forward.3} parent=1 // pred_fallthru
      _
    // Predicated region
    $region78: #{bilstm_forward.3} parent=1 // pred_check
      _
    $region79: #{bilstm_forward.3} parent=1 // pred_check_branch
      %195 = sbr.rel (0) target = $region81
    $region80: #{bilstm_forward.3} parent=1 // pred_region
      %196 = dma.done [#allocation13], 1024
    $region81: #{bilstm_forward.3} parent=1 // pred_fallthru
      _
    // Predicated region
    $region82: #{bilstm_forward.3} parent=1 // pred_check
      _
    $region83: #{bilstm_forward.3} parent=1 // pred_check_branch
      %198 = sbr.rel (0) target = $region85
    $region84: #{bilstm_forward.3} parent=1 // pred_region
      %199 = dma.done [#allocation16], 1024
    $region85: #{bilstm_forward.3} parent=1 // pred_fallthru
      _
    // Predicated region
    $region86: #{bilstm_forward.3} parent=1 // pred_check
      _
    $region87: #{bilstm_forward.3} parent=1 // pred_check_branch
      %201 = sbr.rel (0) target = $region89
    $region88: #{bilstm_forward.3} parent=1 // pred_region
      %202 = dma.done [#allocation16], 64
    $region89: #{bilstm_forward.3} parent=1 // pred_fallthru
      _
    // Predicated region
    $region90: #{bilstm_forward.3} parent=1 // pred_check
      _
    $region91: #{bilstm_forward.3} parent=1 // pred_check_branch
      %204 = sbr.rel (0) target = $region93
    $region92: #{bilstm_forward.3} parent=1 // pred_region
      %205 = dma.done [#allocation19], 64
    $region93: #{bilstm_forward.3} parent=1 // pred_fallthru
      _
    // Predicated region
    $region94: #{bilstm_forward.3} parent=1 // pred_check
      _
    $region95: #{bilstm_forward.3} parent=1 // pred_check_branch
      %207 = sbr.rel (0) target = $region97
    $region96: #{bilstm_forward.3} parent=1 // pred_region
      %208 = dma.done [#allocation19], 512
    $region97: #{bilstm_forward.3} parent=1 // pred_fallthru
      _
    // Predicated region
    $region98: #{bilstm_forward.3} parent=1 // pred_check
      _
    $region99: #{bilstm_forward.3} parent=1 // pred_check_branch
      %210 = sbr.rel (0) target = $region101
    $region100: #{bilstm_forward.3} parent=1 // pred_region
      %211 = dma.done [#allocation22], 512
    $region101: #{bilstm_forward.3} parent=1 // pred_fallthru
      _
    // Predicated region
    $region102: #{bilstm_forward.3} parent=1 // pred_check
      _
    $region103: #{bilstm_forward.3} parent=1 // pred_check_branch
      %213 = sbr.rel (0) target = $region105
    $region104: #{bilstm_forward.3} parent=1 // pred_region
      %214 = dma.done [#allocation22], 16
    $region105: #{bilstm_forward.3} parent=1 // pred_fallthru
      _
    %v216 = vld [vmem:[#allocation17] sm:$0xf]
    %v217 = vld [vmem:[#allocation3] sm:$0xf]
    %v218 = vld [vmem:[#allocation3 + $0x4] sm:$0xf]
    %v219 = vld [vmem:[#allocation3 + $0x8] sm:$0xf]
    %v220 = vld [vmem:[#allocation3 + $0xc] sm:$0xf]
    %v221 = vld [vmem:[#allocation3 + $0x10] sm:$0xf]
    %v222 = vld [vmem:[#allocation3 + $0x14] sm:$0xf]
    %v223 = vld [vmem:[#allocation3 + $0x18] sm:$0xf]
    %v224 = vld [vmem:[#allocation3 + $0x1c] sm:$0xf]
    %v225 = vld [vmem:[#allocation8] sm:$0xff]
    %v226 = vld [vmem:[#allocation8 + $0x8] sm:$0xff]
    %v227 = vld [vmem:[#allocation8 + $0x10] sm:$0xff]
    %v228 = vld [vmem:[#allocation8 + $0x18] sm:$0xff]
    %v229 = vld [vmem:[#allocation8 + $0x20] sm:$0xff]
    %v230 = vld [vmem:[#allocation8 + $0x28] sm:$0xff]
    %v231 = vld [vmem:[#allocation8 + $0x30] sm:$0xff]
    %v232 = vld [vmem:[#allocation8 + $0x38] sm:$0xff]
    %v241 = vunpack.c.l.b16 %v217
    %v242 = vunpack.c.l.b16 %v218
    %v243 = vunpack.c.l.b16 %v219
    %v244 = vunpack.c.l.b16 %v220
    %v245 = vunpack.c.l.b16 %v221
    %v246 = vunpack.c.l.b16 %v222
    %v247 = vunpack.c.l.b16 %v223
    %v248 = vunpack.c.l.b16 %v224
    %v249 = vpack.c.b16 %v242, %v241
    %v250 = vpack.c.b16 %v244, %v243
    %v251 = vpack.c.b16 %v246, %v245
    %v252 = vpack.c.b16 %v248, %v247
    %v261 = vunpack.c.l.b16 %v225
    %v262 = vunpack.c.h.b16 %v225
    %v263 = vunpack.c.l.b16 %v226
    %v264 = vunpack.c.h.b16 %v226
    %v265 = vunpack.c.l.b16 %v227
    %v266 = vunpack.c.h.b16 %v227
    %v267 = vunpack.c.l.b16 %v228
    %v268 = vunpack.c.h.b16 %v228
    %v269 = vunpack.c.l.b16 %v229
    %v270 = vunpack.c.h.b16 %v229
    %v271 = vunpack.c.l.b16 %v230
    %v272 = vunpack.c.h.b16 %v230
    %v273 = vunpack.c.l.b16 %v231
    %v274 = vunpack.c.h.b16 %v231
    %v275 = vunpack.c.l.b16 %v232
    %v276 = vunpack.c.h.b16 %v232
    %v277 = vpack.c.b16 %v265, %v261
    %v278 = vpack.c.b16 %v266, %v262
    %v279 = vpack.c.b16 %v267, %v263
    %v280 = vpack.c.b16 %v268, %v264
    %v281 = vpack.c.b16 %v273, %v269
    %v282 = vpack.c.b16 %v274, %v270
    %v283 = vpack.c.b16 %v275, %v271
    %v284 = vpack.c.b16 %v276, %v272
    %vm293 = vcmask 261120
    %v295 = vsel %vm293, %v249, 0
    %v298 = vsel %vm293, %v250, 0
    %v301 = vsel %vm293, %v251, 0
    %v304 = vsel %vm293, %v252, 0
    %306 = vmatprep.subr.bf16.mxu0 %v278
    %307 = vmatpush1.bf16.msra.mxu0 %v277
    %308 = vmatprep.subr.bf16.mxu0 %v282
    %309 = vmatpush1.bf16.msra.mxu0 %v281
    %310 = vmatprep.subr.bf16.mxu0 0
    %311 = vmatpush1.bf16.msra.mxu0 0
    %312 = vmatprep.subr.bf16.mxu0 0
    %313 = vmatpush1.bf16.msra.mxu0 0
    %314 = vmatprep.subr.bf16.mxu0 0
    %315 = vmatpush1.bf16.msra.mxu0 0
    %316 = vmatprep.subr.bf16.mxu0 0
    %317 = vmatpush1.bf16.msra.mxu0 0
    %318 = vmatprep.subr.bf16.mxu0 0
    %319 = vmatpush1.bf16.msra.mxu0 0
    %320 = vmatprep.subr.bf16.mxu0 0
    %321 = vmatpush1.bf16.msra.mxu0 0
    %322 = vmatprep.subr.bf16.mxu0 0
    %323 = vmatpush1.bf16.msra.mxu0 0
    %324 = vmatprep.subr.bf16.mxu0 0
    %325 = vmatpush1.bf16.msra.mxu0 0
    %326 = vmatprep.subr.bf16.mxu0 0
    %327 = vmatpush1.bf16.msra.mxu0 0
    %328 = vmatprep.subr.bf16.mxu0 0
    %329 = vmatpush1.bf16.msra.mxu0 0
    %330 = vmatprep.subr.bf16.mxu0 0
    %331 = vmatpush1.bf16.msra.mxu0 0
    %332 = vmatprep.subr.bf16.mxu0 0
    %333 = vmatpush1.bf16.msra.mxu0 0
    %334 = vmatprep.subr.bf16.mxu0 0
    %335 = vmatpush1.bf16.msra.mxu0 0
    %336 = vmatprep.subr.bf16.mxu0 0
    %337 = vmatpush1.bf16.msra.mxu0 0
    %338 = vmatprep.mubr.bf16.mxu0 0
    %339 = vmatmul.mubr.bf16.gmra.mrb[0].mxu0 %v295
    %v340 = vpop.f32.mrb[0].mxu0
    %v341 = vadd.f32 0.0, %v340
    %v342 = vpop.f32.mrb[0].mxu0
    %v343 = vadd.f32 0.0, %v342
    %v344 = vpop.f32.mrb[0].mxu0
    %v345 = vadd.f32 0.0, %v344
    %v346 = vpop.f32.mrb[0].mxu0
    %v347 = vadd.f32 0.0, %v346
    %348 = vmatprep.mubr.bf16.mxu0 0
    %349 = vmatmul.mubr.bf16.gmra.mrb[0].mxu0 %v298
    %v350 = vpop.f32.mrb[0].mxu0
    %v351 = vadd.f32 0.0, %v350
    %v352 = vpop.f32.mrb[0].mxu0
    %v353 = vadd.f32 0.0, %v352
    %v354 = vpop.f32.mrb[0].mxu0
    %v355 = vadd.f32 0.0, %v354
    %v356 = vpop.f32.mrb[0].mxu0
    %v357 = vadd.f32 0.0, %v356
    %358 = vmatprep.mubr.bf16.mxu0 0
    %359 = vmatmul.mubr.bf16.gmra.mrb[0].mxu0 %v301
    %v360 = vpop.f32.mrb[0].mxu0
    %v361 = vadd.f32 0.0, %v360
    %v362 = vpop.f32.mrb[0].mxu0
    %v363 = vadd.f32 0.0, %v362
    %v364 = vpop.f32.mrb[0].mxu0
    %v365 = vadd.f32 0.0, %v364
    %v366 = vpop.f32.mrb[0].mxu0
    %v367 = vadd.f32 0.0, %v366
    %368 = vmatprep.mubr.bf16.mxu0 0
    %369 = vmatmul.mubr.bf16.gmra.mrb[0].mxu0 %v304
    %v370 = vpop.f32.mrb[0].mxu0
    %v371 = vadd.f32 0.0, %v370
    %v372 = vpop.f32.mrb[0].mxu0
    %v373 = vadd.f32 0.0, %v372
    %v374 = vpop.f32.mrb[0].mxu0
    %v375 = vadd.f32 0.0, %v374
    %v376 = vpop.f32.mrb[0].mxu0
    %v377 = vadd.f32 0.0, %v376
    %378 = vdwg.mxu0
    %379 = vmatprep.subr.bf16.mxu0 %v280
    %380 = vmatpush1.bf16.msra.mxu0 %v279
    %381 = vmatprep.subr.bf16.mxu0 %v284
    %382 = vmatpush1.bf16.msra.mxu0 %v283
    %383 = vmatprep.subr.bf16.mxu0 0
    %384 = vmatpush1.bf16.msra.mxu0 0
    %385 = vmatprep.subr.bf16.mxu0 0
    %386 = vmatpush1.bf16.msra.mxu0 0
    %387 = vmatprep.subr.bf16.mxu0 0
    %388 = vmatpush1.bf16.msra.mxu0 0
    %389 = vmatprep.subr.bf16.mxu0 0
    %390 = vmatpush1.bf16.msra.mxu0 0
    %391 = vmatprep.subr.bf16.mxu0 0
    %392 = vmatpush1.bf16.msra.mxu0 0
    %393 = vmatprep.subr.bf16.mxu0 0
    %394 = vmatpush1.bf16.msra.mxu0 0
    %395 = vmatprep.subr.bf16.mxu0 0
    %396 = vmatpush1.bf16.msra.mxu0 0
    %397 = vmatprep.subr.bf16.mxu0 0
    %398 = vmatpush1.bf16.msra.mxu0 0
    %399 = vmatprep.subr.bf16.mxu0 0
    %400 = vmatpush1.bf16.msra.mxu0 0
    %401 = vmatprep.subr.bf16.mxu0 0
    %402 = vmatpush1.bf16.msra.mxu0 0
    %403 = vmatprep.subr.bf16.mxu0 0
    %404 = vmatpush1.bf16.msra.mxu0 0
    %405 = vmatprep.subr.bf16.mxu0 0
    %406 = vmatpush1.bf16.msra.mxu0 0
    %407 = vmatprep.subr.bf16.mxu0 0
    %408 = vmatpush1.bf16.msra.mxu0 0
    %409 = vmatprep.subr.bf16.mxu0 0
    %410 = vmatpush1.bf16.msra.mxu0 0
    %411 = vmatprep.mubr.bf16.mxu0 0
    %412 = vmatmul.mubr.bf16.gmra.mrb[0].mxu0 %v295
    %v413 = vpop.f32.mrb[0].mxu0
    %v414 = vadd.f32 0.0, %v413
    %v415 = vpop.f32.mrb[0].mxu0
    %v416 = vadd.f32 0.0, %v415
    %v417 = vpop.f32.mrb[0].mxu0
    %v418 = vadd.f32 0.0, %v417
    %v419 = vpop.f32.mrb[0].mxu0
    %v420 = vadd.f32 0.0, %v419
    %421 = vmatprep.mubr.bf16.mxu0 0
    %422 = vmatmul.mubr.bf16.gmra.mrb[0].mxu0 %v298
    %v423 = vpop.f32.mrb[0].mxu0
    %v424 = vadd.f32 0.0, %v423
    %v425 = vpop.f32.mrb[0].mxu0
    %v426 = vadd.f32 0.0, %v425
    %v427 = vpop.f32.mrb[0].mxu0
    %v428 = vadd.f32 0.0, %v427
    %v429 = vpop.f32.mrb[0].mxu0
    %v430 = vadd.f32 0.0, %v429
    %431 = vmatprep.mubr.bf16.mxu0 0
    %432 = vmatmul.mubr.bf16.gmra.mrb[0].mxu0 %v301
    %v433 = vpop.f32.mrb[0].mxu0
    %v434 = vadd.f32 0.0, %v433
    %v435 = vpop.f32.mrb[0].mxu0
    %v436 = vadd.f32 0.0, %v435
    %v437 = vpop.f32.mrb[0].mxu0
    %v438 = vadd.f32 0.0, %v437
    %v439 = vpop.f32.mrb[0].mxu0
    %v440 = vadd.f32 0.0, %v439
    %441 = vmatprep.mubr.bf16.mxu0 0
    %442 = vmatmul.mubr.bf16.gmra.mrb[0].mxu0 %v304
    %v443 = vpop.f32.mrb[0].mxu0
    %v444 = vadd.f32 0.0, %v443
    %v445 = vpop.f32.mrb[0].mxu0
    %v446 = vadd.f32 0.0, %v445
    %v447 = vpop.f32.mrb[0].mxu0
    %v448 = vadd.f32 0.0, %v447
    %v449 = vpop.f32.mrb[0].mxu0
    %v450 = vadd.f32 0.0, %v449
    %451 = vdwg.mxu0
    %v453 = vlaneseq
    %v454 = vshrl.u32 %v453, 7
    %v455 = vsub.s32 0, %v454
    %v456 = vrot.slane %v216, %v455
    %v457 = vlaneseq
    %v458 = vshrl.u32 %v457, 7
    %v459 = vsub.s32 1, %v458
    %v460 = vrot.slane %v216, %v459
    %v461 = vlaneseq
    %v462 = vshrl.u32 %v461, 7
    %v463 = vsub.s32 2, %v462
    %v464 = vrot.slane %v216, %v463
    %v465 = vlaneseq
    %v466 = vshrl.u32 %v465, 7
    %v467 = vsub.s32 3, %v466
    %v468 = vrot.slane %v216, %v467
    %v473 = vadd.f32 %v456, %v341
    %v474 = vadd.f32 %v460, %v343
    %v475 = vadd.f32 %v464, %v414
    %v476 = vadd.f32 %v468, %v416
    %v477 = vadd.f32 %v456, %v345
    %v478 = vadd.f32 %v460, %v347
    %v479 = vadd.f32 %v464, %v418
    %v480 = vadd.f32 %v468, %v420
    %v481 = vadd.f32 %v456, %v351
    %v482 = vadd.f32 %v460, %v353
    %v483 = vadd.f32 %v464, %v424
    %v484 = vadd.f32 %v468, %v426
    %v485 = vadd.f32 %v456, %v355
    %v486 = vadd.f32 %v460, %v357
    %v487 = vadd.f32 %v464, %v428
    %v488 = vadd.f32 %v468, %v430
    %v489 = vadd.f32 %v456, %v361
    %v490 = vadd.f32 %v460, %v363
    %v491 = vadd.f32 %v464, %v434
    %v492 = vadd.f32 %v468, %v436
    %v493 = vadd.f32 %v456, %v365
    %v494 = vadd.f32 %v460, %v367
    %v495 = vadd.f32 %v464, %v438
    %v496 = vadd.f32 %v468, %v440
    %v497 = vadd.f32 %v456, %v371
    %v498 = vadd.f32 %v460, %v373
    %v499 = vadd.f32 %v464, %v444
    %v500 = vadd.f32 %v468, %v446
    %v501 = vadd.f32 %v456, %v375
    %v502 = vadd.f32 %v460, %v377
    %v503 = vadd.f32 %v464, %v448
    %v504 = vadd.f32 %v468, %v450
    %v505 = vld [vmem:[#allocation6] sm:$0xf]
    %v506 = vld [vmem:[#allocation6 + $0x4] sm:$0xf]
    %v507 = vld [vmem:[#allocation6 + $0x8] sm:$0xf]
    %v508 = vld [vmem:[#allocation6 + $0xc] sm:$0xf]
    %v509 = vld [vmem:[#allocation6 + $0x10] sm:$0xf]
    %v510 = vld [vmem:[#allocation6 + $0x14] sm:$0xf]
    %v511 = vld [vmem:[#allocation6 + $0x18] sm:$0xf]
    %v512 = vld [vmem:[#allocation6 + $0x1c] sm:$0xf]
    %v513 = vld [vmem:[#allocation9] sm:$0xff]
    %v514 = vld [vmem:[#allocation9 + $0x8] sm:$0xff]
    %v515 = vld [vmem:[#allocation9 + $0x10] sm:$0xff]
    %v516 = vld [vmem:[#allocation9 + $0x18] sm:$0xff]
    %v517 = vld [vmem:[#allocation9 + $0x20] sm:$0xff]
    %v518 = vld [vmem:[#allocation9 + $0x28] sm:$0xff]
    %v519 = vld [vmem:[#allocation9 + $0x30] sm:$0xff]
    %v520 = vld [vmem:[#allocation9 + $0x38] sm:$0xff]
    %v529 = vunpack.c.l.b16 %v505
    %v530 = vunpack.c.l.b16 %v506
    %v531 = vunpack.c.l.b16 %v507
    %v532 = vunpack.c.l.b16 %v508
    %v533 = vunpack.c.l.b16 %v509
    %v534 = vunpack.c.l.b16 %v510
    %v535 = vunpack.c.l.b16 %v511
    %v536 = vunpack.c.l.b16 %v512
    %v537 = vpack.c.b16 %v530, %v529
    %v538 = vpack.c.b16 %v532, %v531
    %v539 = vpack.c.b16 %v534, %v533
    %v540 = vpack.c.b16 %v536, %v535
    %v549 = vunpack.c.l.b16 %v513
    %v550 = vunpack.c.h.b16 %v513
    %v551 = vunpack.c.l.b16 %v514
    %v552 = vunpack.c.h.b16 %v514
    %v553 = vunpack.c.l.b16 %v515
    %v554 = vunpack.c.h.b16 %v515
    %v555 = vunpack.c.l.b16 %v516
    %v556 = vunpack.c.h.b16 %v516
    %v557 = vunpack.c.l.b16 %v517
    %v558 = vunpack.c.h.b16 %v517
    %v559 = vunpack.c.l.b16 %v518
    %v560 = vunpack.c.h.b16 %v518
    %v561 = vunpack.c.l.b16 %v519
    %v562 = vunpack.c.h.b16 %v519
    %v563 = vunpack.c.l.b16 %v520
    %v564 = vunpack.c.h.b16 %v520
    %v565 = vpack.c.b16 %v553, %v549
    %v566 = vpack.c.b16 %v554, %v550
    %v567 = vpack.c.b16 %v555, %v551
    %v568 = vpack.c.b16 %v556, %v552
    %v569 = vpack.c.b16 %v561, %v557
    %v570 = vpack.c.b16 %v562, %v558
    %v571 = vpack.c.b16 %v563, %v559
    %v572 = vpack.c.b16 %v564, %v560
    %v582 = vsel %vm293, %v537, 0
    %v585 = vsel %vm293, %v538, 0
    %v588 = vsel %vm293, %v539, 0
    %v591 = vsel %vm293, %v540, 0
    %593 = vmatprep.subr.bf16.mxu0 %v566
    %594 = vmatpush1.bf16.msra.mxu0 %v565
    %595 = vmatprep.subr.bf16.mxu0 %v570
    %596 = vmatpush1.bf16.msra.mxu0 %v569
    %597 = vmatprep.subr.bf16.mxu0 0
    %598 = vmatpush1.bf16.msra.mxu0 0
    %599 = vmatprep.subr.bf16.mxu0 0
    %600 = vmatpush1.bf16.msra.mxu0 0
    %601 = vmatprep.subr.bf16.mxu0 0
    %602 = vmatpush1.bf16.msra.mxu0 0
    %603 = vmatprep.subr.bf16.mxu0 0
    %604 = vmatpush1.bf16.msra.mxu0 0
    %605 = vmatprep.subr.bf16.mxu0 0
    %606 = vmatpush1.bf16.msra.mxu0 0
    %607 = vmatprep.subr.bf16.mxu0 0
    %608 = vmatpush1.bf16.msra.mxu0 0
    %609 = vmatprep.subr.bf16.mxu0 0
    %610 = vmatpush1.bf16.msra.mxu0 0
    %611 = vmatprep.subr.bf16.mxu0 0
    %612 = vmatpush1.bf16.msra.mxu0 0
    %613 = vmatprep.subr.bf16.mxu0 0
    %614 = vmatpush1.bf16.msra.mxu0 0
    %615 = vmatprep.subr.bf16.mxu0 0
    %616 = vmatpush1.bf16.msra.mxu0 0
    %617 = vmatprep.subr.bf16.mxu0 0
    %618 = vmatpush1.bf16.msra.mxu0 0
    %619 = vmatprep.subr.bf16.mxu0 0
    %620 = vmatpush1.bf16.msra.mxu0 0
    %621 = vmatprep.subr.bf16.mxu0 0
    %622 = vmatpush1.bf16.msra.mxu0 0
    %623 = vmatprep.subr.bf16.mxu0 0
    %624 = vmatpush1.bf16.msra.mxu0 0
    %625 = vmatprep.mubr.bf16.mxu0 0
    %626 = vmatmul.mubr.bf16.gmra.mrb[0].mxu0 %v582
    %v627 = vpop.f32.mrb[0].mxu0
    %v628 = vadd.f32 0.0, %v627
    %v629 = vpop.f32.mrb[0].mxu0
    %v630 = vadd.f32 0.0, %v629
    %v631 = vpop.f32.mrb[0].mxu0
    %v632 = vadd.f32 0.0, %v631
    %v633 = vpop.f32.mrb[0].mxu0
    %v634 = vadd.f32 0.0, %v633
    %635 = vmatprep.mubr.bf16.mxu0 0
    %636 = vmatmul.mubr.bf16.gmra.mrb[0].mxu0 %v585
    %v637 = vpop.f32.mrb[0].mxu0
    %v638 = vadd.f32 0.0, %v637
    %v639 = vpop.f32.mrb[0].mxu0
    %v640 = vadd.f32 0.0, %v639
    %v641 = vpop.f32.mrb[0].mxu0
    %v642 = vadd.f32 0.0, %v641
    %v643 = vpop.f32.mrb[0].mxu0
    %v644 = vadd.f32 0.0, %v643
    %645 = vmatprep.mubr.bf16.mxu0 0
    %646 = vmatmul.mubr.bf16.gmra.mrb[0].mxu0 %v588
    %v647 = vpop.f32.mrb[0].mxu0
    %v648 = vadd.f32 0.0, %v647
    %v649 = vpop.f32.mrb[0].mxu0
    %v650 = vadd.f32 0.0, %v649
    %v651 = vpop.f32.mrb[0].mxu0
    %v652 = vadd.f32 0.0, %v651
    %v653 = vpop.f32.mrb[0].mxu0
    %v654 = vadd.f32 0.0, %v653
    %655 = vmatprep.mubr.bf16.mxu0 0
    %656 = vmatmul.mubr.bf16.gmra.mrb[0].mxu0 %v591
    %v657 = vpop.f32.mrb[0].mxu0
    %v658 = vadd.f32 0.0, %v657
    %v659 = vpop.f32.mrb[0].mxu0
    %v660 = vadd.f32 0.0, %v659
    %v661 = vpop.f32.mrb[0].mxu0
    %v662 = vadd.f32 0.0, %v661
    %v663 = vpop.f32.mrb[0].mxu0
    %v664 = vadd.f32 0.0, %v663
    %665 = vdwg.mxu0
    %666 = vmatprep.subr.bf16.mxu0 %v568
    %667 = vmatpush1.bf16.msra.mxu0 %v567
    %668 = vmatprep.subr.bf16.mxu0 %v572
    %669 = vmatpush1.bf16.msra.mxu0 %v571
    %670 = vmatprep.subr.bf16.mxu0 0
    %671 = vmatpush1.bf16.msra.mxu0 0
    %672 = vmatprep.subr.bf16.mxu0 0
    %673 = vmatpush1.bf16.msra.mxu0 0
    %674 = vmatprep.subr.bf16.mxu0 0
    %675 = vmatpush1.bf16.msra.mxu0 0
    %676 = vmatprep.subr.bf16.mxu0 0
    %677 = vmatpush1.bf16.msra.mxu0 0
    %678 = vmatprep.subr.bf16.mxu0 0
    %679 = vmatpush1.bf16.msra.mxu0 0
    %680 = vmatprep.subr.bf16.mxu0 0
    %681 = vmatpush1.bf16.msra.mxu0 0
    %682 = vmatprep.subr.bf16.mxu0 0
    %683 = vmatpush1.bf16.msra.mxu0 0
    %684 = vmatprep.subr.bf16.mxu0 0
    %685 = vmatpush1.bf16.msra.mxu0 0
    %686 = vmatprep.subr.bf16.mxu0 0
    %687 = vmatpush1.bf16.msra.mxu0 0
    %688 = vmatprep.subr.bf16.mxu0 0
    %689 = vmatpush1.bf16.msra.mxu0 0
    %690 = vmatprep.subr.bf16.mxu0 0
    %691 = vmatpush1.bf16.msra.mxu0 0
    %692 = vmatprep.subr.bf16.mxu0 0
    %693 = vmatpush1.bf16.msra.mxu0 0
    %694 = vmatprep.subr.bf16.mxu0 0
    %695 = vmatpush1.bf16.msra.mxu0 0
    %696 = vmatprep.subr.bf16.mxu0 0
    %697 = vmatpush1.bf16.msra.mxu0 0
    %698 = vmatprep.mubr.bf16.mxu0 0
    %699 = vmatmul.mubr.bf16.gmra.mrb[0].mxu0 %v582
    %v700 = vpop.f32.mrb[0].mxu0
    %v701 = vadd.f32 0.0, %v700
    %v702 = vpop.f32.mrb[0].mxu0
    %v703 = vadd.f32 0.0, %v702
    %v704 = vpop.f32.mrb[0].mxu0
    %v705 = vadd.f32 0.0, %v704
    %v706 = vpop.f32.mrb[0].mxu0
    %v707 = vadd.f32 0.0, %v706
    %708 = vmatprep.mubr.bf16.mxu0 0
    %709 = vmatmul.mubr.bf16.gmra.mrb[0].mxu0 %v585
    %v710 = vpop.f32.mrb[0].mxu0
    %v711 = vadd.f32 0.0, %v710
    %v712 = vpop.f32.mrb[0].mxu0
    %v713 = vadd.f32 0.0, %v712
    %v714 = vpop.f32.mrb[0].mxu0
    %v715 = vadd.f32 0.0, %v714
    %v716 = vpop.f32.mrb[0].mxu0
    %v717 = vadd.f32 0.0, %v716
    %718 = vmatprep.mubr.bf16.mxu0 0
    %719 = vmatmul.mubr.bf16.gmra.mrb[0].mxu0 %v588
    %v720 = vpop.f32.mrb[0].mxu0
    %v721 = vadd.f32 0.0, %v720
    %v722 = vpop.f32.mrb[0].mxu0
    %v723 = vadd.f32 0.0, %v722
    %v724 = vpop.f32.mrb[0].mxu0
    %v725 = vadd.f32 0.0, %v724
    %v726 = vpop.f32.mrb[0].mxu0
    %v727 = vadd.f32 0.0, %v726
    %728 = vmatprep.mubr.bf16.mxu0 0
    %729 = vmatmul.mubr.bf16.gmra.mrb[0].mxu0 %v591
    %v730 = vpop.f32.mrb[0].mxu0
    %v731 = vadd.f32 0.0, %v730
    %v732 = vpop.f32.mrb[0].mxu0
    %v733 = vadd.f32 0.0, %v732
    %v734 = vpop.f32.mrb[0].mxu0
    %v735 = vadd.f32 0.0, %v734
    %v736 = vpop.f32.mrb[0].mxu0
    %v737 = vadd.f32 0.0, %v736
    %738 = vdwg.mxu0
    %v739 = vadd.f32 %v473, %v628
    %v740 = vadd.f32 %v474, %v630
    %v741 = vadd.f32 %v475, %v701
    %v742 = vadd.f32 %v476, %v703
    %v743 = vadd.f32 %v477, %v632
    %v744 = vadd.f32 %v478, %v634
    %v745 = vadd.f32 %v479, %v705
    %v746 = vadd.f32 %v480, %v707
    %v747 = vadd.f32 %v481, %v638
    %v748 = vadd.f32 %v482, %v640
    %v749 = vadd.f32 %v483, %v711
    %v750 = vadd.f32 %v484, %v713
    %v751 = vadd.f32 %v485, %v642
    %v752 = vadd.f32 %v486, %v644
    %v753 = vadd.f32 %v487, %v715
    %v754 = vadd.f32 %v488, %v717
    %v755 = vadd.f32 %v489, %v648
    %v756 = vadd.f32 %v490, %v650
    %v757 = vadd.f32 %v491, %v721
    %v758 = vadd.f32 %v492, %v723
    %v759 = vadd.f32 %v493, %v652
    %v760 = vadd.f32 %v494, %v654
    %v761 = vadd.f32 %v495, %v725
    %v762 = vadd.f32 %v496, %v727
    %v763 = vadd.f32 %v497, %v658
    %v764 = vadd.f32 %v498, %v660
    %v765 = vadd.f32 %v499, %v731
    %v766 = vadd.f32 %v500, %v733
    %v767 = vadd.f32 %v501, %v662
    %v768 = vadd.f32 %v502, %v664
    %v769 = vadd.f32 %v503, %v735
    %v770 = vadd.f32 %v504, %v737
    %v771 = vpack.c.bf16 %v739, %v739
    %v772 = vpack.c.bf16 %v740, %v740
    %v773 = vpack.c.bf16 %v741, %v741
    %v774 = vpack.c.bf16 %v742, %v742
    %v775 = vpack.c.bf16 %v743, %v743
    %v776 = vpack.c.bf16 %v744, %v744
    %v777 = vpack.c.bf16 %v745, %v745
    %v778 = vpack.c.bf16 %v746, %v746
    %v779 = vpack.c.bf16 %v747, %v747
    %v780 = vpack.c.bf16 %v748, %v748
    %v781 = vpack.c.bf16 %v749, %v749
    %v782 = vpack.c.bf16 %v750, %v750
    %v783 = vpack.c.bf16 %v751, %v751
    %v784 = vpack.c.bf16 %v752, %v752
    %v785 = vpack.c.bf16 %v753, %v753
    %v786 = vpack.c.bf16 %v754, %v754
    %v787 = vpack.c.bf16 %v755, %v755
    %v788 = vpack.c.bf16 %v756, %v756
    %v789 = vpack.c.bf16 %v757, %v757
    %v790 = vpack.c.bf16 %v758, %v758
    %v791 = vpack.c.bf16 %v759, %v759
    %v792 = vpack.c.bf16 %v760, %v760
    %v793 = vpack.c.bf16 %v761, %v761
    %v794 = vpack.c.bf16 %v762, %v762
    %v795 = vpack.c.bf16 %v763, %v763
    %v796 = vpack.c.bf16 %v764, %v764
    %v797 = vpack.c.bf16 %v765, %v765
    %v798 = vpack.c.bf16 %v766, %v766
    %v799 = vpack.c.bf16 %v767, %v767
    %v800 = vpack.c.bf16 %v768, %v768
    %v801 = vpack.c.bf16 %v769, %v769
    %v802 = vpack.c.bf16 %v770, %v770
    %v835 = vunpack.c.l.b16 %v771
    %v836 = vunpack.c.l.b16 %v772
    %v837 = vunpack.c.l.b16 %v773
    %v838 = vunpack.c.l.b16 %v774
    %v839 = vunpack.c.l.b16 %v775
    %v840 = vunpack.c.l.b16 %v776
    %v841 = vunpack.c.l.b16 %v777
    %v842 = vunpack.c.l.b16 %v778
    %v843 = vunpack.c.l.b16 %v779
    %v844 = vunpack.c.l.b16 %v780
    %v845 = vunpack.c.l.b16 %v781
    %v846 = vunpack.c.l.b16 %v782
    %v847 = vunpack.c.l.b16 %v783
    %v848 = vunpack.c.l.b16 %v784
    %v849 = vunpack.c.l.b16 %v785
    %v850 = vunpack.c.l.b16 %v786
    %v851 = vunpack.c.l.b16 %v787
    %v852 = vunpack.c.l.b16 %v788
    %v853 = vunpack.c.l.b16 %v789
    %v854 = vunpack.c.l.b16 %v790
    %v855 = vunpack.c.l.b16 %v791
    %v856 = vunpack.c.l.b16 %v792
    %v857 = vunpack.c.l.b16 %v793
    %v858 = vunpack.c.l.b16 %v794
    %v859 = vunpack.c.l.b16 %v795
    %v860 = vunpack.c.l.b16 %v796
    %v861 = vunpack.c.l.b16 %v797
    %v862 = vunpack.c.l.b16 %v798
    %v863 = vunpack.c.l.b16 %v799
    %v864 = vunpack.c.l.b16 %v800
    %v865 = vunpack.c.l.b16 %v801
    %v866 = vunpack.c.l.b16 %v802
    %v867 = vpack.c.b16 %v836, %v835
    %v868 = vpack.c.b16 %v838, %v837
    %v869 = vpack.c.b16 %v840, %v839
    %v870 = vpack.c.b16 %v842, %v841
    %v871 = vpack.c.b16 %v844, %v843
    %v872 = vpack.c.b16 %v846, %v845
    %v873 = vpack.c.b16 %v848, %v847
    %v874 = vpack.c.b16 %v850, %v849
    %v875 = vpack.c.b16 %v852, %v851
    %v876 = vpack.c.b16 %v854, %v853
    %v877 = vpack.c.b16 %v856, %v855
    %v878 = vpack.c.b16 %v858, %v857
    %v879 = vpack.c.b16 %v860, %v859
    %v880 = vpack.c.b16 %v862, %v861
    %v881 = vpack.c.b16 %v864, %v863
    %v882 = vpack.c.b16 %v866, %v865
    %899 = vst [vmem:[#allocation2] sm:$0xff] %v867
    %900 = vst [vmem:[#allocation2 + $0x8] sm:$0xff] %v868
    %901 = vst [vmem:[#allocation2 + $0x10] sm:$0xff] %v869
    %902 = vst [vmem:[#allocation2 + $0x18] sm:$0xff] %v870
    %903 = vst [vmem:[#allocation2 + $0x20] sm:$0xff] %v871
    %904 = vst [vmem:[#allocation2 + $0x28] sm:$0xff] %v872
    %905 = vst [vmem:[#allocation2 + $0x30] sm:$0xff] %v873
    %906 = vst [vmem:[#allocation2 + $0x38] sm:$0xff] %v874
    %907 = vst [vmem:[#allocation2 + $0x40] sm:$0xff] %v875
    %908 = vst [vmem:[#allocation2 + $0x48] sm:$0xff] %v876
    %909 = vst [vmem:[#allocation2 + $0x50] sm:$0xff] %v877
    %910 = vst [vmem:[#allocation2 + $0x58] sm:$0xff] %v878
    %911 = vst [vmem:[#allocation2 + $0x60] sm:$0xff] %v879
    %912 = vst [vmem:[#allocation2 + $0x68] sm:$0xff] %v880
    %913 = vst [vmem:[#allocation2 + $0x70] sm:$0xff] %v881
    %914 = vst [vmem:[#allocation2 + $0x78] sm:$0xff] %v882
    %v915 = vld [vmem:[#allocation14] sm:$0xff]
    %v916 = vld [vmem:[#allocation14 + $0x8] sm:$0xff]
    %v917 = vld [vmem:[#allocation14 + $0x10] sm:$0xff]
    %v918 = vld [vmem:[#allocation14 + $0x18] sm:$0xff]
    %v919 = vld [vmem:[#allocation14 + $0x20] sm:$0xff]
    %v920 = vld [vmem:[#allocation14 + $0x28] sm:$0xff]
    %v921 = vld [vmem:[#allocation14 + $0x30] sm:$0xff]
    %v922 = vld [vmem:[#allocation14 + $0x38] sm:$0xff]
    %v923 = vld [vmem:[#allocation2] sm:$0xff]
    %v924 = vld [vmem:[#allocation2 + $0x8] sm:$0xff]
    %v933 = vunpack.c.l.b16 %v915
    %v934 = vunpack.c.h.b16 %v915
    %v935 = vunpack.c.l.b16 %v916
    %v936 = vunpack.c.h.b16 %v916
    %v937 = vunpack.c.l.b16 %v917
    %v938 = vunpack.c.h.b16 %v917
    %v939 = vunpack.c.l.b16 %v918
    %v940 = vunpack.c.h.b16 %v918
    %v941 = vunpack.c.l.b16 %v919
    %v942 = vunpack.c.h.b16 %v919
    %v943 = vunpack.c.l.b16 %v920
    %v944 = vunpack.c.h.b16 %v920
    %v945 = vunpack.c.l.b16 %v921
    %v946 = vunpack.c.h.b16 %v921
    %v947 = vunpack.c.l.b16 %v922
    %v948 = vunpack.c.h.b16 %v922
    %v949 = vpack.c.b16 %v937, %v933
    %v950 = vpack.c.b16 %v938, %v934
    %v951 = vpack.c.b16 %v939, %v935
    %v952 = vpack.c.b16 %v940, %v936
    %v953 = vpack.c.b16 %v945, %v941
    %v954 = vpack.c.b16 %v946, %v942
    %v955 = vpack.c.b16 %v947, %v943
    %v956 = vpack.c.b16 %v948, %v944
    %v966 = vsel %vm293, 0, 0
    %968 = vmatprep.subr.bf16.mxu0 %v950
    %969 = vmatpush1.bf16.msra.mxu0 %v949
    %970 = vmatprep.subr.bf16.mxu0 %v954
    %971 = vmatpush1.bf16.msra.mxu0 %v953
    %972 = vmatprep.subr.bf16.mxu0 0
    %973 = vmatpush1.bf16.msra.mxu0 0
    %974 = vmatprep.subr.bf16.mxu0 0
    %975 = vmatpush1.bf16.msra.mxu0 0
    %976 = vmatprep.subr.bf16.mxu0 0
    %977 = vmatpush1.bf16.msra.mxu0 0
    %978 = vmatprep.subr.bf16.mxu0 0
    %979 = vmatpush1.bf16.msra.mxu0 0
    %980 = vmatprep.subr.bf16.mxu0 0
    %981 = vmatpush1.bf16.msra.mxu0 0
    %982 = vmatprep.subr.bf16.mxu0 0
    %983 = vmatpush1.bf16.msra.mxu0 0
    %984 = vmatprep.subr.bf16.mxu0 0
    %985 = vmatpush1.bf16.msra.mxu0 0
    %986 = vmatprep.subr.bf16.mxu0 0
    %987 = vmatpush1.bf16.msra.mxu0 0
    %988 = vmatprep.subr.bf16.mxu0 0
    %989 = vmatpush1.bf16.msra.mxu0 0
    %990 = vmatprep.subr.bf16.mxu0 0
    %991 = vmatpush1.bf16.msra.mxu0 0
    %992 = vmatprep.subr.bf16.mxu0 0
    %993 = vmatpush1.bf16.msra.mxu0 0
    %994 = vmatprep.subr.bf16.mxu0 0
    %995 = vmatpush1.bf16.msra.mxu0 0
    %996 = vmatprep.subr.bf16.mxu0 0
    %997 = vmatpush1.bf16.msra.mxu0 0
    %998 = vmatprep.subr.bf16.mxu0 0
    %999 = vmatpush1.bf16.msra.mxu0 0
    %1000 = vmatprep.mubr.bf16.mxu0 0
    %1001 = vmatmul.mubr.bf16.gmra.mrb[0].mxu0 %v966
    %v1002 = vpop.f32.mrb[0].mxu0
    %v1003 = vadd.f32 0.0, %v1002
    %v1004 = vpop.f32.mrb[0].mxu0
    %v1005 = vadd.f32 0.0, %v1004
    %v1006 = vpop.f32.mrb[0].mxu0
    %v1007 = vpop.f32.mrb[0].mxu0
    %1008 = vdwg.mxu0
    %1009 = vmatprep.subr.bf16.mxu0 %v952
    %1010 = vmatpush1.bf16.msra.mxu0 %v951
    %1011 = vmatprep.subr.bf16.mxu0 %v956
    %1012 = vmatpush1.bf16.msra.mxu0 %v955
    %1013 = vmatprep.subr.bf16.mxu0 0
    %1014 = vmatpush1.bf16.msra.mxu0 0
    %1015 = vmatprep.subr.bf16.mxu0 0
    %1016 = vmatpush1.bf16.msra.mxu0 0
    %1017 = vmatprep.subr.bf16.mxu0 0
    %1018 = vmatpush1.bf16.msra.mxu0 0
    %1019 = vmatprep.subr.bf16.mxu0 0
    %1020 = vmatpush1.bf16.msra.mxu0 0
    %1021 = vmatprep.subr.bf16.mxu0 0
    %1022 = vmatpush1.bf16.msra.mxu0 0
    %1023 = vmatprep.subr.bf16.mxu0 0
    %1024 = vmatpush1.bf16.msra.mxu0 0
    %1025 = vmatprep.subr.bf16.mxu0 0
    %1026 = vmatpush1.bf16.msra.mxu0 0
    %1027 = vmatprep.subr.bf16.mxu0 0
    %1028 = vmatpush1.bf16.msra.mxu0 0
    %1029 = vmatprep.subr.bf16.mxu0 0
    %1030 = vmatpush1.bf16.msra.mxu0 0
    %1031 = vmatprep.subr.bf16.mxu0 0
    %1032 = vmatpush1.bf16.msra.mxu0 0
    %1033 = vmatprep.subr.bf16.mxu0 0
    %1034 = vmatpush1.bf16.msra.mxu0 0
    %1035 = vmatprep.subr.bf16.mxu0 0
    %1036 = vmatpush1.bf16.msra.mxu0 0
    %1037 = vmatprep.subr.bf16.mxu0 0
    %1038 = vmatpush1.bf16.msra.mxu0 0
    %1039 = vmatprep.subr.bf16.mxu0 0
    %1040 = vmatpush1.bf16.msra.mxu0 0
    %1041 = vmatprep.mubr.bf16.mxu0 0
    %1042 = vmatmul.mubr.bf16.gmra.mrb[0].mxu0 %v966
    %v1043 = vpop.f32.mrb[0].mxu0
    %v1044 = vadd.f32 0.0, %v1043
    %v1045 = vpop.f32.mrb[0].mxu0
    %v1046 = vadd.f32 0.0, %v1045
    %v1047 = vpop.f32.mrb[0].mxu0
    %v1048 = vpop.f32.mrb[0].mxu0
    %1049 = vdwg.mxu0
    %v1050 = vunpack.c.l.bf16 %v923
    %v1051 = vunpack.c.h.bf16 %v923
    %v1052 = vunpack.c.l.bf16 %v924
    %v1053 = vunpack.c.h.bf16 %v924
    %v1054 = vadd.f32 %v1050, %v1003
    %v1055 = vadd.f32 %v1051, %v1005
    %v1056 = vadd.f32 %v1052, %v1044
    %v1057 = vadd.f32 %v1053, %v1046
    %v1058 = vxor.u32 %v1054, 2147483648
    %v1059 = vmul.f32 %v1058, 1.442695
    %v1060 = vpow.pop %v1059
    %v1061 = vadd.f32 %v1060, 1.0
    %v1062 = vrcp.pop %v1061
    %v1063 = vmul.f32 1.0, %v1062
    %v1064 = vxor.u32 %v1055, 2147483648
    %v1065 = vmul.f32 %v1064, 1.442695
    %v1066 = vpow.pop %v1065
    %v1067 = vadd.f32 %v1066, 1.0
    %v1068 = vrcp.pop %v1067
    %v1069 = vmul.f32 1.0, %v1068
    %v1070 = vxor.u32 %v1056, 2147483648
    %v1071 = vmul.f32 %v1070, 1.442695
    %v1072 = vpow.pop %v1071
    %v1073 = vadd.f32 %v1072, 1.0
    %v1074 = vrcp.pop %v1073
    %v1075 = vmul.f32 1.0, %v1074
    %v1076 = vtanh.pop %v1057
    %v1077 = vmul.f32 %v1069, 0.0
    %v1078 = vmul.f32 %v1063, %v1076
    %v1079 = vadd.f32 %v1077, %v1078
    %v1080 = vtanh.pop %v1079
    %v1081 = vmul.f32 %v1075, %v1080
    %s1082 = scalar_lea.vmem [#allocation2], 16
    %v1083 = vld [vmem:[%s1082] sm:$0xff]
    %v1084 = vld [vmem:[%s1082 + $0x8] sm:$0xff]
    %v1085 = vpack.c.bf16 %v1081, %v1081
    %v1087 = vsel %vm293, %v1085, 0
    %1089 = vmatprep.subr.bf16.mxu0 %v950
    %1090 = vmatpush1.bf16.msra.mxu0 %v949
    %1091 = vmatprep.subr.bf16.mxu0 %v954
    %1092 = vmatpush1.bf16.msra.mxu0 %v953
    %1093 = vmatprep.subr.bf16.mxu0 0
    %1094 = vmatpush1.bf16.msra.mxu0 0
    %1095 = vmatprep.subr.bf16.mxu0 0
    %1096 = vmatpush1.bf16.msra.mxu0 0
    %1097 = vmatprep.subr.bf16.mxu0 0
    %1098 = vmatpush1.bf16.msra.mxu0 0
    %1099 = vmatprep.subr.bf16.mxu0 0
    %1100 = vmatpush1.bf16.msra.mxu0 0
    %1101 = vmatprep.subr.bf16.mxu0 0
    %1102 = vmatpush1.bf16.msra.mxu0 0
    %1103 = vmatprep.subr.bf16.mxu0 0
    %1104 = vmatpush1.bf16.msra.mxu0 0
    %1105 = vmatprep.subr.bf16.mxu0 0
    %1106 = vmatpush1.bf16.msra.mxu0 0
    %1107 = vmatprep.subr.bf16.mxu0 0
    %1108 = vmatpush1.bf16.msra.mxu0 0
    %1109 = vmatprep.subr.bf16.mxu0 0
    %1110 = vmatpush1.bf16.msra.mxu0 0
    %1111 = vmatprep.subr.bf16.mxu0 0
    %1112 = vmatpush1.bf16.msra.mxu0 0
    %1113 = vmatprep.subr.bf16.mxu0 0
    %1114 = vmatpush1.bf16.msra.mxu0 0
    %1115 = vmatprep.subr.bf16.mxu0 0
    %1116 = vmatpush1.bf16.msra.mxu0 0
    %1117 = vmatprep.subr.bf16.mxu0 0
    %1118 = vmatpush1.bf16.msra.mxu0 0
    %1119 = vmatprep.subr.bf16.mxu0 0
    %1120 = vmatpush1.bf16.msra.mxu0 0
    %1121 = vmatprep.mubr.bf16.mxu0 0
    %1122 = vmatmul.mubr.bf16.gmra.mrb[0].mxu0 %v1087
    %v1123 = vpop.f32.mrb[0].mxu0
    %v1124 = vadd.f32 0.0, %v1123
    %v1125 = vpop.f32.mrb[0].mxu0
    %v1126 = vadd.f32 0.0, %v1125
    %v1127 = vpop.f32.mrb[0].mxu0
    %v1128 = vpop.f32.mrb[0].mxu0
    %1129 = vdwg.mxu0
    %1130 = vmatprep.subr.bf16.mxu0 %v952
    %1131 = vmatpush1.bf16.msra.mxu0 %v951
    %1132 = vmatprep.subr.bf16.mxu0 %v956
    %1133 = vmatpush1.bf16.msra.mxu0 %v955
    %1134 = vmatprep.subr.bf16.mxu0 0
    %1135 = vmatpush1.bf16.msra.mxu0 0
    %1136 = vmatprep.subr.bf16.mxu0 0
    %1137 = vmatpush1.bf16.msra.mxu0 0
    %1138 = vmatprep.subr.bf16.mxu0 0
    %1139 = vmatpush1.bf16.msra.mxu0 0
    %1140 = vmatprep.subr.bf16.mxu0 0
    %1141 = vmatpush1.bf16.msra.mxu0 0
    %1142 = vmatprep.subr.bf16.mxu0 0
    %1143 = vmatpush1.bf16.msra.mxu0 0
    %1144 = vmatprep.subr.bf16.mxu0 0
    %1145 = vmatpush1.bf16.msra.mxu0 0
    %1146 = vmatprep.subr.bf16.mxu0 0
    %1147 = vmatpush1.bf16.msra.mxu0 0
    %1148 = vmatprep.subr.bf16.mxu0 0
    %1149 = vmatpush1.bf16.msra.mxu0 0
    %1150 = vmatprep.subr.bf16.mxu0 0
    %1151 = vmatpush1.bf16.msra.mxu0 0
    %1152 = vmatprep.subr.bf16.mxu0 0
    %1153 = vmatpush1.bf16.msra.mxu0 0
    %1154 = vmatprep.subr.bf16.mxu0 0
    %1155 = vmatpush1.bf16.msra.mxu0 0
    %1156 = vmatprep.subr.bf16.mxu0 0
    %1157 = vmatpush1.bf16.msra.mxu0 0
    %1158 = vmatprep.subr.bf16.mxu0 0
    %1159 = vmatpush1.bf16.msra.mxu0 0
    %1160 = vmatprep.subr.bf16.mxu0 0
    %1161 = vmatpush1.bf16.msra.mxu0 0
    %1162 = vmatprep.mubr.bf16.mxu0 0
    %1163 = vmatmul.mubr.bf16.gmra.mrb[0].mxu0 %v1087
    %v1164 = vpop.f32.mrb[0].mxu0
    %v1165 = vadd.f32 0.0, %v1164
    %v1166 = vpop.f32.mrb[0].mxu0
    %v1167 = vadd.f32 0.0, %v1166
    %v1168 = vpop.f32.mrb[0].mxu0
    %v1169 = vpop.f32.mrb[0].mxu0
    %1170 = vdwg.mxu0
    %v1171 = vunpack.c.l.bf16 %v1083
    %v1172 = vunpack.c.h.bf16 %v1083
    %v1173 = vunpack.c.l.bf16 %v1084
    %v1174 = vunpack.c.h.bf16 %v1084
    %v1175 = vadd.f32 %v1171, %v1124
    %v1176 = vadd.f32 %v1172, %v1126
    %v1177 = vadd.f32 %v1173, %v1165
    %v1178 = vadd.f32 %v1174, %v1167
    %v1179 = vxor.u32 %v1175, 2147483648
    %v1180 = vmul.f32 %v1179, 1.442695
    %v1181 = vpow.pop %v1180
    %v1182 = vadd.f32 %v1181, 1.0
    %v1183 = vrcp.pop %v1182
    %v1184 = vmul.f32 1.0, %v1183
    %v1185 = vxor.u32 %v1176, 2147483648
    %v1186 = vmul.f32 %v1185, 1.442695
    %v1187 = vpow.pop %v1186
    %v1188 = vadd.f32 %v1187, 1.0
    %v1189 = vrcp.pop %v1188
    %v1190 = vmul.f32 1.0, %v1189
    %v1191 = vxor.u32 %v1177, 2147483648
    %v1192 = vmul.f32 %v1191, 1.442695
    %v1193 = vpow.pop %v1192
    %v1194 = vadd.f32 %v1193, 1.0
    %v1195 = vrcp.pop %v1194
    %v1196 = vmul.f32 1.0, %v1195
    %v1197 = vtanh.pop %v1178
    %v1198 = vmul.f32 %v1190, %v1079
    %v1199 = vmul.f32 %v1184, %v1197
    %v1200 = vadd.f32 %v1198, %v1199
    %v1201 = vtanh.pop %v1200
    %v1202 = vmul.f32 %v1196, %v1201
    %s1203 = scalar_lea.vmem [#allocation2], 32
    %v1204 = vld [vmem:[%s1203] sm:$0xff]
    %v1205 = vld [vmem:[%s1203 + $0x8] sm:$0xff]
    %v1206 = vpack.c.bf16 %v1202, %v1202
    %v1208 = vsel %vm293, %v1206, 0
    %1210 = vmatprep.subr.bf16.mxu0 %v950
    %1211 = vmatpush1.bf16.msra.mxu0 %v949
    %1212 = vmatprep.subr.bf16.mxu0 %v954
    %1213 = vmatpush1.bf16.msra.mxu0 %v953
    %1214 = vmatprep.subr.bf16.mxu0 0
    %1215 = vmatpush1.bf16.msra.mxu0 0
    %1216 = vmatprep.subr.bf16.mxu0 0
    %1217 = vmatpush1.bf16.msra.mxu0 0
    %1218 = vmatprep.subr.bf16.mxu0 0
    %1219 = vmatpush1.bf16.msra.mxu0 0
    %1220 = vmatprep.subr.bf16.mxu0 0
    %1221 = vmatpush1.bf16.msra.mxu0 0
    %1222 = vmatprep.subr.bf16.mxu0 0
    %1223 = vmatpush1.bf16.msra.mxu0 0
    %1224 = vmatprep.subr.bf16.mxu0 0
    %1225 = vmatpush1.bf16.msra.mxu0 0
    %1226 = vmatprep.subr.bf16.mxu0 0
    %1227 = vmatpush1.bf16.msra.mxu0 0
    %1228 = vmatprep.subr.bf16.mxu0 0
    %1229 = vmatpush1.bf16.msra.mxu0 0
    %1230 = vmatprep.subr.bf16.mxu0 0
    %1231 = vmatpush1.bf16.msra.mxu0 0
    %1232 = vmatprep.subr.bf16.mxu0 0
    %1233 = vmatpush1.bf16.msra.mxu0 0
    %1234 = vmatprep.subr.bf16.mxu0 0
    %1235 = vmatpush1.bf16.msra.mxu0 0
    %1236 = vmatprep.subr.bf16.mxu0 0
    %1237 = vmatpush1.bf16.msra.mxu0 0
    %1238 = vmatprep.subr.bf16.mxu0 0
    %1239 = vmatpush1.bf16.msra.mxu0 0
    %1240 = vmatprep.subr.bf16.mxu0 0
    %1241 = vmatpush1.bf16.msra.mxu0 0
    %1242 = vmatprep.mubr.bf16.mxu0 0
    %1243 = vmatmul.mubr.bf16.gmra.mrb[0].mxu0 %v1208
    %v1244 = vpop.f32.mrb[0].mxu0
    %v1245 = vadd.f32 0.0, %v1244
    %v1246 = vpop.f32.mrb[0].mxu0
    %v1247 = vadd.f32 0.0, %v1246
    %v1248 = vpop.f32.mrb[0].mxu0
    %v1249 = vpop.f32.mrb[0].mxu0
    %1250 = vdwg.mxu0
    %1251 = vmatprep.subr.bf16.mxu0 %v952
    %1252 = vmatpush1.bf16.msra.mxu0 %v951
    %1253 = vmatprep.subr.bf16.mxu0 %v956
    %1254 = vmatpush1.bf16.msra.mxu0 %v955
    %1255 = vmatprep.subr.bf16.mxu0 0
    %1256 = vmatpush1.bf16.msra.mxu0 0
    %1257 = vmatprep.subr.bf16.mxu0 0
    %1258 = vmatpush1.bf16.msra.mxu0 0
    %1259 = vmatprep.subr.bf16.mxu0 0
    %1260 = vmatpush1.bf16.msra.mxu0 0
    %1261 = vmatprep.subr.bf16.mxu0 0
    %1262 = vmatpush1.bf16.msra.mxu0 0
    %1263 = vmatprep.subr.bf16.mxu0 0
    %1264 = vmatpush1.bf16.msra.mxu0 0
    %1265 = vmatprep.subr.bf16.mxu0 0
    %1266 = vmatpush1.bf16.msra.mxu0 0
    %1267 = vmatprep.subr.bf16.mxu0 0
    %1268 = vmatpush1.bf16.msra.mxu0 0
    %1269 = vmatprep.subr.bf16.mxu0 0
    %1270 = vmatpush1.bf16.msra.mxu0 0
    %1271 = vmatprep.subr.bf16.mxu0 0
    %1272 = vmatpush1.bf16.msra.mxu0 0
    %1273 = vmatprep.subr.bf16.mxu0 0
    %1274 = vmatpush1.bf16.msra.mxu0 0
    %1275 = vmatprep.subr.bf16.mxu0 0
    %1276 = vmatpush1.bf16.msra.mxu0 0
    %1277 = vmatprep.subr.bf16.mxu0 0
    %1278 = vmatpush1.bf16.msra.mxu0 0
    %1279 = vmatprep.subr.bf16.mxu0 0
    %1280 = vmatpush1.bf16.msra.mxu0 0
    %1281 = vmatprep.subr.bf16.mxu0 0
    %1282 = vmatpush1.bf16.msra.mxu0 0
    %1283 = vmatprep.mubr.bf16.mxu0 0
    %1284 = vmatmul.mubr.bf16.gmra.mrb[0].mxu0 %v1208
    %v1285 = vpop.f32.mrb[0].mxu0
    %v1286 = vadd.f32 0.0, %v1285
    %v1287 = vpop.f32.mrb[0].mxu0
    %v1288 = vadd.f32 0.0, %v1287
    %v1289 = vpop.f32.mrb[0].mxu0
    %v1290 = vpop.f32.mrb[0].mxu0
    %1291 = vdwg.mxu0
    %v1292 = vunpack.c.l.bf16 %v1204
    %v1293 = vunpack.c.h.bf16 %v1204
    %v1294 = vunpack.c.l.bf16 %v1205
    %v1295 = vunpack.c.h.bf16 %v1205
    %v1296 = vadd.f32 %v1292, %v1245
    %v1297 = vadd.f32 %v1293, %v1247
    %v1298 = vadd.f32 %v1294, %v1286
    %v1299 = vadd.f32 %v1295, %v1288
    %v1300 = vxor.u32 %v1296, 2147483648
    %v1301 = vmul.f32 %v1300, 1.442695
    %v1302 = vpow.pop %v1301
    %v1303 = vadd.f32 %v1302, 1.0
    %v1304 = vrcp.pop %v1303
    %v1305 = vmul.f32 1.0, %v1304
    %v1306 = vxor.u32 %v1297, 2147483648
    %v1307 = vmul.f32 %v1306, 1.442695
    %v1308 = vpow.pop %v1307
    %v1309 = vadd.f32 %v1308, 1.0
    %v1310 = vrcp.pop %v1309
    %v1311 = vmul.f32 1.0, %v1310
    %v1312 = vxor.u32 %v1298, 2147483648
    %v1313 = vmul.f32 %v1312, 1.442695
    %v1314 = vpow.pop %v1313
    %v1315 = vadd.f32 %v1314, 1.0
    %v1316 = vrcp.pop %v1315
    %v1317 = vmul.f32 1.0, %v1316
    %v1318 = vtanh.pop %v1299
    %v1319 = vmul.f32 %v1311, %v1200
    %v1320 = vmul.f32 %v1305, %v1318
    %v1321 = vadd.f32 %v1319, %v1320
    %v1322 = vtanh.pop %v1321
    %v1323 = vmul.f32 %v1317, %v1322
    %s1324 = scalar_lea.vmem [#allocation2], 48
    %v1325 = vld [vmem:[%s1324] sm:$0xff]
    %v1326 = vld [vmem:[%s1324 + $0x8] sm:$0xff]
    %v1327 = vpack.c.bf16 %v1323, %v1323
    %v1329 = vsel %vm293, %v1327, 0
    %1331 = vmatprep.subr.bf16.mxu0 %v950
    %1332 = vmatpush1.bf16.msra.mxu0 %v949
    %1333 = vmatprep.subr.bf16.mxu0 %v954
    %1334 = vmatpush1.bf16.msra.mxu0 %v953
    %1335 = vmatprep.subr.bf16.mxu0 0
    %1336 = vmatpush1.bf16.msra.mxu0 0
    %1337 = vmatprep.subr.bf16.mxu0 0
    %1338 = vmatpush1.bf16.msra.mxu0 0
    %1339 = vmatprep.subr.bf16.mxu0 0
    %1340 = vmatpush1.bf16.msra.mxu0 0
    %1341 = vmatprep.subr.bf16.mxu0 0
    %1342 = vmatpush1.bf16.msra.mxu0 0
    %1343 = vmatprep.subr.bf16.mxu0 0
    %1344 = vmatpush1.bf16.msra.mxu0 0
    %1345 = vmatprep.subr.bf16.mxu0 0
    %1346 = vmatpush1.bf16.msra.mxu0 0
    %1347 = vmatprep.subr.bf16.mxu0 0
    %1348 = vmatpush1.bf16.msra.mxu0 0
    %1349 = vmatprep.subr.bf16.mxu0 0
    %1350 = vmatpush1.bf16.msra.mxu0 0
    %1351 = vmatprep.subr.bf16.mxu0 0
    %1352 = vmatpush1.bf16.msra.mxu0 0
    %1353 = vmatprep.subr.bf16.mxu0 0
    %1354 = vmatpush1.bf16.msra.mxu0 0
    %1355 = vmatprep.subr.bf16.mxu0 0
    %1356 = vmatpush1.bf16.msra.mxu0 0
    %1357 = vmatprep.subr.bf16.mxu0 0
    %1358 = vmatpush1.bf16.msra.mxu0 0
    %1359 = vmatprep.subr.bf16.mxu0 0
    %1360 = vmatpush1.bf16.msra.mxu0 0
    %1361 = vmatprep.subr.bf16.mxu0 0
    %1362 = vmatpush1.bf16.msra.mxu0 0
    %1363 = vmatprep.mubr.bf16.mxu0 0
    %1364 = vmatmul.mubr.bf16.gmra.mrb[0].mxu0 %v1329
    %v1365 = vpop.f32.mrb[0].mxu0
    %v1366 = vadd.f32 0.0, %v1365
    %v1367 = vpop.f32.mrb[0].mxu0
    %v1368 = vadd.f32 0.0, %v1367
    %v1369 = vpop.f32.mrb[0].mxu0
    %v1370 = vpop.f32.mrb[0].mxu0
    %1371 = vdwg.mxu0
    %1372 = vmatprep.subr.bf16.mxu0 %v952
    %1373 = vmatpush1.bf16.msra.mxu0 %v951
    %1374 = vmatprep.subr.bf16.mxu0 %v956
    %1375 = vmatpush1.bf16.msra.mxu0 %v955
    %1376 = vmatprep.subr.bf16.mxu0 0
    %1377 = vmatpush1.bf16.msra.mxu0 0
    %1378 = vmatprep.subr.bf16.mxu0 0
    %1379 = vmatpush1.bf16.msra.mxu0 0
    %1380 = vmatprep.subr.bf16.mxu0 0
    %1381 = vmatpush1.bf16.msra.mxu0 0
    %1382 = vmatprep.subr.bf16.mxu0 0
    %1383 = vmatpush1.bf16.msra.mxu0 0
    %1384 = vmatprep.subr.bf16.mxu0 0
    %1385 = vmatpush1.bf16.msra.mxu0 0
    %1386 = vmatprep.subr.bf16.mxu0 0
    %1387 = vmatpush1.bf16.msra.mxu0 0
    %1388 = vmatprep.subr.bf16.mxu0 0
    %1389 = vmatpush1.bf16.msra.mxu0 0
    %1390 = vmatprep.subr.bf16.mxu0 0
    %1391 = vmatpush1.bf16.msra.mxu0 0
    %1392 = vmatprep.subr.bf16.mxu0 0
    %1393 = vmatpush1.bf16.msra.mxu0 0
    %1394 = vmatprep.subr.bf16.mxu0 0
    %1395 = vmatpush1.bf16.msra.mxu0 0
    %1396 = vmatprep.subr.bf16.mxu0 0
    %1397 = vmatpush1.bf16.msra.mxu0 0
    %1398 = vmatprep.subr.bf16.mxu0 0
    %1399 = vmatpush1.bf16.msra.mxu0 0
    %1400 = vmatprep.subr.bf16.mxu0 0
    %1401 = vmatpush1.bf16.msra.mxu0 0
    %1402 = vmatprep.subr.bf16.mxu0 0
    %1403 = vmatpush1.bf16.msra.mxu0 0
    %1404 = vmatprep.mubr.bf16.mxu0 0
    %1405 = vmatmul.mubr.bf16.gmra.mrb[0].mxu0 %v1329
    %v1406 = vpop.f32.mrb[0].mxu0
    %v1407 = vadd.f32 0.0, %v1406
    %v1408 = vpop.f32.mrb[0].mxu0
    %v1409 = vadd.f32 0.0, %v1408
    %v1410 = vpop.f32.mrb[0].mxu0
    %v1411 = vpop.f32.mrb[0].mxu0
    %1412 = vdwg.mxu0
    %v1413 = vunpack.c.l.bf16 %v1325
    %v1414 = vunpack.c.h.bf16 %v1325
    %v1415 = vunpack.c.l.bf16 %v1326
    %v1416 = vunpack.c.h.bf16 %v1326
    %v1417 = vadd.f32 %v1413, %v1366
    %v1418 = vadd.f32 %v1414, %v1368
    %v1419 = vadd.f32 %v1415, %v1407
    %v1420 = vadd.f32 %v1416, %v1409
    %v1421 = vxor.u32 %v1417, 2147483648
    %v1422 = vmul.f32 %v1421, 1.442695
    %v1423 = vpow.pop %v1422
    %v1424 = vadd.f32 %v1423, 1.0
    %v1425 = vrcp.pop %v1424
    %v1426 = vmul.f32 1.0, %v1425
    %v1427 = vxor.u32 %v1418, 2147483648
    %v1428 = vmul.f32 %v1427, 1.442695
    %v1429 = vpow.pop %v1428
    %v1430 = vadd.f32 %v1429, 1.0
    %v1431 = vrcp.pop %v1430
    %v1432 = vmul.f32 1.0, %v1431
    %v1433 = vxor.u32 %v1419, 2147483648
    %v1434 = vmul.f32 %v1433, 1.442695
    %v1435 = vpow.pop %v1434
    %v1436 = vadd.f32 %v1435, 1.0
    %v1437 = vrcp.pop %v1436
    %v1438 = vmul.f32 1.0, %v1437
    %v1439 = vtanh.pop %v1420
    %v1440 = vmul.f32 %v1432, %v1321
    %v1441 = vmul.f32 %v1426, %v1439
    %v1442 = vadd.f32 %v1440, %v1441
    %v1443 = vtanh.pop %v1442
    %v1444 = vmul.f32 %v1438, %v1443
    %s1445 = scalar_lea.vmem [#allocation2], 64
    %v1446 = vld [vmem:[%s1445] sm:$0xff]
    %v1447 = vld [vmem:[%s1445 + $0x8] sm:$0xff]
    %v1448 = vpack.c.bf16 %v1444, %v1444
    %v1450 = vsel %vm293, %v1448, 0
    %1452 = vmatprep.subr.bf16.mxu0 %v950
    %1453 = vmatpush1.bf16.msra.mxu0 %v949
    %1454 = vmatprep.subr.bf16.mxu0 %v954
    %1455 = vmatpush1.bf16.msra.mxu0 %v953
    %1456 = vmatprep.subr.bf16.mxu0 0
    %1457 = vmatpush1.bf16.msra.mxu0 0
    %1458 = vmatprep.subr.bf16.mxu0 0
    %1459 = vmatpush1.bf16.msra.mxu0 0
    %1460 = vmatprep.subr.bf16.mxu0 0
    %1461 = vmatpush1.bf16.msra.mxu0 0
    %1462 = vmatprep.subr.bf16.mxu0 0
    %1463 = vmatpush1.bf16.msra.mxu0 0
    %1464 = vmatprep.subr.bf16.mxu0 0
    %1465 = vmatpush1.bf16.msra.mxu0 0
    %1466 = vmatprep.subr.bf16.mxu0 0
    %1467 = vmatpush1.bf16.msra.mxu0 0
    %1468 = vmatprep.subr.bf16.mxu0 0
    %1469 = vmatpush1.bf16.msra.mxu0 0
    %1470 = vmatprep.subr.bf16.mxu0 0
    %1471 = vmatpush1.bf16.msra.mxu0 0
    %1472 = vmatprep.subr.bf16.mxu0 0
    %1473 = vmatpush1.bf16.msra.mxu0 0
    %1474 = vmatprep.subr.bf16.mxu0 0
    %1475 = vmatpush1.bf16.msra.mxu0 0
    %1476 = vmatprep.subr.bf16.mxu0 0
    %1477 = vmatpush1.bf16.msra.mxu0 0
    %1478 = vmatprep.subr.bf16.mxu0 0
    %1479 = vmatpush1.bf16.msra.mxu0 0
    %1480 = vmatprep.subr.bf16.mxu0 0
    %1481 = vmatpush1.bf16.msra.mxu0 0
    %1482 = vmatprep.subr.bf16.mxu0 0
    %1483 = vmatpush1.bf16.msra.mxu0 0
    %1484 = vmatprep.mubr.bf16.mxu0 0
    %1485 = vmatmul.mubr.bf16.gmra.mrb[0].mxu0 %v1450
    %v1486 = vpop.f32.mrb[0].mxu0
    %v1487 = vadd.f32 0.0, %v1486
    %v1488 = vpop.f32.mrb[0].mxu0
    %v1489 = vadd.f32 0.0, %v1488
    %v1490 = vpop.f32.mrb[0].mxu0
    %v1491 = vpop.f32.mrb[0].mxu0
    %1492 = vdwg.mxu0
    %1493 = vmatprep.subr.bf16.mxu0 %v952
    %1494 = vmatpush1.bf16.msra.mxu0 %v951
    %1495 = vmatprep.subr.bf16.mxu0 %v956
    %1496 = vmatpush1.bf16.msra.mxu0 %v955
    %1497 = vmatprep.subr.bf16.mxu0 0
    %1498 = vmatpush1.bf16.msra.mxu0 0
    %1499 = vmatprep.subr.bf16.mxu0 0
    %1500 = vmatpush1.bf16.msra.mxu0 0
    %1501 = vmatprep.subr.bf16.mxu0 0
    %1502 = vmatpush1.bf16.msra.mxu0 0
    %1503 = vmatprep.subr.bf16.mxu0 0
    %1504 = vmatpush1.bf16.msra.mxu0 0
    %1505 = vmatprep.subr.bf16.mxu0 0
    %1506 = vmatpush1.bf16.msra.mxu0 0
    %1507 = vmatprep.subr.bf16.mxu0 0
    %1508 = vmatpush1.bf16.msra.mxu0 0
    %1509 = vmatprep.subr.bf16.mxu0 0
    %1510 = vmatpush1.bf16.msra.mxu0 0
    %1511 = vmatprep.subr.bf16.mxu0 0
    %1512 = vmatpush1.bf16.msra.mxu0 0
    %1513 = vmatprep.subr.bf16.mxu0 0
    %1514 = vmatpush1.bf16.msra.mxu0 0
    %1515 = vmatprep.subr.bf16.mxu0 0
    %1516 = vmatpush1.bf16.msra.mxu0 0
    %1517 = vmatprep.subr.bf16.mxu0 0
    %1518 = vmatpush1.bf16.msra.mxu0 0
    %1519 = vmatprep.subr.bf16.mxu0 0
    %1520 = vmatpush1.bf16.msra.mxu0 0
    %1521 = vmatprep.subr.bf16.mxu0 0
    %1522 = vmatpush1.bf16.msra.mxu0 0
    %1523 = vmatprep.subr.bf16.mxu0 0
    %1524 = vmatpush1.bf16.msra.mxu0 0
    %1525 = vmatprep.mubr.bf16.mxu0 0
    %1526 = vmatmul.mubr.bf16.gmra.mrb[0].mxu0 %v1450
    %v1527 = vpop.f32.mrb[0].mxu0
    %v1528 = vadd.f32 0.0, %v1527
    %v1529 = vpop.f32.mrb[0].mxu0
    %v1530 = vadd.f32 0.0, %v1529
    %v1531 = vpop.f32.mrb[0].mxu0
    %v1532 = vpop.f32.mrb[0].mxu0
    %1533 = vdwg.mxu0
    %v1534 = vunpack.c.l.bf16 %v1446
    %v1535 = vunpack.c.h.bf16 %v1446
    %v1536 = vunpack.c.l.bf16 %v1447
    %v1537 = vunpack.c.h.bf16 %v1447
    %v1538 = vadd.f32 %v1534, %v1487
    %v1539 = vadd.f32 %v1535, %v1489
    %v1540 = vadd.f32 %v1536, %v1528
    %v1541 = vadd.f32 %v1537, %v1530
    %v1542 = vxor.u32 %v1538, 2147483648
    %v1543 = vmul.f32 %v1542, 1.442695
    %v1544 = vpow.pop %v1543
    %v1545 = vadd.f32 %v1544, 1.0
    %v1546 = vrcp.pop %v1545
    %v1547 = vmul.f32 1.0, %v1546
    %v1548 = vxor.u32 %v1539, 2147483648
    %v1549 = vmul.f32 %v1548, 1.442695
    %v1550 = vpow.pop %v1549
    %v1551 = vadd.f32 %v1550, 1.0
    %v1552 = vrcp.pop %v1551
    %v1553 = vmul.f32 1.0, %v1552
    %v1554 = vxor.u32 %v1540, 2147483648
    %v1555 = vmul.f32 %v1554, 1.442695
    %v1556 = vpow.pop %v1555
    %v1557 = vadd.f32 %v1556, 1.0
    %v1558 = vrcp.pop %v1557
    %v1559 = vmul.f32 1.0, %v1558
    %v1560 = vtanh.pop %v1541
    %v1561 = vmul.f32 %v1553, %v1442
    %v1562 = vmul.f32 %v1547, %v1560
    %v1563 = vadd.f32 %v1561, %v1562
    %v1564 = vtanh.pop %v1563
    %v1565 = vmul.f32 %v1559, %v1564
    %s1566 = scalar_lea.vmem [#allocation2], 80
    %v1567 = vld [vmem:[%s1566] sm:$0xff]
    %v1568 = vld [vmem:[%s1566 + $0x8] sm:$0xff]
    %v1569 = vpack.c.bf16 %v1565, %v1565
    %v1571 = vsel %vm293, %v1569, 0
    %1573 = vmatprep.subr.bf16.mxu0 %v950
    %1574 = vmatpush1.bf16.msra.mxu0 %v949
    %1575 = vmatprep.subr.bf16.mxu0 %v954
    %1576 = vmatpush1.bf16.msra.mxu0 %v953
    %1577 = vmatprep.subr.bf16.mxu0 0
    %1578 = vmatpush1.bf16.msra.mxu0 0
    %1579 = vmatprep.subr.bf16.mxu0 0
    %1580 = vmatpush1.bf16.msra.mxu0 0
    %1581 = vmatprep.subr.bf16.mxu0 0
    %1582 = vmatpush1.bf16.msra.mxu0 0
    %1583 = vmatprep.subr.bf16.mxu0 0
    %1584 = vmatpush1.bf16.msra.mxu0 0
    %1585 = vmatprep.subr.bf16.mxu0 0
    %1586 = vmatpush1.bf16.msra.mxu0 0
    %1587 = vmatprep.subr.bf16.mxu0 0
    %1588 = vmatpush1.bf16.msra.mxu0 0
    %1589 = vmatprep.subr.bf16.mxu0 0
    %1590 = vmatpush1.bf16.msra.mxu0 0
    %1591 = vmatprep.subr.bf16.mxu0 0
    %1592 = vmatpush1.bf16.msra.mxu0 0
    %1593 = vmatprep.subr.bf16.mxu0 0
    %1594 = vmatpush1.bf16.msra.mxu0 0
    %1595 = vmatprep.subr.bf16.mxu0 0
    %1596 = vmatpush1.bf16.msra.mxu0 0
    %1597 = vmatprep.subr.bf16.mxu0 0
    %1598 = vmatpush1.bf16.msra.mxu0 0
    %1599 = vmatprep.subr.bf16.mxu0 0
    %1600 = vmatpush1.bf16.msra.mxu0 0
    %1601 = vmatprep.subr.bf16.mxu0 0
    %1602 = vmatpush1.bf16.msra.mxu0 0
    %1603 = vmatprep.subr.bf16.mxu0 0
    %1604 = vmatpush1.bf16.msra.mxu0 0
    %1605 = vmatprep.mubr.bf16.mxu0 0
    %1606 = vmatmul.mubr.bf16.gmra.mrb[0].mxu0 %v1571
    %v1607 = vpop.f32.mrb[0].mxu0
    %v1608 = vadd.f32 0.0, %v1607
    %v1609 = vpop.f32.mrb[0].mxu0
    %v1610 = vadd.f32 0.0, %v1609
    %v1611 = vpop.f32.mrb[0].mxu0
    %v1612 = vpop.f32.mrb[0].mxu0
    %1613 = vdwg.mxu0
    %1614 = vmatprep.subr.bf16.mxu0 %v952
    %1615 = vmatpush1.bf16.msra.mxu0 %v951
    %1616 = vmatprep.subr.bf16.mxu0 %v956
    %1617 = vmatpush1.bf16.msra.mxu0 %v955
    %1618 = vmatprep.subr.bf16.mxu0 0
    %1619 = vmatpush1.bf16.msra.mxu0 0
    %1620 = vmatprep.subr.bf16.mxu0 0
    %1621 = vmatpush1.bf16.msra.mxu0 0
    %1622 = vmatprep.subr.bf16.mxu0 0
    %1623 = vmatpush1.bf16.msra.mxu0 0
    %1624 = vmatprep.subr.bf16.mxu0 0
    %1625 = vmatpush1.bf16.msra.mxu0 0
    %1626 = vmatprep.subr.bf16.mxu0 0
    %1627 = vmatpush1.bf16.msra.mxu0 0
    %1628 = vmatprep.subr.bf16.mxu0 0
    %1629 = vmatpush1.bf16.msra.mxu0 0
    %1630 = vmatprep.subr.bf16.mxu0 0
    %1631 = vmatpush1.bf16.msra.mxu0 0
    %1632 = vmatprep.subr.bf16.mxu0 0
    %1633 = vmatpush1.bf16.msra.mxu0 0
    %1634 = vmatprep.subr.bf16.mxu0 0
    %1635 = vmatpush1.bf16.msra.mxu0 0
    %1636 = vmatprep.subr.bf16.mxu0 0
    %1637 = vmatpush1.bf16.msra.mxu0 0
    %1638 = vmatprep.subr.bf16.mxu0 0
    %1639 = vmatpush1.bf16.msra.mxu0 0
    %1640 = vmatprep.subr.bf16.mxu0 0
    %1641 = vmatpush1.bf16.msra.mxu0 0
    %1642 = vmatprep.subr.bf16.mxu0 0
    %1643 = vmatpush1.bf16.msra.mxu0 0
    %1644 = vmatprep.subr.bf16.mxu0 0
    %1645 = vmatpush1.bf16.msra.mxu0 0
    %1646 = vmatprep.mubr.bf16.mxu0 0
    %1647 = vmatmul.mubr.bf16.gmra.mrb[0].mxu0 %v1571
    %v1648 = vpop.f32.mrb[0].mxu0
    %v1649 = vadd.f32 0.0, %v1648
    %v1650 = vpop.f32.mrb[0].mxu0
    %v1651 = vadd.f32 0.0, %v1650
    %v1652 = vpop.f32.mrb[0].mxu0
    %v1653 = vpop.f32.mrb[0].mxu0
    %1654 = vdwg.mxu0
    %v1655 = vunpack.c.l.bf16 %v1567
    %v1656 = vunpack.c.h.bf16 %v1567
    %v1657 = vunpack.c.l.bf16 %v1568
    %v1658 = vunpack.c.h.bf16 %v1568
    %v1659 = vadd.f32 %v1655, %v1608
    %v1660 = vadd.f32 %v1656, %v1610
    %v1661 = vadd.f32 %v1657, %v1649
    %v1662 = vadd.f32 %v1658, %v1651
    %v1663 = vxor.u32 %v1659, 2147483648
    %v1664 = vmul.f32 %v1663, 1.442695
    %v1665 = vpow.pop %v1664
    %v1666 = vadd.f32 %v1665, 1.0
    %v1667 = vrcp.pop %v1666
    %v1668 = vmul.f32 1.0, %v1667
    %v1669 = vxor.u32 %v1660, 2147483648
    %v1670 = vmul.f32 %v1669, 1.442695
    %v1671 = vpow.pop %v1670
    %v1672 = vadd.f32 %v1671, 1.0
    %v1673 = vrcp.pop %v1672
    %v1674 = vmul.f32 1.0, %v1673
    %v1675 = vxor.u32 %v1661, 2147483648
    %v1676 = vmul.f32 %v1675, 1.442695
    %v1677 = vpow.pop %v1676
    %v1678 = vadd.f32 %v1677, 1.0
    %v1679 = vrcp.pop %v1678
    %v1680 = vmul.f32 1.0, %v1679
    %v1681 = vtanh.pop %v1662
    %v1682 = vmul.f32 %v1674, %v1563
    %v1683 = vmul.f32 %v1668, %v1681
    %v1684 = vadd.f32 %v1682, %v1683
    %v1685 = vtanh.pop %v1684
    %v1686 = vmul.f32 %v1680, %v1685
    %s1687 = scalar_lea.vmem [#allocation2], 96
    %v1688 = vld [vmem:[%s1687] sm:$0xff]
    %v1689 = vld [vmem:[%s1687 + $0x8] sm:$0xff]
    %v1690 = vpack.c.bf16 %v1686, %v1686
    %v1692 = vsel %vm293, %v1690, 0
    %1694 = vmatprep.subr.bf16.mxu0 %v950
    %1695 = vmatpush1.bf16.msra.mxu0 %v949
    %1696 = vmatprep.subr.bf16.mxu0 %v954
    %1697 = vmatpush1.bf16.msra.mxu0 %v953
    %1698 = vmatprep.subr.bf16.mxu0 0
    %1699 = vmatpush1.bf16.msra.mxu0 0
    %1700 = vmatprep.subr.bf16.mxu0 0
    %1701 = vmatpush1.bf16.msra.mxu0 0
    %1702 = vmatprep.subr.bf16.mxu0 0
    %1703 = vmatpush1.bf16.msra.mxu0 0
    %1704 = vmatprep.subr.bf16.mxu0 0
    %1705 = vmatpush1.bf16.msra.mxu0 0
    %1706 = vmatprep.subr.bf16.mxu0 0
    %1707 = vmatpush1.bf16.msra.mxu0 0
    %1708 = vmatprep.subr.bf16.mxu0 0
    %1709 = vmatpush1.bf16.msra.mxu0 0
    %1710 = vmatprep.subr.bf16.mxu0 0
    %1711 = vmatpush1.bf16.msra.mxu0 0
    %1712 = vmatprep.subr.bf16.mxu0 0
    %1713 = vmatpush1.bf16.msra.mxu0 0
    %1714 = vmatprep.subr.bf16.mxu0 0
    %1715 = vmatpush1.bf16.msra.mxu0 0
    %1716 = vmatprep.subr.bf16.mxu0 0
    %1717 = vmatpush1.bf16.msra.mxu0 0
    %1718 = vmatprep.subr.bf16.mxu0 0
    %1719 = vmatpush1.bf16.msra.mxu0 0
    %1720 = vmatprep.subr.bf16.mxu0 0
    %1721 = vmatpush1.bf16.msra.mxu0 0
    %1722 = vmatprep.subr.bf16.mxu0 0
    %1723 = vmatpush1.bf16.msra.mxu0 0
    %1724 = vmatprep.subr.bf16.mxu0 0
    %1725 = vmatpush1.bf16.msra.mxu0 0
    %1726 = vmatprep.mubr.bf16.mxu0 0
    %1727 = vmatmul.mubr.bf16.gmra.mrb[0].mxu0 %v1692
    %v1728 = vpop.f32.mrb[0].mxu0
    %v1729 = vadd.f32 0.0, %v1728
    %v1730 = vpop.f32.mrb[0].mxu0
    %v1731 = vadd.f32 0.0, %v1730
    %v1732 = vpop.f32.mrb[0].mxu0
    %v1733 = vpop.f32.mrb[0].mxu0
    %1734 = vdwg.mxu0
    %1735 = vmatprep.subr.bf16.mxu0 %v952
    %1736 = vmatpush1.bf16.msra.mxu0 %v951
    %1737 = vmatprep.subr.bf16.mxu0 %v956
    %1738 = vmatpush1.bf16.msra.mxu0 %v955
    %1739 = vmatprep.subr.bf16.mxu0 0
    %1740 = vmatpush1.bf16.msra.mxu0 0
    %1741 = vmatprep.subr.bf16.mxu0 0
    %1742 = vmatpush1.bf16.msra.mxu0 0
    %1743 = vmatprep.subr.bf16.mxu0 0
    %1744 = vmatpush1.bf16.msra.mxu0 0
    %1745 = vmatprep.subr.bf16.mxu0 0
    %1746 = vmatpush1.bf16.msra.mxu0 0
    %1747 = vmatprep.subr.bf16.mxu0 0
    %1748 = vmatpush1.bf16.msra.mxu0 0
    %1749 = vmatprep.subr.bf16.mxu0 0
    %1750 = vmatpush1.bf16.msra.mxu0 0
    %1751 = vmatprep.subr.bf16.mxu0 0
    %1752 = vmatpush1.bf16.msra.mxu0 0
    %1753 = vmatprep.subr.bf16.mxu0 0
    %1754 = vmatpush1.bf16.msra.mxu0 0
    %1755 = vmatprep.subr.bf16.mxu0 0
    %1756 = vmatpush1.bf16.msra.mxu0 0
    %1757 = vmatprep.subr.bf16.mxu0 0
    %1758 = vmatpush1.bf16.msra.mxu0 0
    %1759 = vmatprep.subr.bf16.mxu0 0
    %1760 = vmatpush1.bf16.msra.mxu0 0
    %1761 = vmatprep.subr.bf16.mxu0 0
    %1762 = vmatpush1.bf16.msra.mxu0 0
    %1763 = vmatprep.subr.bf16.mxu0 0
    %1764 = vmatpush1.bf16.msra.mxu0 0
    %1765 = vmatprep.subr.bf16.mxu0 0
    %1766 = vmatpush1.bf16.msra.mxu0 0
    %1767 = vmatprep.mubr.bf16.mxu0 0
    %1768 = vmatmul.mubr.bf16.gmra.mrb[0].mxu0 %v1692
    %v1769 = vpop.f32.mrb[0].mxu0
    %v1770 = vadd.f32 0.0, %v1769
    %v1771 = vpop.f32.mrb[0].mxu0
    %v1772 = vadd.f32 0.0, %v1771
    %v1773 = vpop.f32.mrb[0].mxu0
    %v1774 = vpop.f32.mrb[0].mxu0
    %1775 = vdwg.mxu0
    %v1776 = vunpack.c.l.bf16 %v1688
    %v1777 = vunpack.c.h.bf16 %v1688
    %v1778 = vunpack.c.l.bf16 %v1689
    %v1779 = vunpack.c.h.bf16 %v1689
    %v1780 = vadd.f32 %v1776, %v1729
    %v1781 = vadd.f32 %v1777, %v1731
    %v1782 = vadd.f32 %v1778, %v1770
    %v1783 = vadd.f32 %v1779, %v1772
    %v1784 = vxor.u32 %v1780, 2147483648
    %v1785 = vmul.f32 %v1784, 1.442695
    %v1786 = vpow.pop %v1785
    %v1787 = vadd.f32 %v1786, 1.0
    %v1788 = vrcp.pop %v1787
    %v1789 = vmul.f32 1.0, %v1788
    %v1790 = vxor.u32 %v1781, 2147483648
    %v1791 = vmul.f32 %v1790, 1.442695
    %v1792 = vpow.pop %v1791
    %v1793 = vadd.f32 %v1792, 1.0
    %v1794 = vrcp.pop %v1793
    %v1795 = vmul.f32 1.0, %v1794
    %v1796 = vxor.u32 %v1782, 2147483648
    %v1797 = vmul.f32 %v1796, 1.442695
    %v1798 = vpow.pop %v1797
    %v1799 = vadd.f32 %v1798, 1.0
    %v1800 = vrcp.pop %v1799
    %v1801 = vmul.f32 1.0, %v1800
    %v1802 = vtanh.pop %v1783
    %v1803 = vmul.f32 %v1795, %v1684
    %v1804 = vmul.f32 %v1789, %v1802
    %v1805 = vadd.f32 %v1803, %v1804
    %v1806 = vtanh.pop %v1805
    %v1807 = vmul.f32 %v1801, %v1806
    %s1808 = scalar_lea.vmem [#allocation2], 112
    %v1809 = vld [vmem:[%s1808] sm:$0xff]
    %v1810 = vld [vmem:[%s1808 + $0x8] sm:$0xff]
    %v1811 = vpack.c.bf16 %v1807, %v1807
    %v1813 = vsel %vm293, %v1811, 0
    %1815 = vmatprep.subr.bf16.mxu0 %v950
    %1816 = vmatpush1.bf16.msra.mxu0 %v949
    %1817 = vmatprep.subr.bf16.mxu0 %v954
    %1818 = vmatpush1.bf16.msra.mxu0 %v953
    %1819 = vmatprep.subr.bf16.mxu0 0
    %1820 = vmatpush1.bf16.msra.mxu0 0
    %1821 = vmatprep.subr.bf16.mxu0 0
    %1822 = vmatpush1.bf16.msra.mxu0 0
    %1823 = vmatprep.subr.bf16.mxu0 0
    %1824 = vmatpush1.bf16.msra.mxu0 0
    %1825 = vmatprep.subr.bf16.mxu0 0
    %1826 = vmatpush1.bf16.msra.mxu0 0
    %1827 = vmatprep.subr.bf16.mxu0 0
    %1828 = vmatpush1.bf16.msra.mxu0 0
    %1829 = vmatprep.subr.bf16.mxu0 0
    %1830 = vmatpush1.bf16.msra.mxu0 0
    %1831 = vmatprep.subr.bf16.mxu0 0
    %1832 = vmatpush1.bf16.msra.mxu0 0
    %1833 = vmatprep.subr.bf16.mxu0 0
    %1834 = vmatpush1.bf16.msra.mxu0 0
    %1835 = vmatprep.subr.bf16.mxu0 0
    %1836 = vmatpush1.bf16.msra.mxu0 0
    %1837 = vmatprep.subr.bf16.mxu0 0
    %1838 = vmatpush1.bf16.msra.mxu0 0
    %1839 = vmatprep.subr.bf16.mxu0 0
    %1840 = vmatpush1.bf16.msra.mxu0 0
    %1841 = vmatprep.subr.bf16.mxu0 0
    %1842 = vmatpush1.bf16.msra.mxu0 0
    %1843 = vmatprep.subr.bf16.mxu0 0
    %1844 = vmatpush1.bf16.msra.mxu0 0
    %1845 = vmatprep.subr.bf16.mxu0 0
    %1846 = vmatpush1.bf16.msra.mxu0 0
    %1847 = vmatprep.mubr.bf16.mxu0 0
    %1848 = vmatmul.mubr.bf16.gmra.mrb[0].mxu0 %v1813
    %v1849 = vpop.f32.mrb[0].mxu0
    %v1850 = vadd.f32 0.0, %v1849
    %v1851 = vpop.f32.mrb[0].mxu0
    %v1852 = vadd.f32 0.0, %v1851
    %v1853 = vpop.f32.mrb[0].mxu0
    %v1854 = vpop.f32.mrb[0].mxu0
    %1855 = vdwg.mxu0
    %1856 = vmatprep.subr.bf16.mxu0 %v952
    %1857 = vmatpush1.bf16.msra.mxu0 %v951
    %1858 = vmatprep.subr.bf16.mxu0 %v956
    %1859 = vmatpush1.bf16.msra.mxu0 %v955
    %1860 = vmatprep.subr.bf16.mxu0 0
    %1861 = vmatpush1.bf16.msra.mxu0 0
    %1862 = vmatprep.subr.bf16.mxu0 0
    %1863 = vmatpush1.bf16.msra.mxu0 0
    %1864 = vmatprep.subr.bf16.mxu0 0
    %1865 = vmatpush1.bf16.msra.mxu0 0
    %1866 = vmatprep.subr.bf16.mxu0 0
    %1867 = vmatpush1.bf16.msra.mxu0 0
    %1868 = vmatprep.subr.bf16.mxu0 0
    %1869 = vmatpush1.bf16.msra.mxu0 0
    %1870 = vmatprep.subr.bf16.mxu0 0
    %1871 = vmatpush1.bf16.msra.mxu0 0
    %1872 = vmatprep.subr.bf16.mxu0 0
    %1873 = vmatpush1.bf16.msra.mxu0 0
    %1874 = vmatprep.subr.bf16.mxu0 0
    %1875 = vmatpush1.bf16.msra.mxu0 0
    %1876 = vmatprep.subr.bf16.mxu0 0
    %1877 = vmatpush1.bf16.msra.mxu0 0
    %1878 = vmatprep.subr.bf16.mxu0 0
    %1879 = vmatpush1.bf16.msra.mxu0 0
    %1880 = vmatprep.subr.bf16.mxu0 0
    %1881 = vmatpush1.bf16.msra.mxu0 0
    %1882 = vmatprep.subr.bf16.mxu0 0
    %1883 = vmatpush1.bf16.msra.mxu0 0
    %1884 = vmatprep.subr.bf16.mxu0 0
    %1885 = vmatpush1.bf16.msra.mxu0 0
    %1886 = vmatprep.subr.bf16.mxu0 0
    %1887 = vmatpush1.bf16.msra.mxu0 0
    %1888 = vmatprep.mubr.bf16.mxu0 0
    %1889 = vmatmul.mubr.bf16.gmra.mrb[0].mxu0 %v1813
    %v1890 = vpop.f32.mrb[0].mxu0
    %v1891 = vadd.f32 0.0, %v1890
    %v1892 = vpop.f32.mrb[0].mxu0
    %v1893 = vadd.f32 0.0, %v1892
    %v1894 = vpop.f32.mrb[0].mxu0
    %v1895 = vpop.f32.mrb[0].mxu0
    %1896 = vdwg.mxu0
    %v1897 = vunpack.c.l.bf16 %v1809
    %v1898 = vunpack.c.h.bf16 %v1809
    %v1899 = vunpack.c.l.bf16 %v1810
    %v1900 = vunpack.c.h.bf16 %v1810
    %v1901 = vadd.f32 %v1897, %v1850
    %v1902 = vadd.f32 %v1898, %v1852
    %v1903 = vadd.f32 %v1899, %v1891
    %v1904 = vadd.f32 %v1900, %v1893
    %v1905 = vxor.u32 %v1901, 2147483648
    %v1906 = vmul.f32 %v1905, 1.442695
    %v1907 = vpow.pop %v1906
    %v1908 = vadd.f32 %v1907, 1.0
    %v1909 = vrcp.pop %v1908
    %v1910 = vmul.f32 1.0, %v1909
    %v1911 = vxor.u32 %v1902, 2147483648
    %v1912 = vmul.f32 %v1911, 1.442695
    %v1913 = vpow.pop %v1912
    %v1914 = vadd.f32 %v1913, 1.0
    %v1915 = vrcp.pop %v1914
    %v1916 = vmul.f32 1.0, %v1915
    %v1917 = vxor.u32 %v1903, 2147483648
    %v1918 = vmul.f32 %v1917, 1.442695
    %v1919 = vpow.pop %v1918
    %v1920 = vadd.f32 %v1919, 1.0
    %v1921 = vrcp.pop %v1920
    %v1922 = vmul.f32 1.0, %v1921
    %v1923 = vtanh.pop %v1904
    %v1924 = vmul.f32 %v1916, %v1805
    %v1925 = vmul.f32 %v1910, %v1923
    %v1926 = vadd.f32 %v1924, %v1925
    %v1927 = vtanh.pop %v1926
    %v1928 = vmul.f32 %v1922, %v1927
    %v1929 = vld [vmem:[#allocation18] sm:$0xf]
    %s1930 = scalar_lea.vmem [#allocation3], 28
    %v1931 = vld [vmem:[%s1930] sm:$0xf]
    %v1932 = vld [vmem:[#allocation11] sm:$0xff]
    %v1933 = vld [vmem:[#allocation11 + $0x8] sm:$0xff]
    %v1934 = vld [vmem:[#allocation11 + $0x10] sm:$0xff]
    %v1935 = vld [vmem:[#allocation11 + $0x18] sm:$0xff]
    %v1936 = vld [vmem:[#allocation11 + $0x20] sm:$0xff]
    %v1937 = vld [vmem:[#allocation11 + $0x28] sm:$0xff]
    %v1938 = vld [vmem:[#allocation11 + $0x30] sm:$0xff]
    %v1939 = vld [vmem:[#allocation11 + $0x38] sm:$0xff]
    %v1948 = vunpack.c.l.b16 %v1932
    %v1949 = vunpack.c.h.b16 %v1932
    %v1950 = vunpack.c.l.b16 %v1933
    %v1951 = vunpack.c.h.b16 %v1933
    %v1952 = vunpack.c.l.b16 %v1934
    %v1953 = vunpack.c.h.b16 %v1934
    %v1954 = vunpack.c.l.b16 %v1935
    %v1955 = vunpack.c.h.b16 %v1935
    %v1956 = vunpack.c.l.b16 %v1936
    %v1957 = vunpack.c.h.b16 %v1936
    %v1958 = vunpack.c.l.b16 %v1937
    %v1959 = vunpack.c.h.b16 %v1937
    %v1960 = vunpack.c.l.b16 %v1938
    %v1961 = vunpack.c.h.b16 %v1938
    %v1962 = vunpack.c.l.b16 %v1939
    %v1963 = vunpack.c.h.b16 %v1939
    %v1964 = vpack.c.b16 %v1952, %v1948
    %v1965 = vpack.c.b16 %v1953, %v1949
    %v1966 = vpack.c.b16 %v1954, %v1950
    %v1967 = vpack.c.b16 %v1955, %v1951
    %v1968 = vpack.c.b16 %v1960, %v1956
    %v1969 = vpack.c.b16 %v1961, %v1957
    %v1970 = vpack.c.b16 %v1962, %v1958
    %v1971 = vpack.c.b16 %v1963, %v1959
    %v1981 = vsel %vm293, %v1931, 0
    %1983 = vmatprep.subr.bf16.mxu0 %v1965
    %1984 = vmatpush1.bf16.msra.mxu0 %v1964
    %1985 = vmatprep.subr.bf16.mxu0 %v1969
    %1986 = vmatpush1.bf16.msra.mxu0 %v1968
    %1987 = vmatprep.subr.bf16.mxu0 0
    %1988 = vmatpush1.bf16.msra.mxu0 0
    %1989 = vmatprep.subr.bf16.mxu0 0
    %1990 = vmatpush1.bf16.msra.mxu0 0
    %1991 = vmatprep.subr.bf16.mxu0 0
    %1992 = vmatpush1.bf16.msra.mxu0 0
    %1993 = vmatprep.subr.bf16.mxu0 0
    %1994 = vmatpush1.bf16.msra.mxu0 0
    %1995 = vmatprep.subr.bf16.mxu0 0
    %1996 = vmatpush1.bf16.msra.mxu0 0
    %1997 = vmatprep.subr.bf16.mxu0 0
    %1998 = vmatpush1.bf16.msra.mxu0 0
    %1999 = vmatprep.subr.bf16.mxu0 0
    %2000 = vmatpush1.bf16.msra.mxu0 0
    %2001 = vmatprep.subr.bf16.mxu0 0
    %2002 = vmatpush1.bf16.msra.mxu0 0
    %2003 = vmatprep.subr.bf16.mxu0 0
    %2004 = vmatpush1.bf16.msra.mxu0 0
    %2005 = vmatprep.subr.bf16.mxu0 0
    %2006 = vmatpush1.bf16.msra.mxu0 0
    %2007 = vmatprep.subr.bf16.mxu0 0
    %2008 = vmatpush1.bf16.msra.mxu0 0
    %2009 = vmatprep.subr.bf16.mxu0 0
    %2010 = vmatpush1.bf16.msra.mxu0 0
    %2011 = vmatprep.subr.bf16.mxu0 0
    %2012 = vmatpush1.bf16.msra.mxu0 0
    %2013 = vmatprep.subr.bf16.mxu0 0
    %2014 = vmatpush1.bf16.msra.mxu0 0
    %2015 = vmatprep.mubr.bf16.mxu0 0
    %2016 = vmatmul.mubr.bf16.gmra.mrb[0].mxu0 %v1981
    %v2017 = vpop.f32.mrb[0].mxu0
    %v2018 = vadd.f32 0.0, %v2017
    %v2019 = vpop.f32.mrb[0].mxu0
    %v2020 = vadd.f32 0.0, %v2019
    %v2021 = vpop.f32.mrb[0].mxu0
    %v2022 = vpop.f32.mrb[0].mxu0
    %2023 = vdwg.mxu0
    %2024 = vmatprep.subr.bf16.mxu0 %v1967
    %2025 = vmatpush1.bf16.msra.mxu0 %v1966
    %2026 = vmatprep.subr.bf16.mxu0 %v1971
    %2027 = vmatpush1.bf16.msra.mxu0 %v1970
    %2028 = vmatprep.subr.bf16.mxu0 0
    %2029 = vmatpush1.bf16.msra.mxu0 0
    %2030 = vmatprep.subr.bf16.mxu0 0
    %2031 = vmatpush1.bf16.msra.mxu0 0
    %2032 = vmatprep.subr.bf16.mxu0 0
    %2033 = vmatpush1.bf16.msra.mxu0 0
    %2034 = vmatprep.subr.bf16.mxu0 0
    %2035 = vmatpush1.bf16.msra.mxu0 0
    %2036 = vmatprep.subr.bf16.mxu0 0
    %2037 = vmatpush1.bf16.msra.mxu0 0
    %2038 = vmatprep.subr.bf16.mxu0 0
    %2039 = vmatpush1.bf16.msra.mxu0 0
    %2040 = vmatprep.subr.bf16.mxu0 0
    %2041 = vmatpush1.bf16.msra.mxu0 0
    %2042 = vmatprep.subr.bf16.mxu0 0
    %2043 = vmatpush1.bf16.msra.mxu0 0
    %2044 = vmatprep.subr.bf16.mxu0 0
    %2045 = vmatpush1.bf16.msra.mxu0 0
    %2046 = vmatprep.subr.bf16.mxu0 0
    %2047 = vmatpush1.bf16.msra.mxu0 0
    %2048 = vmatprep.subr.bf16.mxu0 0
    %2049 = vmatpush1.bf16.msra.mxu0 0
    %2050 = vmatprep.subr.bf16.mxu0 0
    %2051 = vmatpush1.bf16.msra.mxu0 0
    %2052 = vmatprep.subr.bf16.mxu0 0
    %2053 = vmatpush1.bf16.msra.mxu0 0
    %2054 = vmatprep.subr.bf16.mxu0 0
    %2055 = vmatpush1.bf16.msra.mxu0 0
    %2056 = vmatprep.mubr.bf16.mxu0 0
    %2057 = vmatmul.mubr.bf16.gmra.mrb[0].mxu0 %v1981
    %v2058 = vpop.f32.mrb[0].mxu0
    %v2059 = vadd.f32 0.0, %v2058
    %v2060 = vpop.f32.mrb[0].mxu0
    %v2061 = vadd.f32 0.0, %v2060
    %v2062 = vpop.f32.mrb[0].mxu0
    %v2063 = vpop.f32.mrb[0].mxu0
    %2064 = vdwg.mxu0
    %v2066 = vlaneseq
    %v2067 = vshrl.u32 %v2066, 7
    %v2068 = vsub.s32 0, %v2067
    %v2069 = vrot.slane %v1929, %v2068
    %v2070 = vlaneseq
    %v2071 = vshrl.u32 %v2070, 7
    %v2072 = vsub.s32 1, %v2071
    %v2073 = vrot.slane %v1929, %v2072
    %v2074 = vlaneseq
    %v2075 = vshrl.u32 %v2074, 7
    %v2076 = vsub.s32 2, %v2075
    %v2077 = vrot.slane %v1929, %v2076
    %v2078 = vlaneseq
    %v2079 = vshrl.u32 %v2078, 7
    %v2080 = vsub.s32 3, %v2079
    %v2081 = vrot.slane %v1929, %v2080
    %v2086 = vadd.f32 %v2069, %v2018
    %v2087 = vadd.f32 %v2073, %v2020
    %v2088 = vadd.f32 %v2077, %v2059
    %v2089 = vadd.f32 %v2081, %v2061
    %s2090 = scalar_lea.vmem [#allocation6], 28
    %v2091 = vld [vmem:[%s2090] sm:$0xf]
    %v2092 = vld [vmem:[#allocation12] sm:$0xff]
    %v2093 = vld [vmem:[#allocation12 + $0x8] sm:$0xff]
    %v2094 = vld [vmem:[#allocation12 + $0x10] sm:$0xff]
    %v2095 = vld [vmem:[#allocation12 + $0x18] sm:$0xff]
    %v2096 = vld [vmem:[#allocation12 + $0x20] sm:$0xff]
    %v2097 = vld [vmem:[#allocation12 + $0x28] sm:$0xff]
    %v2098 = vld [vmem:[#allocation12 + $0x30] sm:$0xff]
    %v2099 = vld [vmem:[#allocation12 + $0x38] sm:$0xff]
    %v2108 = vunpack.c.l.b16 %v2092
    %v2109 = vunpack.c.h.b16 %v2092
    %v2110 = vunpack.c.l.b16 %v2093
    %v2111 = vunpack.c.h.b16 %v2093
    %v2112 = vunpack.c.l.b16 %v2094
    %v2113 = vunpack.c.h.b16 %v2094
    %v2114 = vunpack.c.l.b16 %v2095
    %v2115 = vunpack.c.h.b16 %v2095
    %v2116 = vunpack.c.l.b16 %v2096
    %v2117 = vunpack.c.h.b16 %v2096
    %v2118 = vunpack.c.l.b16 %v2097
    %v2119 = vunpack.c.h.b16 %v2097
    %v2120 = vunpack.c.l.b16 %v2098
    %v2121 = vunpack.c.h.b16 %v2098
    %v2122 = vunpack.c.l.b16 %v2099
    %v2123 = vunpack.c.h.b16 %v2099
    %v2124 = vpack.c.b16 %v2112, %v2108
    %v2125 = vpack.c.b16 %v2113, %v2109
    %v2126 = vpack.c.b16 %v2114, %v2110
    %v2127 = vpack.c.b16 %v2115, %v2111
    %v2128 = vpack.c.b16 %v2120, %v2116
    %v2129 = vpack.c.b16 %v2121, %v2117
    %v2130 = vpack.c.b16 %v2122, %v2118
    %v2131 = vpack.c.b16 %v2123, %v2119
    %v2141 = vsel %vm293, %v2091, 0
    %2143 = vmatprep.subr.bf16.mxu0 %v2125
    %2144 = vmatpush1.bf16.msra.mxu0 %v2124
    %2145 = vmatprep.subr.bf16.mxu0 %v2129
    %2146 = vmatpush1.bf16.msra.mxu0 %v2128
    %2147 = vmatprep.subr.bf16.mxu0 0
    %2148 = vmatpush1.bf16.msra.mxu0 0
    %2149 = vmatprep.subr.bf16.mxu0 0
    %2150 = vmatpush1.bf16.msra.mxu0 0
    %2151 = vmatprep.subr.bf16.mxu0 0
    %2152 = vmatpush1.bf16.msra.mxu0 0
    %2153 = vmatprep.subr.bf16.mxu0 0
    %2154 = vmatpush1.bf16.msra.mxu0 0
    %2155 = vmatprep.subr.bf16.mxu0 0
    %2156 = vmatpush1.bf16.msra.mxu0 0
    %2157 = vmatprep.subr.bf16.mxu0 0
    %2158 = vmatpush1.bf16.msra.mxu0 0
    %2159 = vmatprep.subr.bf16.mxu0 0
    %2160 = vmatpush1.bf16.msra.mxu0 0
    %2161 = vmatprep.subr.bf16.mxu0 0
    %2162 = vmatpush1.bf16.msra.mxu0 0
    %2163 = vmatprep.subr.bf16.mxu0 0
    %2164 = vmatpush1.bf16.msra.mxu0 0
    %2165 = vmatprep.subr.bf16.mxu0 0
    %2166 = vmatpush1.bf16.msra.mxu0 0
    %2167 = vmatprep.subr.bf16.mxu0 0
    %2168 = vmatpush1.bf16.msra.mxu0 0
    %2169 = vmatprep.subr.bf16.mxu0 0
    %2170 = vmatpush1.bf16.msra.mxu0 0
    %2171 = vmatprep.subr.bf16.mxu0 0
    %2172 = vmatpush1.bf16.msra.mxu0 0
    %2173 = vmatprep.subr.bf16.mxu0 0
    %2174 = vmatpush1.bf16.msra.mxu0 0
    %2175 = vmatprep.mubr.bf16.mxu0 0
    %2176 = vmatmul.mubr.bf16.gmra.mrb[0].mxu0 %v2141
    %v2177 = vpop.f32.mrb[0].mxu0
    %v2178 = vadd.f32 0.0, %v2177
    %v2179 = vpop.f32.mrb[0].mxu0
    %v2180 = vadd.f32 0.0, %v2179
    %v2181 = vpop.f32.mrb[0].mxu0
    %v2182 = vpop.f32.mrb[0].mxu0
    %2183 = vdwg.mxu0
    %2184 = vmatprep.subr.bf16.mxu0 %v2127
    %2185 = vmatpush1.bf16.msra.mxu0 %v2126
    %2186 = vmatprep.subr.bf16.mxu0 %v2131
    %2187 = vmatpush1.bf16.msra.mxu0 %v2130
    %2188 = vmatprep.subr.bf16.mxu0 0
    %2189 = vmatpush1.bf16.msra.mxu0 0
    %2190 = vmatprep.subr.bf16.mxu0 0
    %2191 = vmatpush1.bf16.msra.mxu0 0
    %2192 = vmatprep.subr.bf16.mxu0 0
    %2193 = vmatpush1.bf16.msra.mxu0 0
    %2194 = vmatprep.subr.bf16.mxu0 0
    %2195 = vmatpush1.bf16.msra.mxu0 0
    %2196 = vmatprep.subr.bf16.mxu0 0
    %2197 = vmatpush1.bf16.msra.mxu0 0
    %2198 = vmatprep.subr.bf16.mxu0 0
    %2199 = vmatpush1.bf16.msra.mxu0 0
    %2200 = vmatprep.subr.bf16.mxu0 0
    %2201 = vmatpush1.bf16.msra.mxu0 0
    %2202 = vmatprep.subr.bf16.mxu0 0
    %2203 = vmatpush1.bf16.msra.mxu0 0
    %2204 = vmatprep.subr.bf16.mxu0 0
    %2205 = vmatpush1.bf16.msra.mxu0 0
    %2206 = vmatprep.subr.bf16.mxu0 0
    %2207 = vmatpush1.bf16.msra.mxu0 0
    %2208 = vmatprep.subr.bf16.mxu0 0
    %2209 = vmatpush1.bf16.msra.mxu0 0
    %2210 = vmatprep.subr.bf16.mxu0 0
    %2211 = vmatpush1.bf16.msra.mxu0 0
    %2212 = vmatprep.subr.bf16.mxu0 0
    %2213 = vmatpush1.bf16.msra.mxu0 0
    %2214 = vmatprep.subr.bf16.mxu0 0
    %2215 = vmatpush1.bf16.msra.mxu0 0
    %2216 = vmatprep.mubr.bf16.mxu0 0
    %2217 = vmatmul.mubr.bf16.gmra.mrb[0].mxu0 %v2141
    %v2218 = vpop.f32.mrb[0].mxu0
    %v2219 = vadd.f32 0.0, %v2218
    %v2220 = vpop.f32.mrb[0].mxu0
    %v2221 = vadd.f32 0.0, %v2220
    %v2222 = vpop.f32.mrb[0].mxu0
    %v2223 = vpop.f32.mrb[0].mxu0
    %2224 = vdwg.mxu0
    %v2225 = vadd.f32 %v2086, %v2178
    %v2226 = vadd.f32 %v2087, %v2180
    %v2227 = vadd.f32 %v2088, %v2219
    %v2228 = vadd.f32 %v2089, %v2221
    %v2229 = vld [vmem:[#allocation15] sm:$0xff]
    %v2230 = vld [vmem:[#allocation15 + $0x8] sm:$0xff]
    %v2231 = vld [vmem:[#allocation15 + $0x10] sm:$0xff]
    %v2232 = vld [vmem:[#allocation15 + $0x18] sm:$0xff]
    %v2233 = vld [vmem:[#allocation15 + $0x20] sm:$0xff]
    %v2234 = vld [vmem:[#allocation15 + $0x28] sm:$0xff]
    %v2235 = vld [vmem:[#allocation15 + $0x30] sm:$0xff]
    %v2236 = vld [vmem:[#allocation15 + $0x38] sm:$0xff]
    %v2245 = vunpack.c.l.b16 %v2229
    %v2246 = vunpack.c.h.b16 %v2229
    %v2247 = vunpack.c.l.b16 %v2230
    %v2248 = vunpack.c.h.b16 %v2230
    %v2249 = vunpack.c.l.b16 %v2231
    %v2250 = vunpack.c.h.b16 %v2231
    %v2251 = vunpack.c.l.b16 %v2232
    %v2252 = vunpack.c.h.b16 %v2232
    %v2253 = vunpack.c.l.b16 %v2233
    %v2254 = vunpack.c.h.b16 %v2233
    %v2255 = vunpack.c.l.b16 %v2234
    %v2256 = vunpack.c.h.b16 %v2234
    %v2257 = vunpack.c.l.b16 %v2235
    %v2258 = vunpack.c.h.b16 %v2235
    %v2259 = vunpack.c.l.b16 %v2236
    %v2260 = vunpack.c.h.b16 %v2236
    %v2261 = vpack.c.b16 %v2249, %v2245
    %v2262 = vpack.c.b16 %v2250, %v2246
    %v2263 = vpack.c.b16 %v2251, %v2247
    %v2264 = vpack.c.b16 %v2252, %v2248
    %v2265 = vpack.c.b16 %v2257, %v2253
    %v2266 = vpack.c.b16 %v2258, %v2254
    %v2267 = vpack.c.b16 %v2259, %v2255
    %v2268 = vpack.c.b16 %v2260, %v2256
    %2277 = vmatprep.subr.bf16.mxu0 %v2262
    %2278 = vmatpush1.bf16.msra.mxu0 %v2261
    %2279 = vmatprep.subr.bf16.mxu0 %v2266
    %2280 = vmatpush1.bf16.msra.mxu0 %v2265
    %2281 = vmatprep.subr.bf16.mxu0 0
    %2282 = vmatpush1.bf16.msra.mxu0 0
    %2283 = vmatprep.subr.bf16.mxu0 0
    %2284 = vmatpush1.bf16.msra.mxu0 0
    %2285 = vmatprep.subr.bf16.mxu0 0
    %2286 = vmatpush1.bf16.msra.mxu0 0
    %2287 = vmatprep.subr.bf16.mxu0 0
    %2288 = vmatpush1.bf16.msra.mxu0 0
    %2289 = vmatprep.subr.bf16.mxu0 0
    %2290 = vmatpush1.bf16.msra.mxu0 0
    %2291 = vmatprep.subr.bf16.mxu0 0
    %2292 = vmatpush1.bf16.msra.mxu0 0
    %2293 = vmatprep.subr.bf16.mxu0 0
    %2294 = vmatpush1.bf16.msra.mxu0 0
    %2295 = vmatprep.subr.bf16.mxu0 0
    %2296 = vmatpush1.bf16.msra.mxu0 0
    %2297 = vmatprep.subr.bf16.mxu0 0
    %2298 = vmatpush1.bf16.msra.mxu0 0
    %2299 = vmatprep.subr.bf16.mxu0 0
    %2300 = vmatpush1.bf16.msra.mxu0 0
    %2301 = vmatprep.subr.bf16.mxu0 0
    %2302 = vmatpush1.bf16.msra.mxu0 0
    %2303 = vmatprep.subr.bf16.mxu0 0
    %2304 = vmatpush1.bf16.msra.mxu0 0
    %2305 = vmatprep.subr.bf16.mxu0 0
    %2306 = vmatpush1.bf16.msra.mxu0 0
    %2307 = vmatprep.subr.bf16.mxu0 0
    %2308 = vmatpush1.bf16.msra.mxu0 0
    %2309 = vmatprep.mubr.bf16.mxu0 0
    %2310 = vmatmul.mubr.bf16.gmra.mrb[0].mxu0 %v966
    %v2311 = vpop.f32.mrb[0].mxu0
    %v2312 = vadd.f32 0.0, %v2311
    %v2313 = vpop.f32.mrb[0].mxu0
    %v2314 = vadd.f32 0.0, %v2313
    %v2315 = vpop.f32.mrb[0].mxu0
    %v2316 = vpop.f32.mrb[0].mxu0
    %2317 = vdwg.mxu0
    %2318 = vmatprep.subr.bf16.mxu0 %v2264
    %2319 = vmatpush1.bf16.msra.mxu0 %v2263
    %2320 = vmatprep.subr.bf16.mxu0 %v2268
    %2321 = vmatpush1.bf16.msra.mxu0 %v2267
    %2322 = vmatprep.subr.bf16.mxu0 0
    %2323 = vmatpush1.bf16.msra.mxu0 0
    %2324 = vmatprep.subr.bf16.mxu0 0
    %2325 = vmatpush1.bf16.msra.mxu0 0
    %2326 = vmatprep.subr.bf16.mxu0 0
    %2327 = vmatpush1.bf16.msra.mxu0 0
    %2328 = vmatprep.subr.bf16.mxu0 0
    %2329 = vmatpush1.bf16.msra.mxu0 0
    %2330 = vmatprep.subr.bf16.mxu0 0
    %2331 = vmatpush1.bf16.msra.mxu0 0
    %2332 = vmatprep.subr.bf16.mxu0 0
    %2333 = vmatpush1.bf16.msra.mxu0 0
    %2334 = vmatprep.subr.bf16.mxu0 0
    %2335 = vmatpush1.bf16.msra.mxu0 0
    %2336 = vmatprep.subr.bf16.mxu0 0
    %2337 = vmatpush1.bf16.msra.mxu0 0
    %2338 = vmatprep.subr.bf16.mxu0 0
    %2339 = vmatpush1.bf16.msra.mxu0 0
    %2340 = vmatprep.subr.bf16.mxu0 0
    %2341 = vmatpush1.bf16.msra.mxu0 0
    %2342 = vmatprep.subr.bf16.mxu0 0
    %2343 = vmatpush1.bf16.msra.mxu0 0
    %2344 = vmatprep.subr.bf16.mxu0 0
    %2345 = vmatpush1.bf16.msra.mxu0 0
    %2346 = vmatprep.subr.bf16.mxu0 0
    %2347 = vmatpush1.bf16.msra.mxu0 0
    %2348 = vmatprep.subr.bf16.mxu0 0
    %2349 = vmatpush1.bf16.msra.mxu0 0
    %2350 = vmatprep.mubr.bf16.mxu0 0
    %2351 = vmatmul.mubr.bf16.gmra.mrb[0].mxu0 %v966
    %v2352 = vpop.f32.mrb[0].mxu0
    %v2353 = vadd.f32 0.0, %v2352
    %v2354 = vpop.f32.mrb[0].mxu0
    %v2355 = vadd.f32 0.0, %v2354
    %v2356 = vpop.f32.mrb[0].mxu0
    %v2357 = vpop.f32.mrb[0].mxu0
    %2358 = vdwg.mxu0
    %v2359 = vadd.f32 %v2225, %v2312
    %v2360 = vadd.f32 %v2226, %v2314
    %v2361 = vadd.f32 %v2227, %v2353
    %v2362 = vadd.f32 %v2228, %v2355
    %v2363 = vxor.u32 %v2359, 2147483648
    %v2364 = vmul.f32 %v2363, 1.442695
    %v2365 = vpow.pop %v2364
    %v2366 = vadd.f32 %v2365, 1.0
    %v2367 = vrcp.pop %v2366
    %v2368 = vmul.f32 1.0, %v2367
    %v2369 = vxor.u32 %v2360, 2147483648
    %v2370 = vmul.f32 %v2369, 1.442695
    %v2371 = vpow.pop %v2370
    %v2372 = vadd.f32 %v2371, 1.0
    %v2373 = vrcp.pop %v2372
    %v2374 = vmul.f32 1.0, %v2373
    %v2375 = vxor.u32 %v2361, 2147483648
    %v2376 = vmul.f32 %v2375, 1.442695
    %v2377 = vpow.pop %v2376
    %v2378 = vadd.f32 %v2377, 1.0
    %v2379 = vrcp.pop %v2378
    %v2380 = vmul.f32 1.0, %v2379
    %v2381 = vtanh.pop %v2362
    %v2382 = vmul.f32 %v2374, 0.0
    %v2383 = vmul.f32 %v2368, %v2381
    %v2384 = vadd.f32 %v2382, %v2383
    %v2385 = vtanh.pop %v2384
    %v2386 = vmul.f32 %v2380, %v2385
    %v2387 = vld [vmem:[#allocation20] sm:$0xff]
    %v2388 = vld [vmem:[#allocation20 + $0x8] sm:$0xff]
    %v2389 = vld [vmem:[#allocation20 + $0x10] sm:$0xff]
    %v2390 = vld [vmem:[#allocation20 + $0x18] sm:$0xff]
    %v2391 = vld [vmem:[#allocation21] sm:$0xff]
    %v2392 = vld [vmem:[#allocation21 + $0x8] sm:$0xff]
    %v2393 = vld [vmem:[#allocation21 + $0x10] sm:$0xff]
    %v2394 = vld [vmem:[#allocation21 + $0x18] sm:$0xff]
    %v2396 = vsel %vm293, %v2386, 0
    %2398 = vmatprep.subr.mxu0 0.0
    %2399 = vmatpush1.msra.mxu0 %v2391
    %2400 = vmatprep.subr.mxu0 0.0
    %2401 = vmatpush1.msra.mxu0 %v2392
    %2402 = vmatprep.subr.mxu0 0.0
    %2403 = vmatpush1.msra.mxu0 %v2393
    %2404 = vmatprep.subr.mxu0 0.0
    %2405 = vmatpush1.msra.mxu0 %v2394
    %2406 = vmatprep.subr.mxu0 0.0
    %2407 = vmatpush1.msra.mxu0 0.0
    %2408 = vmatprep.subr.mxu0 0.0
    %2409 = vmatpush1.msra.mxu0 0.0
    %2410 = vmatprep.subr.mxu0 0.0
    %2411 = vmatpush1.msra.mxu0 0.0
    %2412 = vmatprep.subr.mxu0 0.0
    %2413 = vmatpush1.msra.mxu0 0.0
    %2414 = vmatprep.subr.mxu0 0.0
    %2415 = vmatpush1.msra.mxu0 0.0
    %2416 = vmatprep.subr.mxu0 0.0
    %2417 = vmatpush1.msra.mxu0 0.0
    %2418 = vmatprep.subr.mxu0 0.0
    %2419 = vmatpush1.msra.mxu0 0.0
    %2420 = vmatprep.subr.mxu0 0.0
    %2421 = vmatpush1.msra.mxu0 0.0
    %2422 = vmatprep.subr.mxu0 0.0
    %2423 = vmatpush1.msra.mxu0 0.0
    %2424 = vmatprep.subr.mxu0 0.0
    %2425 = vmatpush1.msra.mxu0 0.0
    %2426 = vmatprep.subr.mxu0 0.0
    %2427 = vmatpush1.msra.mxu0 0.0
    %2428 = vmatprep.subr.mxu0 0.0
    %2429 = vmatpush1.msra.mxu0 0.0
    %2430 = vmatprep.subr.mxu0 0.0
    %2431 = vmatpush1.msra.mxu0 0.0
    %2432 = vmatprep.subr.mxu0 0.0
    %2433 = vmatpush1.msra.mxu0 0.0
    %2434 = vmatprep.subr.mxu0 0.0
    %2435 = vmatpush1.msra.mxu0 0.0
    %2436 = vmatprep.subr.mxu0 0.0
    %2437 = vmatpush1.msra.mxu0 0.0
    %2438 = vmatprep.subr.mxu0 0.0
    %2439 = vmatpush1.msra.mxu0 0.0
    %2440 = vmatprep.subr.mxu0 0.0
    %2441 = vmatpush1.msra.mxu0 0.0
    %2442 = vmatprep.subr.mxu0 0.0
    %2443 = vmatpush1.msra.mxu0 0.0
    %2444 = vmatprep.subr.mxu0 0.0
    %2445 = vmatpush1.msra.mxu0 0.0
    %2446 = vmatprep.subr.mxu0 0.0
    %2447 = vmatpush1.msra.mxu0 0.0
    %2448 = vmatprep.subr.mxu0 0.0
    %2449 = vmatpush1.msra.mxu0 0.0
    %2450 = vmatprep.subr.mxu0 0.0
    %2451 = vmatpush1.msra.mxu0 0.0
    %2452 = vmatprep.subr.mxu0 0.0
    %2453 = vmatpush1.msra.mxu0 0.0
    %2454 = vmatprep.subr.mxu0 0.0
    %2455 = vmatpush1.msra.mxu0 0.0
    %2456 = vmatprep.subr.mxu0 0.0
    %2457 = vmatpush1.msra.mxu0 0.0
    %2458 = vmatprep.subr.mxu0 0.0
    %2459 = vmatpush1.msra.mxu0 0.0
    %2460 = vmatprep.subr.mxu0 0.0
    %2461 = vmatpush1.msra.mxu0 0.0
    %2462 = vmatprep.mubr.f32.mxu0 0.0
    %2463 = vmatmul.mubr.f32.gmra.mrb[0].mxu0 %v2396
    %v2464 = vpop.f32.mrb[0].mxu0
    %v2465 = vadd.f32 0.0, %v2464
    %v2466 = vpop.f32.mrb[0].mxu0
    %2467 = vdwg.mxu0
    %v2469 = vsel %vm293, %v1928, 0
    %2471 = vmatprep.subr.mxu0 0.0
    %2472 = vmatpush1.msra.mxu0 %v2387
    %2473 = vmatprep.subr.mxu0 0.0
    %2474 = vmatpush1.msra.mxu0 %v2388
    %2475 = vmatprep.subr.mxu0 0.0
    %2476 = vmatpush1.msra.mxu0 %v2389
    %2477 = vmatprep.subr.mxu0 0.0
    %2478 = vmatpush1.msra.mxu0 %v2390
    %2479 = vmatprep.subr.mxu0 0.0
    %2480 = vmatpush1.msra.mxu0 0.0
    %2481 = vmatprep.subr.mxu0 0.0
    %2482 = vmatpush1.msra.mxu0 0.0
    %2483 = vmatprep.subr.mxu0 0.0
    %2484 = vmatpush1.msra.mxu0 0.0
    %2485 = vmatprep.subr.mxu0 0.0
    %2486 = vmatpush1.msra.mxu0 0.0
    %2487 = vmatprep.subr.mxu0 0.0
    %2488 = vmatpush1.msra.mxu0 0.0
    %2489 = vmatprep.subr.mxu0 0.0
    %2490 = vmatpush1.msra.mxu0 0.0
    %2491 = vmatprep.subr.mxu0 0.0
    %2492 = vmatpush1.msra.mxu0 0.0
    %2493 = vmatprep.subr.mxu0 0.0
    %2494 = vmatpush1.msra.mxu0 0.0
    %2495 = vmatprep.subr.mxu0 0.0
    %2496 = vmatpush1.msra.mxu0 0.0
    %2497 = vmatprep.subr.mxu0 0.0
    %2498 = vmatpush1.msra.mxu0 0.0
    %2499 = vmatprep.subr.mxu0 0.0
    %2500 = vmatpush1.msra.mxu0 0.0
    %2501 = vmatprep.subr.mxu0 0.0
    %2502 = vmatpush1.msra.mxu0 0.0
    %2503 = vmatprep.subr.mxu0 0.0
    %2504 = vmatpush1.msra.mxu0 0.0
    %2505 = vmatprep.subr.mxu0 0.0
    %2506 = vmatpush1.msra.mxu0 0.0
    %2507 = vmatprep.subr.mxu0 0.0
    %2508 = vmatpush1.msra.mxu0 0.0
    %2509 = vmatprep.subr.mxu0 0.0
    %2510 = vmatpush1.msra.mxu0 0.0
    %2511 = vmatprep.subr.mxu0 0.0
    %2512 = vmatpush1.msra.mxu0 0.0
    %2513 = vmatprep.subr.mxu0 0.0
    %2514 = vmatpush1.msra.mxu0 0.0
    %2515 = vmatprep.subr.mxu0 0.0
    %2516 = vmatpush1.msra.mxu0 0.0
    %2517 = vmatprep.subr.mxu0 0.0
    %2518 = vmatpush1.msra.mxu0 0.0
    %2519 = vmatprep.subr.mxu0 0.0
    %2520 = vmatpush1.msra.mxu0 0.0
    %2521 = vmatprep.subr.mxu0 0.0
    %2522 = vmatpush1.msra.mxu0 0.0
    %2523 = vmatprep.subr.mxu0 0.0
    %2524 = vmatpush1.msra.mxu0 0.0
    %2525 = vmatprep.subr.mxu0 0.0
    %2526 = vmatpush1.msra.mxu0 0.0
    %2527 = vmatprep.subr.mxu0 0.0
    %2528 = vmatpush1.msra.mxu0 0.0
    %2529 = vmatprep.subr.mxu0 0.0
    %2530 = vmatpush1.msra.mxu0 0.0
    %2531 = vmatprep.subr.mxu0 0.0
    %2532 = vmatpush1.msra.mxu0 0.0
    %2533 = vmatprep.subr.mxu0 0.0
    %2534 = vmatpush1.msra.mxu0 0.0
    %2535 = vmatprep.mubr.f32.mxu0 0.0
    %2536 = vmatmul.mubr.f32.gmra.mrb[0].mxu0 %v2469
    %v2537 = vpop.f32.mrb[0].mxu0
    %v2538 = vadd.f32 %v2465, %v2537
    %v2539 = vpop.f32.mrb[0].mxu0
    %2540 = vdwg.mxu0
    %v2541 = vld [vmem:[#allocation23] sm:$0x1]
    %v2543 = vlaneseq
    %v2544 = vshrl.u32 %v2543, 7
    %v2545 = vsub.s32 0, %v2544
    %v2546 = vrot.slane %v2541, %v2545
    %v2548 = vadd.f32 %v2538, %v2546
    %2549 = vst [vmem:[#allocation24] sm:$0xff] %v2548
    // Predicated region
    $region106: #{bilstm_forward.3} parent=1 // pred_check
      _
    $region107: #{bilstm_forward.3} parent=1 // pred_check_branch
      %2551 = sbr.rel (0) target = $region109
    $region108: #{bilstm_forward.3} parent=1 // pred_region
      %s2553 = ssub.s32 128, 128
      %2554 = vsyncadd [#allocation5], %s2553
      %s2556 = sshll.u32 [#allocation24], 4
      %s2557 = int_to_ptr.vmem [resolvable:$true] %s2556
      %2559 = dma.vmem_to_hbm [thread:$0]  %s2557, 128, %s13, [#allocation5]
    $region109: #{bilstm_forward.3} parent=1 // pred_fallthru
      _
    // Predicated region
    $region110: #{bilstm_forward.3} parent=1 // pred_check
      _
    $region111: #{bilstm_forward.3} parent=1 // pred_check_branch
      %2561 = sbr.rel (0) target = $region113
    $region112: #{bilstm_forward.3} parent=1 // pred_region
      %2562 = dma.done [#allocation5], 128
    $region113: #{bilstm_forward.3} parent=1 // pred_fallthru
      _
    %2563 = vsyncpa [#allocation4], 1
    %2564 = vsyncpa [#allocation7], 1
    %2565 = vsyncpa [#allocation10], 1
    %2566 = vsyncpa [#allocation13], 1
    %2567 = vsyncpa [#allocation16], 1
    %2568 = vsyncpa [#allocation19], 1
    %2569 = vsyncpa [#allocation22], 1
    %2570 = vsyncpa [#allocation5], 1

</llo_original>
